<compile_context>
chip_gen: v5e
topology: v5e:2x2
jax: 0.10.0
libtpu: 0.0.40
codegen_flags: <defaults>
</compile_context>

<pallas_src>
import functools

import jax
import jax.numpy as jnp
from jax.experimental import pallas as pl
from jax.experimental.pallas import tpu as pltpu


# ----------------------------------------------------------------------------
# Fused kernel: conv stack (step 0) + streamed fc1 + fc2 epilogue (last step).
# ----------------------------------------------------------------------------
def fused_cnn_kernel(x_ref, w1_ref, s1_ref, w2_ref, s2_ref, w3_ref, s3_ref,
                     fw1_ref, fb1_ref, fw2_ref, fb2_ref, o_ref,
                     pad1, pad2, pad3, feat_ref, acc_ref, *, batch):
    B = batch
    HB = 10 * B          # rows of one activation slab: (y, b)
    k = pl.program_id(0)

    def conv_layer(pad_ref, x_val, w_ref, s_ref, cout):
        # pad_ref: (12*B, 10*Cin) f32; rows = (y_pad, b), lanes = (x, cin).
        width = pad_ref.shape[1]
        zeros = jnp.zeros((B, width), jnp.float32)
        pad_ref[pl.ds(0, B), :] = zeros           # top y-padding rows
        pad_ref[pl.ds(11 * B, B), :] = zeros      # bottom y-padding rows
        pad_ref[pl.ds(B, HB), :] = x_val          # interior rows (fully overwritten)
        acc = jnp.zeros((HB, 10 * cout), jnp.float32)
        for ky in range(3):
            # Banded weight w_ref[ky]: (10*Cin, 10*Cout) bf16; x-padding handled
            # by dropping out-of-range bands at weight-construction time.
            lhs = pad_ref[pl.ds(ky * B, HB), :].astype(jnp.bfloat16)
            acc = acc + jnp.dot(lhs, w_ref[ky],
                                preferred_element_type=jnp.float32)
        # Folded-BN shift (scale already folded into the weights) + ReLU.
        return jnp.maximum(acc + s_ref[...], 0.0)

    @pl.when(k == 0)
    def _():
        y = conv_layer(pad1, x_ref[...], w1_ref, s1_ref, 16)
        y = conv_layer(pad2, y, w2_ref, s2_ref, 32)
        y = conv_layer(pad3, y, w3_ref, s3_ref, 64)
        # Persist the conv output per y-row: feat_ref[y] = (B, 640) slab of
        # lanes (x, c); fc1's weight is pre-permuted to consume this layout.
        for row in range(10):
            feat_ref[row] = y[row * B:(row + 1) * B, :]
        acc_ref[...] = jnp.zeros_like(acc_ref)

    # fc1 partial sum for this y-step: (B, 640) @ (640, 512) -> (B, 512).
    lhs = feat_ref[k].astype(jnp.bfloat16)
    acc_ref[...] += jnp.dot(lhs, fw1_ref[...],
                            preferred_element_type=jnp.float32)

    @pl.when(k == pl.num_programs(0) - 1)
    def _():
        h = jnp.maximum(acc_ref[...] + fb1_ref[...], 0.0)
        # TODO(synk): Dropout(0.5) is identity here (eval-mode semantics); training-mode RNG not reproduced.
        out = jnp.dot(h.astype(jnp.bfloat16), fw2_ref[...],
                      preferred_element_type=jnp.float32) + fb2_ref[...]
        o_ref[...] = out.astype(o_ref.dtype)


def fused_cnn(x2d, kp, *, batch):
    kernel = functools.partial(fused_cnn_kernel, batch=batch)

    def full(shape):
        nd = len(shape)
        return pl.BlockSpec(shape, lambda k, _nd=nd: (0,) * _nd)

    return pl.pallas_call(
        kernel,
        out_shape=jax.ShapeDtypeStruct((batch, 128), jnp.float32),
        grid_spec=pltpu.PrefetchScalarGridSpec(
            num_scalar_prefetch=0,
            grid=(10,),  # one step per y-row of the fc1 contraction (streams FW1)
            in_specs=[
                full(x2d.shape),
                full(kp["W1"].shape), full(kp["S1"].shape),
                full(kp["W2"].shape), full(kp["S2"].shape),
                full(kp["W3"].shape), full(kp["S3"].shape),
                pl.BlockSpec((None, 640, 512), lambda k: (k, 0, 0)),  # FW1 stream
                full(kp["FB1"].shape),
                full(kp["FW2"].shape),
                full(kp["FB2"].shape),
            ],
            out_specs=pl.BlockSpec((batch, 128), lambda k: (0, 0)),
            scratch_shapes=[
                pltpu.VMEM((12 * batch, 10 * 3), jnp.float32),   # pad1
                pltpu.VMEM((12 * batch, 10 * 16), jnp.float32),  # pad2
                pltpu.VMEM((12 * batch, 10 * 32), jnp.float32),  # pad3
                pltpu.VMEM((10, batch, 640), jnp.float32),       # conv output (per y)
                pltpu.VMEM((batch, 512), jnp.float32),           # fc1 accumulator
            ]),
        compiler_params=pltpu.CompilerParams(
            dimension_semantics=("arbitrary",)),
    )(x2d, kp["W1"], kp["S1"], kp["W2"], kp["S2"], kp["W3"], kp["S3"],
      kp["FW1"], kp["FB1"], kp["FW2"], kp["FB2"])


# ----------------------------------------------------------------------------
# One-time parameter preparation (constant transforms, done outside the kernel)
# ----------------------------------------------------------------------------
def _fold_conv_layer(w_oihw, bias, gamma, beta, mean, var, eps=1e-5):
    """Fold BN(eval) scale into the conv weights and build banded matmul weights.

    Returns:
      w_banded: (3, 10*Cin, 10*Cout) with
        w_banded[ky, xin*Cin + ci, x*Cout + co] = scale[co] * w[co, ci, ky, xin - x + 1]
        (zero outside the 3-wide band -> "same" padding along x is implicit).
      shift:    (1, 10*Cout) per-lane shift = beta + scale*(bias - mean), tiled over x.
    """
    cout, cin = w_oihw.shape[0], w_oihw.shape[1]
    s = gamma / jnp.sqrt(var + eps)
    w_s = w_oihw * s[:, None, None, None]
    shift = beta + s * (bias - mean)
    mats = []
    for ky in range(3):
        m = jnp.zeros((10 * cin, 10 * cout), jnp.float32)
        for x in range(10):
            for kx in range(3):
                xin = x + kx - 1
                if 0 <= xin < 10:
                    m = m.at[xin * cin:(xin + 1) * cin,
                             x * cout:(x + 1) * cout].set(w_s[:, :, ky, kx].T)
        mats.append(m)
    w_banded = jnp.stack(mats, axis=0)
    shift_lanes = jnp.tile(shift, 10).reshape(1, 10 * cout)
    return w_banded, shift_lanes


def prepare_params(p):
    kp = {}
    w1, s1 = _fold_conv_layer(p["w1"], p["b1"], p["g1"], p["be1"], p["m1"], p["v1"])
    w2, s2 = _fold_conv_layer(p["w2"], p["b2"], p["g2"], p["be2"], p["m2"], p["v2"])
    w3, s3 = _fold_conv_layer(p["w3"], p["b3"], p["g3"], p["be3"], p["m3"], p["v3"])
    # bf16 weights (f32 accumulation in-kernel); halves the HBM weight streams.
    kp["W1"], kp["W2"], kp["W3"] = (w.astype(jnp.bfloat16) for w in (w1, w2, w3))
    kp["S1"], kp["S2"], kp["S3"] = s1, s2, s3
    # fc1: PyTorch's x.view(B, -1) flattens (c, y, x); the conv kernel emits
    # per-y slabs with lanes (x, c).  Permute fc1 rows once to (y, x, c) order
    # and reshape to (10, 640, 512) so each grid step streams one contiguous slab.
    j = jnp.arange(64 * 10 * 10)
    y, x, c = j // 640, (j % 640) // 64, j % 64
    perm = c * 100 + y * 10 + x
    kp["FW1"] = p["fw1"][perm, :].reshape(10, 640, 512).astype(jnp.bfloat16)
    kp["FB1"] = p["fb1"].reshape(1, 512)
    # fc2: pad output dim 100 -> 128 for a lane-dense store; wrapper slices back.
    fw2 = jnp.zeros((512, 128), jnp.float32).at[:, :100].set(p["fw2"])
    kp["FW2"] = fw2.astype(jnp.bfloat16)
    kp["FB2"] = jnp.zeros((1, 128), jnp.float32).at[:, :100].set(p["fb2"].reshape(1, 100))
    return kp


def init_params(key):
    def nrm(k, shape, scale=0.1):
        return scale * jax.random.normal(k, shape, dtype=jnp.float32)

    keys = jax.random.split(key, 22)
    p = {}
    p["w1"], p["b1"] = nrm(keys[0], (16, 3, 3, 3)), nrm(keys[1], (16,))
    p["g1"], p["be1"] = 1.0 + nrm(keys[2], (16,)), nrm(keys[3], (16,))
    p["m1"], p["v1"] = nrm(keys[4], (16,)), 1.0 + jnp.abs(nrm(keys[5], (16,)))
    p["w2"], p["b2"] = nrm(keys[6], (32, 16, 3, 3)), nrm(keys[7], (32,))
    p["g2"], p["be2"] = 1.0 + nrm(keys[8], (32,)), nrm(keys[9], (32,))
    p["m2"], p["v2"] = nrm(keys[10], (32,)), 1.0 + jnp.abs(nrm(keys[11], (32,)))
    p["w3"], p["b3"] = nrm(keys[12], (64, 32, 3, 3)), nrm(keys[13], (64,))
    p["g3"], p["be3"] = 1.0 + nrm(keys[14], (64,)), nrm(keys[15], (64,))
    p["m3"], p["v3"] = nrm(keys[16], (64,)), 1.0 + jnp.abs(nrm(keys[17], (64,)))
    # fc1: 6400 -> 512 ; fc2: 512 -> 100  (stored as (in, out))
    p["fw1"], p["fb1"] = nrm(keys[18], (64 * 10 * 10, 512), scale=0.02), nrm(keys[19], (512,))
    p["fw2"], p["fb2"] = nrm(keys[20], (512, 10 * 10), scale=0.05), nrm(keys[21], (10 * 10,))
    return p


def cnn_forward(x_nchw, kp):
    B, C, H, W = x_nchw.shape  # (B, 3, 10, 10)
    # NCHW -> lane-dense slab (10*B, 10*3): rows = (y, b), lanes = (x, c).
    x2d = jnp.transpose(x_nchw, (2, 0, 3, 1)).reshape(H * B, W * C)
    out = fused_cnn(x2d, kp, batch=B)          # (B, 128), lanes padded
    return out[:, :100].reshape(B, 10, 10)


if __name__ == "__main__":
    key = jax.random.PRNGKey(0)
    k_param, k_x = jax.random.split(key)
    params = init_params(k_param)
    kparams = prepare_params(params)
    # Spatial size must be 10x10 so the flatten matches Linear(64*10*10, 512).
    x = jax.random.normal(k_x, (2, 3, 10, 10), dtype=jnp.float32)  # NCHW, like PyTorch
    fwd = jax.jit(cnn_forward)
    out = jax.block_until_ready(fwd(x, kparams))
    assert out.shape == (2, 10, 10) and out.dtype == jnp.float32
    assert bool(jnp.all(jnp.isfinite(out)))
    print("KERNEL_OK")
</pallas_src>

<mosaic_0001>
module attributes {stable_mosaic.version = 11 : i64} {
  func.func @fused_cnn_kernel(%arg0: i32, %arg1: memref<20x30xf32, #tpu.memory_space<vmem>>, %arg2: memref<3x30x160xbf16, #tpu.memory_space<vmem>>, %arg3: memref<1x160xf32, #tpu.memory_space<vmem>>, %arg4: memref<3x160x320xbf16, #tpu.memory_space<vmem>>, %arg5: memref<1x320xf32, #tpu.memory_space<vmem>>, %arg6: memref<3x320x640xbf16, #tpu.memory_space<vmem>>, %arg7: memref<1x640xf32, #tpu.memory_space<vmem>>, %arg8: memref<1x640x512xbf16, #tpu.memory_space<vmem>>, %arg9: memref<1x512xf32, #tpu.memory_space<vmem>>, %arg10: memref<512x128xbf16, #tpu.memory_space<vmem>>, %arg11: memref<1x128xf32, #tpu.memory_space<vmem>>, %arg12: memref<2x128xf32, #tpu.memory_space<vmem>>, %arg13: memref<24x30xf32, #tpu.memory_space<vmem>>, %arg14: memref<24x160xf32, #tpu.memory_space<vmem>>, %arg15: memref<24x320xf32, #tpu.memory_space<vmem>>, %arg16: memref<10x2x640xf32, #tpu.memory_space<vmem>>, %arg17: memref<2x512xf32, #tpu.memory_space<vmem>>) attributes {dimension_semantics = [#tpu.dimension_semantics<arbitrary>], iteration_bounds = array<i64: 10>, scalar_prefetch = 0 : i64, scratch_operands = 5 : i64, tpu.core_type = #tpu.core_type<tc>, window_params = [{pipeline_mode = #tpu.pipeline_mode<synchronous>, transform_indices = @transform_0, window_bounds = array<i64: 20, 30>}, {pipeline_mode = #tpu.pipeline_mode<synchronous>, transform_indices = @transform_1, window_bounds = array<i64: 3, 30, 160>}, {pipeline_mode = #tpu.pipeline_mode<synchronous>, transform_indices = @transform_2, window_bounds = array<i64: 1, 160>}, {pipeline_mode = #tpu.pipeline_mode<synchronous>, transform_indices = @transform_3, window_bounds = array<i64: 3, 160, 320>}, {pipeline_mode = #tpu.pipeline_mode<synchronous>, transform_indices = @transform_4, window_bounds = array<i64: 1, 320>}, {pipeline_mode = #tpu.pipeline_mode<synchronous>, transform_indices = @transform_5, window_bounds = array<i64: 3, 320, 640>}, {pipeline_mode = #tpu.pipeline_mode<synchronous>, transform_indices = @transform_6, window_bounds = array<i64: 1, 640>}, {transform_indices = @transform_7, window_bounds = array<i64: 1, 640, 512>}, {pipeline_mode = #tpu.pipeline_mode<synchronous>, transform_indices = @transform_8, window_bounds = array<i64: 1, 512>}, {pipeline_mode = #tpu.pipeline_mode<synchronous>, transform_indices = @transform_9, window_bounds = array<i64: 512, 128>}, {pipeline_mode = #tpu.pipeline_mode<synchronous>, transform_indices = @transform_10, window_bounds = array<i64: 1, 128>}, {pipeline_mode = #tpu.pipeline_mode<synchronous>, transform_indices = @transform_11, window_bounds = array<i64: 2, 128>}]} {
    %c0_i32 = arith.constant 0 : i32
    %0 = arith.cmpi eq, %arg0, %c0_i32 : i32
    %1 = arith.extui %0 : i1 to i32
    %c0_i32_0 = arith.constant 0 : i32
    %2 = arith.cmpi ne, %1, %c0_i32_0 : i32
    scf.if %2 {
      %c0_10 = arith.constant 0 : index
      %c0_11 = arith.constant 0 : index
      %16 = vector.load %arg1[%c0_10, %c0_11] : memref<20x30xf32, #tpu.memory_space<vmem>>, vector<20x30xf32>
      %cst_12 = arith.constant 0.000000e+00 : f32
      %17 = vector.broadcast %cst_12 : f32 to vector<2x30xf32>
      %c0_13 = arith.constant 0 : index
      %c0_14 = arith.constant 0 : index
      %18 = vector.load %arg13[%c0_13, %c0_14] : memref<24x30xf32, #tpu.memory_space<vmem>>, vector<2x30xf32>
      tpu.vector_store %arg13[%c0_13, %c0_14], %17 {strides = array<i32>} : memref<24x30xf32, #tpu.memory_space<vmem>>, vector<2x30xf32>,
      %c22 = arith.constant 22 : index
      %c0_15 = arith.constant 0 : index
      %19 = vector.load %arg13[%c22, %c0_15] : memref<24x30xf32, #tpu.memory_space<vmem>>, vector<2x30xf32>
      tpu.vector_store %arg13[%c22, %c0_15], %17 {strides = array<i32>} : memref<24x30xf32, #tpu.memory_space<vmem>>, vector<2x30xf32>,
      %c2 = arith.constant 2 : index
      %c0_16 = arith.constant 0 : index
      %20 = vector.load %arg13[%c2, %c0_16] : memref<24x30xf32, #tpu.memory_space<vmem>>, vector<20x30xf32>
      tpu.vector_store %arg13[%c2, %c0_16], %16 {strides = array<i32>} : memref<24x30xf32, #tpu.memory_space<vmem>>, vector<20x30xf32>,
      %cst_17 = arith.constant 0.000000e+00 : f32
      %21 = vector.broadcast %cst_17 : f32 to vector<20x160xf32>
      %c0_18 = arith.constant 0 : index
      %c0_19 = arith.constant 0 : index
      %22 = vector.load %arg13[%c0_18, %c0_19] : memref<24x30xf32, #tpu.memory_space<vmem>>, vector<20x30xf32>
      %23 = arith.truncf %22 : vector<20x30xf32> to vector<20x30xbf16>
      %c0_20 = arith.constant 0 : index
      %c0_21 = arith.constant 0 : index
      %c0_22 = arith.constant 0 : index
      %24 = vector.load %arg2[%c0_20, %c0_21, %c0_22] : memref<3x30x160xbf16, #tpu.memory_space<vmem>>, vector<1x30x160xbf16>
      %25 = vector.shape_cast %24 : vector<1x30x160xbf16> to vector<30x160xbf16>
      %cst_23 = arith.constant dense<0.000000e+00> : vector<20x160xf32>
      %26 = tpu.matmul %23, %25, %cst_23 {dimension_numbers = #tpu.dot_dimension_numbers<[1], [0], [0], [1], [0, 0, 1, 1], [], []>} : vector<20x30xbf16>, vector<30x160xbf16>, vector<20x160xf32> -> vector<20x160xf32>
      %27 = arith.addf %21, %26 : vector<20x160xf32>
      %c2_24 = arith.constant 2 : index
      %c0_25 = arith.constant 0 : index
      %28 = vector.load %arg13[%c2_24, %c0_25] : memref<24x30xf32, #tpu.memory_space<vmem>>, vector<20x30xf32>
      %29 = arith.truncf %28 : vector<20x30xf32> to vector<20x30xbf16>
      %c1 = arith.constant 1 : index
      %c0_26 = arith.constant 0 : index
      %c0_27 = arith.constant 0 : index
      %30 = vector.load %arg2[%c1, %c0_26, %c0_27] : memref<3x30x160xbf16, #tpu.memory_space<vmem>>, vector<1x30x160xbf16>
      %31 = vector.shape_cast %30 : vector<1x30x160xbf16> to vector<30x160xbf16>
      %cst_28 = arith.constant dense<0.000000e+00> : vector<20x160xf32>
      %32 = tpu.matmul %29, %31, %cst_28 {dimension_numbers = #tpu.dot_dimension_numbers<[1], [0], [0], [1], [0, 0, 1, 1], [], []>} : vector<20x30xbf16>, vector<30x160xbf16>, vector<20x160xf32> -> vector<20x160xf32>
      %33 = arith.addf %27, %32 : vector<20x160xf32>
      %c4 = arith.constant 4 : index
      %c0_29 = arith.constant 0 : index
      %34 = vector.load %arg13[%c4, %c0_29] : memref<24x30xf32, #tpu.memory_space<vmem>>, vector<20x30xf32>
      %35 = arith.truncf %34 : vector<20x30xf32> to vector<20x30xbf16>
      %c2_30 = arith.constant 2 : index
      %c0_31 = arith.constant 0 : index
      %c0_32 = arith.constant 0 : index
      %36 = vector.load %arg2[%c2_30, %c0_31, %c0_32] : memref<3x30x160xbf16, #tpu.memory_space<vmem>>, vector<1x30x160xbf16>
      %37 = vector.shape_cast %36 : vector<1x30x160xbf16> to vector<30x160xbf16>
      %cst_33 = arith.constant dense<0.000000e+00> : vector<20x160xf32>
      %38 = tpu.matmul %35, %37, %cst_33 {dimension_numbers = #tpu.dot_dimension_numbers<[1], [0], [0], [1], [0, 0, 1, 1], [], []>} : vector<20x30xbf16>, vector<30x160xbf16>, vector<20x160xf32> -> vector<20x160xf32>
      %39 = arith.addf %33, %38 : vector<20x160xf32>
      %c0_34 = arith.constant 0 : index
      %c0_35 = arith.constant 0 : index
      %40 = vector.load %arg3[%c0_34, %c0_35] : memref<1x160xf32, #tpu.memory_space<vmem>>, vector<1x160xf32>
      %41 = vector.broadcast %40 : vector<1x160xf32> to vector<20x160xf32>
      %42 = arith.addf %39, %41 : vector<20x160xf32>
      %cst_36 = arith.constant 0.000000e+00 : f32
      %43 = vector.broadcast %cst_36 : f32 to vector<20x160xf32>
      %44 = arith.maximumf %42, %43 : vector<20x160xf32>
      %cst_37 = arith.constant 0.000000e+00 : f32
      %45 = vector.broadcast %cst_37 : f32 to vector<2x160xf32>
      %c0_38 = arith.constant 0 : index
      %c0_39 = arith.constant 0 : index
      %46 = vector.load %arg14[%c0_38, %c0_39] : memref<24x160xf32, #tpu.memory_space<vmem>>, vector<2x160xf32>
      tpu.vector_store %arg14[%c0_38, %c0_39], %45 {strides = array<i32>} : memref<24x160xf32, #tpu.memory_space<vmem>>, vector<2x160xf32>,
      %c22_40 = arith.constant 22 : index
      %c0_41 = arith.constant 0 : index
      %47 = vector.load %arg14[%c22_40, %c0_41] : memref<24x160xf32, #tpu.memory_space<vmem>>, vector<2x160xf32>
      tpu.vector_store %arg14[%c22_40, %c0_41], %45 {strides = array<i32>} : memref<24x160xf32, #tpu.memory_space<vmem>>, vector<2x160xf32>,
      %c2_42 = arith.constant 2 : index
      %c0_43 = arith.constant 0 : index
      %48 = vector.load %arg14[%c2_42, %c0_43] : memref<24x160xf32, #tpu.memory_space<vmem>>, vector<20x160xf32>
      tpu.vector_store %arg14[%c2_42, %c0_43], %44 {strides = array<i32>} : memref<24x160xf32, #tpu.memory_space<vmem>>, vector<20x160xf32>,
      %cst_44 = arith.constant 0.000000e+00 : f32
      %49 = vector.broadcast %cst_44 : f32 to vector<20x320xf32>
      %c0_45 = arith.constant 0 : index
      %c0_46 = arith.constant 0 : index
      %50 = vector.load %arg14[%c0_45, %c0_46] : memref<24x160xf32, #tpu.memory_space<vmem>>, vector<20x160xf32>
      %51 = arith.truncf %50 : vector<20x160xf32> to vector<20x160xbf16>
      %c0_47 = arith.constant 0 : index
      %c0_48 = arith.constant 0 : index
      %c0_49 = arith.constant 0 : index
      %52 = vector.load %arg4[%c0_47, %c0_48, %c0_49] : memref<3x160x320xbf16, #tpu.memory_space<vmem>>, vector<1x160x320xbf16>
      %53 = vector.shape_cast %52 : vector<1x160x320xbf16> to vector<160x320xbf16>
      %cst_50 = arith.constant dense<0.000000e+00> : vector<20x320xf32>
      %54 = tpu.matmul %51, %53, %cst_50 {dimension_numbers = #tpu.dot_dimension_numbers<[1], [0], [0], [1], [0, 0, 1, 1], [], []>} : vector<20x160xbf16>, vector<160x320xbf16>, vector<20x320xf32> -> vector<20x320xf32>
      %55 = arith.addf %49, %54 : vector<20x320xf32>
      %c2_51 = arith.constant 2 : index
      %c0_52 = arith.constant 0 : index
      %56 = vector.load %arg14[%c2_51, %c0_52] : memref<24x160xf32, #tpu.memory_space<vmem>>, vector<20x160xf32>
      %57 = arith.truncf %56 : vector<20x160xf32> to vector<20x160xbf16>
      %c1_53 = arith.constant 1 : index
      %c0_54 = arith.constant 0 : index
      %c0_55 = arith.constant 0 : index
      %58 = vector.load %arg4[%c1_53, %c0_54, %c0_55] : memref<3x160x320xbf16, #tpu.memory_space<vmem>>, vector<1x160x320xbf16>
      %59 = vector.shape_cast %58 : vector<1x160x320xbf16> to vector<160x320xbf16>
      %cst_56 = arith.constant dense<0.000000e+00> : vector<20x320xf32>
      %60 = tpu.matmul %57, %59, %cst_56 {dimension_numbers = #tpu.dot_dimension_numbers<[1], [0], [0], [1], [0, 0, 1, 1], [], []>} : vector<20x160xbf16>, vector<160x320xbf16>, vector<20x320xf32> -> vector<20x320xf32>
      %61 = arith.addf %55, %60 : vector<20x320xf32>
      %c4_57 = arith.constant 4 : index
      %c0_58 = arith.constant 0 : index
      %62 = vector.load %arg14[%c4_57, %c0_58] : memref<24x160xf32, #tpu.memory_space<vmem>>, vector<20x160xf32>
      %63 = arith.truncf %62 : vector<20x160xf32> to vector<20x160xbf16>
      %c2_59 = arith.constant 2 : index
      %c0_60 = arith.constant 0 : index
      %c0_61 = arith.constant 0 : index
      %64 = vector.load %arg4[%c2_59, %c0_60, %c0_61] : memref<3x160x320xbf16, #tpu.memory_space<vmem>>, vector<1x160x320xbf16>
      %65 = vector.shape_cast %64 : vector<1x160x320xbf16> to vector<160x320xbf16>
      %cst_62 = arith.constant dense<0.000000e+00> : vector<20x320xf32>
      %66 = tpu.matmul %63, %65, %cst_62 {dimension_numbers = #tpu.dot_dimension_numbers<[1], [0], [0], [1], [0, 0, 1, 1], [], []>} : vector<20x160xbf16>, vector<160x320xbf16>, vector<20x320xf32> -> vector<20x320xf32>
      %67 = arith.addf %61, %66 : vector<20x320xf32>
      %c0_63 = arith.constant 0 : index
      %c0_64 = arith.constant 0 : index
      %68 = vector.load %arg5[%c0_63, %c0_64] : memref<1x320xf32, #tpu.memory_space<vmem>>, vector<1x320xf32>
      %69 = vector.broadcast %68 : vector<1x320xf32> to vector<20x320xf32>
      %70 = arith.addf %67, %69 : vector<20x320xf32>
      %cst_65 = arith.constant 0.000000e+00 : f32
      %71 = vector.broadcast %cst_65 : f32 to vector<20x320xf32>
      %72 = arith.maximumf %70, %71 : vector<20x320xf32>
      %cst_66 = arith.constant 0.000000e+00 : f32
      %73 = vector.broadcast %cst_66 : f32 to vector<2x320xf32>
      %c0_67 = arith.constant 0 : index
      %c0_68 = arith.constant 0 : index
      %74 = vector.load %arg15[%c0_67, %c0_68] : memref<24x320xf32, #tpu.memory_space<vmem>>, vector<2x320xf32>
      tpu.vector_store %arg15[%c0_67, %c0_68], %73 {strides = array<i32>} : memref<24x320xf32, #tpu.memory_space<vmem>>, vector<2x320xf32>,
      %c22_69 = arith.constant 22 : index
      %c0_70 = arith.constant 0 : index
      %75 = vector.load %arg15[%c22_69, %c0_70] : memref<24x320xf32, #tpu.memory_space<vmem>>, vector<2x320xf32>
      tpu.vector_store %arg15[%c22_69, %c0_70], %73 {strides = array<i32>} : memref<24x320xf32, #tpu.memory_space<vmem>>, vector<2x320xf32>,
      %c2_71 = arith.constant 2 : index
      %c0_72 = arith.constant 0 : index
      %76 = vector.load %arg15[%c2_71, %c0_72] : memref<24x320xf32, #tpu.memory_space<vmem>>, vector<20x320xf32>
      tpu.vector_store %arg15[%c2_71, %c0_72], %72 {strides = array<i32>} : memref<24x320xf32, #tpu.memory_space<vmem>>, vector<20x320xf32>,
      %cst_73 = arith.constant 0.000000e+00 : f32
      %77 = vector.broadcast %cst_73 : f32 to vector<20x640xf32>
      %c0_74 = arith.constant 0 : index
      %c0_75 = arith.constant 0 : index
      %78 = vector.load %arg15[%c0_74, %c0_75] : memref<24x320xf32, #tpu.memory_space<vmem>>, vector<20x320xf32>
      %79 = arith.truncf %78 : vector<20x320xf32> to vector<20x320xbf16>
      %c0_76 = arith.constant 0 : index
      %c0_77 = arith.constant 0 : index
      %c0_78 = arith.constant 0 : index
      %80 = vector.load %arg6[%c0_76, %c0_77, %c0_78] : memref<3x320x640xbf16, #tpu.memory_space<vmem>>, vector<1x320x640xbf16>
      %81 = vector.shape_cast %80 : vector<1x320x640xbf16> to vector<320x640xbf16>
      %cst_79 = arith.constant dense<0.000000e+00> : vector<20x640xf32>
      %82 = tpu.matmul %79, %81, %cst_79 {dimension_numbers = #tpu.dot_dimension_numbers<[1], [0], [0], [1], [0, 0, 1, 1], [], []>} : vector<20x320xbf16>, vector<320x640xbf16>, vector<20x640xf32> -> vector<20x640xf32>
      %83 = arith.addf %77, %82 : vector<20x640xf32>
      %c2_80 = arith.constant 2 : index
      %c0_81 = arith.constant 0 : index
      %84 = vector.load %arg15[%c2_80, %c0_81] : memref<24x320xf32, #tpu.memory_space<vmem>>, vector<20x320xf32>
      %85 = arith.truncf %84 : vector<20x320xf32> to vector<20x320xbf16>
      %c1_82 = arith.constant 1 : index
      %c0_83 = arith.constant 0 : index
      %c0_84 = arith.constant 0 : index
      %86 = vector.load %arg6[%c1_82, %c0_83, %c0_84] : memref<3x320x640xbf16, #tpu.memory_space<vmem>>, vector<1x320x640xbf16>
      %87 = vector.shape_cast %86 : vector<1x320x640xbf16> to vector<320x640xbf16>
      %cst_85 = arith.constant dense<0.000000e+00> : vector<20x640xf32>
      %88 = tpu.matmul %85, %87, %cst_85 {dimension_numbers = #tpu.dot_dimension_numbers<[1], [0], [0], [1], [0, 0, 1, 1], [], []>} : vector<20x320xbf16>, vector<320x640xbf16>, vector<20x640xf32> -> vector<20x640xf32>
      %89 = arith.addf %83, %88 : vector<20x640xf32>
      %c4_86 = arith.constant 4 : index
      %c0_87 = arith.constant 0 : index
      %90 = vector.load %arg15[%c4_86, %c0_87] : memref<24x320xf32, #tpu.memory_space<vmem>>, vector<20x320xf32>
      %91 = arith.truncf %90 : vector<20x320xf32> to vector<20x320xbf16>
      %c2_88 = arith.constant 2 : index
      %c0_89 = arith.constant 0 : index
      %c0_90 = arith.constant 0 : index
      %92 = vector.load %arg6[%c2_88, %c0_89, %c0_90] : memref<3x320x640xbf16, #tpu.memory_space<vmem>>, vector<1x320x640xbf16>
      %93 = vector.shape_cast %92 : vector<1x320x640xbf16> to vector<320x640xbf16>
      %cst_91 = arith.constant dense<0.000000e+00> : vector<20x640xf32>
      %94 = tpu.matmul %91, %93, %cst_91 {dimension_numbers = #tpu.dot_dimension_numbers<[1], [0], [0], [1], [0, 0, 1, 1], [], []>} : vector<20x320xbf16>, vector<320x640xbf16>, vector<20x640xf32> -> vector<20x640xf32>
      %95 = arith.addf %89, %94 : vector<20x640xf32>
      %c0_92 = arith.constant 0 : index
      %c0_93 = arith.constant 0 : index
      %96 = vector.load %arg7[%c0_92, %c0_93] : memref<1x640xf32, #tpu.memory_space<vmem>>, vector<1x640xf32>
      %97 = vector.broadcast %96 : vector<1x640xf32> to vector<20x640xf32>
      %98 = arith.addf %95, %97 : vector<20x640xf32>
      %cst_94 = arith.constant 0.000000e+00 : f32
      %99 = vector.broadcast %cst_94 : f32 to vector<20x640xf32>
      %100 = arith.maximumf %98, %99 : vector<20x640xf32>
      %101 = vector.extract_strided_slice %100 {offsets = [0, 0], sizes = [2, 640], strides = [1, 1]} : vector<20x640xf32> to vector<2x640xf32>
      %c0_95 = arith.constant 0 : index
      %c0_96 = arith.constant 0 : index
      %c0_97 = arith.constant 0 : index
      %102 = vector.load %arg16[%c0_95, %c0_96, %c0_97] : memref<10x2x640xf32, #tpu.memory_space<vmem>>, vector<1x2x640xf32>
      %103 = vector.shape_cast %102 : vector<1x2x640xf32> to vector<2x640xf32>
      %104 = vector.shape_cast %101 : vector<2x640xf32> to vector<1x2x640xf32>
      tpu.vector_store %arg16[%c0_95, %c0_96, %c0_97], %104 {strides = array<i32>} : memref<10x2x640xf32, #tpu.memory_space<vmem>>, vector<1x2x640xf32>,
      %105 = vector.extract_strided_slice %100 {offsets = [2, 0], sizes = [2, 640], strides = [1, 1]} : vector<20x640xf32> to vector<2x640xf32>
      %c1_98 = arith.constant 1 : index
      %c0_99 = arith.constant 0 : index
      %c0_100 = arith.constant 0 : index
      %106 = vector.load %arg16[%c1_98, %c0_99, %c0_100] : memref<10x2x640xf32, #tpu.memory_space<vmem>>, vector<1x2x640xf32>
      %107 = vector.shape_cast %106 : vector<1x2x640xf32> to vector<2x640xf32>
      %108 = vector.shape_cast %105 : vector<2x640xf32> to vector<1x2x640xf32>
      tpu.vector_store %arg16[%c1_98, %c0_99, %c0_100], %108 {strides = array<i32>} : memref<10x2x640xf32, #tpu.memory_space<vmem>>, vector<1x2x640xf32>,
      %109 = vector.extract_strided_slice %100 {offsets = [4, 0], sizes = [2, 640], strides = [1, 1]} : vector<20x640xf32> to vector<2x640xf32>
      %c2_101 = arith.constant 2 : index
      %c0_102 = arith.constant 0 : index
      %c0_103 = arith.constant 0 : index
      %110 = vector.load %arg16[%c2_101, %c0_102, %c0_103] : memref<10x2x640xf32, #tpu.memory_space<vmem>>, vector<1x2x640xf32>
      %111 = vector.shape_cast %110 : vector<1x2x640xf32> to vector<2x640xf32>
      %112 = vector.shape_cast %109 : vector<2x640xf32> to vector<1x2x640xf32>
      tpu.vector_store %arg16[%c2_101, %c0_102, %c0_103], %112 {strides = array<i32>} : memref<10x2x640xf32, #tpu.memory_space<vmem>>, vector<1x2x640xf32>,
      %113 = vector.extract_strided_slice %100 {offsets = [6, 0], sizes = [2, 640], strides = [1, 1]} : vector<20x640xf32> to vector<2x640xf32>
      %c3 = arith.constant 3 : index
      %c0_104 = arith.constant 0 : index
      %c0_105 = arith.constant 0 : index
      %114 = vector.load %arg16[%c3, %c0_104, %c0_105] : memref<10x2x640xf32, #tpu.memory_space<vmem>>, vector<1x2x640xf32>
      %115 = vector.shape_cast %114 : vector<1x2x640xf32> to vector<2x640xf32>
      %116 = vector.shape_cast %113 : vector<2x640xf32> to vector<1x2x640xf32>
      tpu.vector_store %arg16[%c3, %c0_104, %c0_105], %116 {strides = array<i32>} : memref<10x2x640xf32, #tpu.memory_space<vmem>>, vector<1x2x640xf32>,
      %117 = vector.extract_strided_slice %100 {offsets = [8, 0], sizes = [2, 640], strides = [1, 1]} : vector<20x640xf32> to vector<2x640xf32>
      %c4_106 = arith.constant 4 : index
      %c0_107 = arith.constant 0 : index
      %c0_108 = arith.constant 0 : index
      %118 = vector.load %arg16[%c4_106, %c0_107, %c0_108] : memref<10x2x640xf32, #tpu.memory_space<vmem>>, vector<1x2x640xf32>
      %119 = vector.shape_cast %118 : vector<1x2x640xf32> to vector<2x640xf32>
      %120 = vector.shape_cast %117 : vector<2x640xf32> to vector<1x2x640xf32>
      tpu.vector_store %arg16[%c4_106, %c0_107, %c0_108], %120 {strides = array<i32>} : memref<10x2x640xf32, #tpu.memory_space<vmem>>, vector<1x2x640xf32>,
      %121 = vector.extract_strided_slice %100 {offsets = [10, 0], sizes = [2, 640], strides = [1, 1]} : vector<20x640xf32> to vector<2x640xf32>
      %c5 = arith.constant 5 : index
      %c0_109 = arith.constant 0 : index
      %c0_110 = arith.constant 0 : index
      %122 = vector.load %arg16[%c5, %c0_109, %c0_110] : memref<10x2x640xf32, #tpu.memory_space<vmem>>, vector<1x2x640xf32>
      %123 = vector.shape_cast %122 : vector<1x2x640xf32> to vector<2x640xf32>
      %124 = vector.shape_cast %121 : vector<2x640xf32> to vector<1x2x640xf32>
      tpu.vector_store %arg16[%c5, %c0_109, %c0_110], %124 {strides = array<i32>} : memref<10x2x640xf32, #tpu.memory_space<vmem>>, vector<1x2x640xf32>,
      %125 = vector.extract_strided_slice %100 {offsets = [12, 0], sizes = [2, 640], strides = [1, 1]} : vector<20x640xf32> to vector<2x640xf32>
      %c6 = arith.constant 6 : index
      %c0_111 = arith.constant 0 : index
      %c0_112 = arith.constant 0 : index
      %126 = vector.load %arg16[%c6, %c0_111, %c0_112] : memref<10x2x640xf32, #tpu.memory_space<vmem>>, vector<1x2x640xf32>
      %127 = vector.shape_cast %126 : vector<1x2x640xf32> to vector<2x640xf32>
      %128 = vector.shape_cast %125 : vector<2x640xf32> to vector<1x2x640xf32>
      tpu.vector_store %arg16[%c6, %c0_111, %c0_112], %128 {strides = array<i32>} : memref<10x2x640xf32, #tpu.memory_space<vmem>>, vector<1x2x640xf32>,
      %129 = vector.extract_strided_slice %100 {offsets = [14, 0], sizes = [2, 640], strides = [1, 1]} : vector<20x640xf32> to vector<2x640xf32>
      %c7 = arith.constant 7 : index
      %c0_113 = arith.constant 0 : index
      %c0_114 = arith.constant 0 : index
      %130 = vector.load %arg16[%c7, %c0_113, %c0_114] : memref<10x2x640xf32, #tpu.memory_space<vmem>>, vector<1x2x640xf32>
      %131 = vector.shape_cast %130 : vector<1x2x640xf32> to vector<2x640xf32>
      %132 = vector.shape_cast %129 : vector<2x640xf32> to vector<1x2x640xf32>
      tpu.vector_store %arg16[%c7, %c0_113, %c0_114], %132 {strides = array<i32>} : memref<10x2x640xf32, #tpu.memory_space<vmem>>, vector<1x2x640xf32>,
      %133 = vector.extract_strided_slice %100 {offsets = [16, 0], sizes = [2, 640], strides = [1, 1]} : vector<20x640xf32> to vector<2x640xf32>
      %c8 = arith.constant 8 : index
      %c0_115 = arith.constant 0 : index
      %c0_116 = arith.constant 0 : index
      %134 = vector.load %arg16[%c8, %c0_115, %c0_116] : memref<10x2x640xf32, #tpu.memory_space<vmem>>, vector<1x2x640xf32>
      %135 = vector.shape_cast %134 : vector<1x2x640xf32> to vector<2x640xf32>
      %136 = vector.shape_cast %133 : vector<2x640xf32> to vector<1x2x640xf32>
      tpu.vector_store %arg16[%c8, %c0_115, %c0_116], %136 {strides = array<i32>} : memref<10x2x640xf32, #tpu.memory_space<vmem>>, vector<1x2x640xf32>,
      %137 = vector.extract_strided_slice %100 {offsets = [18, 0], sizes = [2, 640], strides = [1, 1]} : vector<20x640xf32> to vector<2x640xf32>
      %c9 = arith.constant 9 : index
      %c0_117 = arith.constant 0 : index
      %c0_118 = arith.constant 0 : index
      %138 = vector.load %arg16[%c9, %c0_117, %c0_118] : memref<10x2x640xf32, #tpu.memory_space<vmem>>, vector<1x2x640xf32>
      %139 = vector.shape_cast %138 : vector<1x2x640xf32> to vector<2x640xf32>
      %140 = vector.shape_cast %137 : vector<2x640xf32> to vector<1x2x640xf32>
      tpu.vector_store %arg16[%c9, %c0_117, %c0_118], %140 {strides = array<i32>} : memref<10x2x640xf32, #tpu.memory_space<vmem>>, vector<1x2x640xf32>,
      %cst_119 = arith.constant 0.000000e+00 : f32
      %141 = vector.broadcast %cst_119 : f32 to vector<2x512xf32>
      %c0_120 = arith.constant 0 : index
      %c0_121 = arith.constant 0 : index
      %142 = vector.load %arg17[%c0_120, %c0_121] : memref<2x512xf32, #tpu.memory_space<vmem>>, vector<2x512xf32>
      tpu.vector_store %arg17[%c0_120, %c0_121], %141 {strides = array<i32>} : memref<2x512xf32, #tpu.memory_space<vmem>>, vector<2x512xf32>,
    } else {
    }
    %3 = arith.index_cast %arg0 : i32 to index
    %c0 = arith.constant 0 : index
    %c0_1 = arith.constant 0 : index
    %4 = vector.load %arg16[%3, %c0, %c0_1] : memref<10x2x640xf32, #tpu.memory_space<vmem>>, vector<1x2x640xf32>
    %5 = vector.shape_cast %4 : vector<1x2x640xf32> to vector<2x640xf32>
    %6 = arith.truncf %5 : vector<2x640xf32> to vector<2x640xbf16>
    %c0_2 = arith.constant 0 : index
    %c0_3 = arith.constant 0 : index
    %7 = vector.load %arg17[%c0_2, %c0_3] : memref<2x512xf32, #tpu.memory_space<vmem>>, vector<2x512xf32>
    %c0_4 = arith.constant 0 : index
    %c0_5 = arith.constant 0 : index
    %c0_6 = arith.constant 0 : index
    %8 = vector.load %arg8[%c0_4, %c0_5, %c0_6] : memref<1x640x512xbf16, #tpu.memory_space<vmem>>, vector<1x640x512xbf16>
    %9 = vector.shape_cast %8 : vector<1x640x512xbf16> to vector<640x512xbf16>
    %cst = arith.constant dense<0.000000e+00> : vector<2x512xf32>
    %10 = tpu.matmul %6, %9, %cst {dimension_numbers = #tpu.dot_dimension_numbers<[1], [0], [0], [1], [0, 0, 1, 1], [], []>} : vector<2x640xbf16>, vector<640x512xbf16>, vector<2x512xf32> -> vector<2x512xf32>
    %11 = arith.addf %7, %10 : vector<2x512xf32>
    %c0_7 = arith.constant 0 : index
    %c0_8 = arith.constant 0 : index
    %12 = vector.load %arg17[%c0_7, %c0_8] : memref<2x512xf32, #tpu.memory_space<vmem>>, vector<2x512xf32>
    tpu.vector_store %arg17[%c0_7, %c0_8], %11 {strides = array<i32>} : memref<2x512xf32, #tpu.memory_space<vmem>>, vector<2x512xf32>,
    %c9_i32 = arith.constant 9 : i32
    %13 = arith.cmpi eq, %arg0, %c9_i32 : i32
    %14 = arith.extui %13 : i1 to i32
    %c0_i32_9 = arith.constant 0 : i32
    %15 = arith.cmpi ne, %14, %c0_i32_9 : i32
    scf.if %15 {
      %c0_10 = arith.constant 0 : index
      %c0_11 = arith.constant 0 : index
      %16 = vector.load %arg17[%c0_10, %c0_11] : memref<2x512xf32, #tpu.memory_space<vmem>>, vector<2x512xf32>
      %c0_12 = arith.constant 0 : index
      %c0_13 = arith.constant 0 : index
      %17 = vector.load %arg9[%c0_12, %c0_13] : memref<1x512xf32, #tpu.memory_space<vmem>>, vector<1x512xf32>
      %18 = vector.broadcast %17 : vector<1x512xf32> to vector<2x512xf32>
      %19 = arith.addf %16, %18 : vector<2x512xf32>
      %cst_14 = arith.constant 0.000000e+00 : f32
      %20 = vector.broadcast %cst_14 : f32 to vector<2x512xf32>
      %21 = arith.maximumf %19, %20 : vector<2x512xf32>
      %22 = arith.truncf %21 : vector<2x512xf32> to vector<2x512xbf16>
      %c0_15 = arith.constant 0 : index
      %c0_16 = arith.constant 0 : index
      %23 = vector.load %arg10[%c0_15, %c0_16] : memref<512x128xbf16, #tpu.memory_space<vmem>>, vector<512x128xbf16>
      %cst_17 = arith.constant dense<0.000000e+00> : vector<2x128xf32>
      %24 = tpu.matmul %22, %23, %cst_17 {dimension_numbers = #tpu.dot_dimension_numbers<[1], [0], [0], [1], [0, 0, 1, 1], [], []>} : vector<2x512xbf16>, vector<512x128xbf16>, vector<2x128xf32> -> vector<2x128xf32>
      %c0_18 = arith.constant 0 : index
      %c0_19 = arith.constant 0 : index
      %25 = vector.load %arg11[%c0_18, %c0_19] : memref<1x128xf32, #tpu.memory_space<vmem>>, vector<1x128xf32>
      %26 = vector.broadcast %25 : vector<1x128xf32> to vector<2x128xf32>
      %27 = arith.addf %24, %26 : vector<2x128xf32>
      %c0_20 = arith.constant 0 : index
      %c0_21 = arith.constant 0 : index
      %28 = vector.load %arg12[%c0_20, %c0_21] : memref<2x128xf32, #tpu.memory_space<vmem>>, vector<2x128xf32>
      tpu.vector_store %arg12[%c0_20, %c0_21], %27 {strides = array<i32>} : memref<2x128xf32, #tpu.memory_space<vmem>>, vector<2x128xf32>,
    } else {
    }
    return
  }
  func.func @transform_0(%arg0: i32) -> (i32, i32) {
    %c0_i32 = arith.constant 0 : i32
    %c0_i32_0 = arith.constant 0 : i32
    %c0_i32_1 = arith.constant 0 : i32
    return %c0_i32, %c0_i32_0 : i32, i32
  }
  func.func @transform_1(%arg0: i32) -> (i32, i32, i32) {
    %c0_i32 = arith.constant 0 : i32
    %c0_i32_0 = arith.constant 0 : i32
    %c0_i32_1 = arith.constant 0 : i32
    %c0_i32_2 = arith.constant 0 : i32
    return %c0_i32, %c0_i32_0, %c0_i32_1 : i32, i32, i32
  }
  func.func @transform_2(%arg0: i32) -> (i32, i32) {
    %c0_i32 = arith.constant 0 : i32
    %c0_i32_0 = arith.constant 0 : i32
    %c0_i32_1 = arith.constant 0 : i32
    return %c0_i32, %c0_i32_0 : i32, i32
  }
  func.func @transform_3(%arg0: i32) -> (i32, i32, i32) {
    %c0_i32 = arith.constant 0 : i32
    %c0_i32_0 = arith.constant 0 : i32
    %c0_i32_1 = arith.constant 0 : i32
    %c0_i32_2 = arith.constant 0 : i32
    return %c0_i32, %c0_i32_0, %c0_i32_1 : i32, i32, i32
  }
  func.func @transform_4(%arg0: i32) -> (i32, i32) {
    %c0_i32 = arith.constant 0 : i32
    %c0_i32_0 = arith.constant 0 : i32
    %c0_i32_1 = arith.constant 0 : i32
    return %c0_i32, %c0_i32_0 : i32, i32
  }
  func.func @transform_5(%arg0: i32) -> (i32, i32, i32) {
    %c0_i32 = arith.constant 0 : i32
    %c0_i32_0 = arith.constant 0 : i32
    %c0_i32_1 = arith.constant 0 : i32
    %c0_i32_2 = arith.constant 0 : i32
    return %c0_i32, %c0_i32_0, %c0_i32_1 : i32, i32, i32
  }
  func.func @transform_6(%arg0: i32) -> (i32, i32) {
    %c0_i32 = arith.constant 0 : i32
    %c0_i32_0 = arith.constant 0 : i32
    %c0_i32_1 = arith.constant 0 : i32
    return %c0_i32, %c0_i32_0 : i32, i32
  }
  func.func @transform_7(%arg0: i32) -> (i32, i32, i32) {
    %c0_i32 = arith.constant 0 : i32
    %c0_i32_0 = arith.constant 0 : i32
    %c0_i32_1 = arith.constant 0 : i32
    return %arg0, %c0_i32, %c0_i32_0 : i32, i32, i32
  }
  func.func @transform_8(%arg0: i32) -> (i32, i32) {
    %c0_i32 = arith.constant 0 : i32
    %c0_i32_0 = arith.constant 0 : i32
    %c0_i32_1 = arith.constant 0 : i32
    return %c0_i32, %c0_i32_0 : i32, i32
  }
  func.func @transform_9(%arg0: i32) -> (i32, i32) {
    %c0_i32 = arith.constant 0 : i32
    %c0_i32_0 = arith.constant 0 : i32
    %c0_i32_1 = arith.constant 0 : i32
    return %c0_i32, %c0_i32_0 : i32, i32
  }
  func.func @transform_10(%arg0: i32) -> (i32, i32) {
    %c0_i32 = arith.constant 0 : i32
    %c0_i32_0 = arith.constant 0 : i32
    %c0_i32_1 = arith.constant 0 : i32
    return %c0_i32, %c0_i32_0 : i32, i32
  }
  func.func @transform_11(%arg0: i32) -> (i32, i32) {
    %c0_i32 = arith.constant 0 : i32
    %c0_i32_0 = arith.constant 0 : i32
    %c0_i32_1 = arith.constant 0 : i32
    return %c0_i32, %c0_i32_0 : i32, i32
  }
}

</mosaic_0001>

<llo_original>
// kernel: cnn_forward.1
$region0: #{cnn_forward.1}
  #allocation0 [shape = 'u32[]', space=smem, size = 0x4, offset = 0x4, fixed_abs, tag = 'smem constant byte address 0x4 - core index']
  #allocation1 [shape = 'u32[72,128]{1,0:T(1,128)}', space=vmem, size = 0x9000, scoped, tag = 'internal scratch']
  #allocation2 [shape = 'f32[24,30]{1,0:T(8,128)}', space=vmem, size = 0x3000, scoped, tag = 'scratch operand']
  #allocation3 [shape = 'f32[24,160]{1,0:T(8,128)}', space=vmem, size = 0x6000, scoped, tag = 'scratch operand']
  #allocation4 [shape = 'f32[24,320]{1,0:T(8,128)}', space=vmem, size = 0x9000, scoped, tag = 'scratch operand']
  #allocation5 [shape = 'f32[10,2,640]{2,1,0:T(2,128)}', space=vmem, size = 0xc800, scoped, tag = 'scratch operand']
  #allocation6 [shape = 'f32[2,512]{1,0:T(2,128)}', space=vmem, size = 0x1000, scoped, tag = 'scratch operand']
  %s0 = inlined_call_operand.vmem [shape: f32[20,30], index: 0, kind: input, shape index: {}]
  %s1 = inlined_call_operand.hbm [shape: bf16[3,30,160], index: 1, kind: input, shape index: {}]
  %s2 = inlined_call_operand.hbm [shape: f32[1,160], index: 2, kind: input, shape index: {}]
  %s3 = inlined_call_operand.hbm [shape: bf16[3,160,320], index: 3, kind: input, shape index: {}]
  %s4 = inlined_call_operand.hbm [shape: f32[1,320], index: 4, kind: input, shape index: {}]
  %s5 = inlined_call_operand.hbm [shape: bf16[3,320,640], index: 5, kind: input, shape index: {}]
  %s6 = inlined_call_operand.hbm [shape: f32[1,640], index: 6, kind: input, shape index: {}]
  %s7 = inlined_call_operand.hbm [shape: bf16[10,640,512], index: 7, kind: input, shape index: {}]
  %s8 = inlined_call_operand.hbm [shape: f32[1,512], index: 8, kind: input, shape index: {}]
  %s9 = inlined_call_operand.hbm [shape: bf16[512,128], index: 9, kind: input, shape index: {}]
  %s10 = inlined_call_operand.hbm [shape: f32[1,128], index: 10, kind: input, shape index: {}]
  %s11 = inlined_call_operand.vmem [shape: f32[2,128], index: 11, kind: output, shape index: {}]
  %s12 = sld [smem:[#allocation0]]
  $region125: #{cnn_forward.1} parent=0
    _
  %s14 = ssub.s32 1, %s12
  %s15 = scalar_select 0, %s14, %s12
  $region1: #{cnn_forward.1} parent=0
    #allocation7 [shape = 'u8[49152]{0}', space=vmem, size = 0xc000, scoped, tag = 'input window, operand 1, single buffered']
    #allocation8 [shape = 's32[2]{0}', space=sflag, size = 0x8, scoped, tag = 'scoped memory for cnn_forward.1']
    #allocation9 [shape = 'u8[1024]{0}', space=vmem, size = 0x400, scoped, tag = 'input window, operand 2, single buffered']
    #allocation10 [shape = 's32[1]{0}', space=sflag, size = 0x4, scoped, tag = 'scoped memory for cnn_forward.1']
    #allocation11 [shape = 'u8[368640]{0}', space=vmem, size = 0x5a000, scoped, tag = 'input window, operand 3, single buffered']
    #allocation12 [shape = 'u8[1536]{0}', space=vmem, size = 0x800, scoped, tag = 'input window, operand 4, single buffered']
    #allocation13 [shape = 's32[1]{0}', space=sflag, size = 0x4, scoped, tag = 'scoped memory for cnn_forward.1']
    #allocation14 [shape = 'u8[1228800]{0}', space=vmem, size = 0x12c000, scoped, tag = 'input window, operand 5, single buffered']
    #allocation15 [shape = 'u8[2560]{0}', space=vmem, size = 0xc00, scoped, tag = 'input window, operand 6, single buffered']
    #allocation16 [shape = 's32[1]{0}', space=sflag, size = 0x4, scoped, tag = 'scoped memory for cnn_forward.1']
    #allocation17 [shape = 'u8[1310720]{0}', space=vmem, size = 0x140000, scoped, tag = 'input window, operand 7']
    #allocation18 [shape = 'u8[2048]{0}', space=vmem, size = 0x800, scoped, tag = 'input window, operand 8, single buffered']
    #allocation19 [shape = 'u8[131072]{0}', space=vmem, size = 0x20000, scoped, tag = 'input window, operand 9, single buffered']
    #allocation20 [shape = 'u8[512]{0}', space=vmem, size = 0x400, scoped, tag = 'input window, operand 10, single buffered']
    %16 = vsyncpa [#allocation8], 0
    %17 = vsyncpa [#allocation10], 0
    %18 = vsyncpa [#allocation13], 0
    %19 = vsyncpa [#allocation16], 0
    loop: start=0, step=1, limit=12
    $region2: #{cnn_forward.1} parent=1 // loop_pre_header
      _
    $region3: #{cnn_forward.1} parent=1 // loop_header
      %s21 = sphi 0, %s25
      %p22 = scmp.ge.s32.totalorder %s21, 12
      %s29 = sphi 0, %s29
      %s31 = sphi 0, %s29
      %s32 = sphi 0, %s31
      %s46 = sphi 0, %s32
      %s50 = sphi 0, %s50
      %s52 = sphi 0, %s50
      %s53 = sphi 0, %s52
      %s67 = sphi 0, %s53
      %s71 = sphi 0, %s71
      %s73 = sphi 0, %s71
      %s74 = sphi 0, %s73
      %s88 = sphi 0, %s74
      %s92 = sphi 0, %s92
      %s94 = sphi 0, %s92
      %s95 = sphi 0, %s94
      %s109 = sphi 0, %s95
      %s113 = sphi 0, %s113
      %s115 = sphi 0, %s113
      %s116 = sphi 0, %s115
      %s130 = sphi 0, %s116
      %s134 = sphi 0, %s134
      %s136 = sphi 0, %s134
      %s137 = sphi 0, %s136
      %s151 = sphi 0, %s137
      %s155 = sphi 0, %s155
      %s157 = sphi 0, %s155
      %s158 = sphi 0, %s157
      %s172 = sphi 0, %s158
      %s178 = sphi 0, %s180
      %s181 = sphi 0, %s178
      %s182 = sphi 0, %s181
      %s198 = sphi 0, %s182
      %s202 = sphi 0, %s202
      %s204 = sphi 0, %s202
      %s205 = sphi 0, %s204
      %s219 = sphi 0, %s205
      %s223 = sphi 0, %s223
      %s225 = sphi 0, %s223
      %s226 = sphi 0, %s225
      %s240 = sphi 0, %s226
      %s244 = sphi 0, %s244
      %s246 = sphi 0, %s244
      %s247 = sphi 0, %s246
      %s261 = sphi 0, %s247
      %s265 = sphi 0, %s265
      %s267 = sphi 0, %s265
      %s268 = sphi 0, %s267
      %s282 = sphi 0, %s268
    $region4: #{cnn_forward.1} parent=1 // loop_header_branch
      %24 = sbr.rel (%p22) target = $region8
    $region5: #{cnn_forward.1} parent=1 // loop_body
      %s26 = ssub.s32 %s21, 1
      %s27 = ssub.s32 %s21, 2
      %s28 = sadd.s32 %s21, 1
      %s30 = sadd.s32 %s29, 1
      %p33 = scmp.eq.s32.totalorder %s21, 9
      %p34 = scmp.ne.s32.totalorder %s29, %s31
      %p35 = scmp.eq.s32.totalorder %s21, 0
      %p36 = por %p34, %p35
      %p37 = scmp.ne.s32.totalorder %s29, %s31
      %p38 = scmp.eq.s32.totalorder %s26, 9
      %p39 = por %p37, %p38
      %p40 = scmp.ne.s32.totalorder %s31, %s32
      %p41 = scmp.eq.s32.totalorder %s26, 0
      %p42 = por %p40, %p41
      %p43 = scmp.ne.s32.totalorder %s31, %s32
      %p44 = scmp.eq.s32.totalorder %s27, 9
      %p45 = por %p43, %p44
      %p47 = scmp.ne.s32.totalorder %s32, %s46
      %p48 = scmp.eq.s32.totalorder %s27, 0
      %p49 = por %p47, %p48
      %s51 = sadd.s32 %s50, 1
      %p54 = scmp.eq.s32.totalorder %s21, 9
      %p55 = scmp.ne.s32.totalorder %s50, %s52
      %p56 = scmp.eq.s32.totalorder %s21, 0
      %p57 = por %p55, %p56
      %p58 = scmp.ne.s32.totalorder %s50, %s52
      %p59 = scmp.eq.s32.totalorder %s26, 9
      %p60 = por %p58, %p59
      %p61 = scmp.ne.s32.totalorder %s52, %s53
      %p62 = scmp.eq.s32.totalorder %s26, 0
      %p63 = por %p61, %p62
      %p64 = scmp.ne.s32.totalorder %s52, %s53
      %p65 = scmp.eq.s32.totalorder %s27, 9
      %p66 = por %p64, %p65
      %p68 = scmp.ne.s32.totalorder %s53, %s67
      %p69 = scmp.eq.s32.totalorder %s27, 0
      %p70 = por %p68, %p69
      %s72 = sadd.s32 %s71, 1
      %p75 = scmp.eq.s32.totalorder %s21, 9
      %p76 = scmp.ne.s32.totalorder %s71, %s73
      %p77 = scmp.eq.s32.totalorder %s21, 0
      %p78 = por %p76, %p77
      %p79 = scmp.ne.s32.totalorder %s71, %s73
      %p80 = scmp.eq.s32.totalorder %s26, 9
      %p81 = por %p79, %p80
      %p82 = scmp.ne.s32.totalorder %s73, %s74
      %p83 = scmp.eq.s32.totalorder %s26, 0
      %p84 = por %p82, %p83
      %p85 = scmp.ne.s32.totalorder %s73, %s74
      %p86 = scmp.eq.s32.totalorder %s27, 9
      %p87 = por %p85, %p86
      %p89 = scmp.ne.s32.totalorder %s74, %s88
      %p90 = scmp.eq.s32.totalorder %s27, 0
      %p91 = por %p89, %p90
      %s93 = sadd.s32 %s92, 1
      %p96 = scmp.eq.s32.totalorder %s21, 9
      %p97 = scmp.ne.s32.totalorder %s92, %s94
      %p98 = scmp.eq.s32.totalorder %s21, 0
      %p99 = por %p97, %p98
      %p100 = scmp.ne.s32.totalorder %s92, %s94
      %p101 = scmp.eq.s32.totalorder %s26, 9
      %p102 = por %p100, %p101
      %p103 = scmp.ne.s32.totalorder %s94, %s95
      %p104 = scmp.eq.s32.totalorder %s26, 0
      %p105 = por %p103, %p104
      %p106 = scmp.ne.s32.totalorder %s94, %s95
      %p107 = scmp.eq.s32.totalorder %s27, 9
      %p108 = por %p106, %p107
      %p110 = scmp.ne.s32.totalorder %s95, %s109
      %p111 = scmp.eq.s32.totalorder %s27, 0
      %p112 = por %p110, %p111
      %s114 = sadd.s32 %s113, 1
      %p117 = scmp.eq.s32.totalorder %s21, 9
      %p118 = scmp.ne.s32.totalorder %s113, %s115
      %p119 = scmp.eq.s32.totalorder %s21, 0
      %p120 = por %p118, %p119
      %p121 = scmp.ne.s32.totalorder %s113, %s115
      %p122 = scmp.eq.s32.totalorder %s26, 9
      %p123 = por %p121, %p122
      %p124 = scmp.ne.s32.totalorder %s115, %s116
      %p125 = scmp.eq.s32.totalorder %s26, 0
      %p126 = por %p124, %p125
      %p127 = scmp.ne.s32.totalorder %s115, %s116
      %p128 = scmp.eq.s32.totalorder %s27, 9
      %p129 = por %p127, %p128
      %p131 = scmp.ne.s32.totalorder %s116, %s130
      %p132 = scmp.eq.s32.totalorder %s27, 0
      %p133 = por %p131, %p132
      %s135 = sadd.s32 %s134, 1
      %p138 = scmp.eq.s32.totalorder %s21, 9
      %p139 = scmp.ne.s32.totalorder %s134, %s136
      %p140 = scmp.eq.s32.totalorder %s21, 0
      %p141 = por %p139, %p140
      %p142 = scmp.ne.s32.totalorder %s134, %s136
      %p143 = scmp.eq.s32.totalorder %s26, 9
      %p144 = por %p142, %p143
      %p145 = scmp.ne.s32.totalorder %s136, %s137
      %p146 = scmp.eq.s32.totalorder %s26, 0
      %p147 = por %p145, %p146
      %p148 = scmp.ne.s32.totalorder %s136, %s137
      %p149 = scmp.eq.s32.totalorder %s27, 9
      %p150 = por %p148, %p149
      %p152 = scmp.ne.s32.totalorder %s137, %s151
      %p153 = scmp.eq.s32.totalorder %s27, 0
      %p154 = por %p152, %p153
      %s156 = sadd.s32 %s155, 1
      %p159 = scmp.eq.s32.totalorder %s21, 9
      %p160 = scmp.ne.s32.totalorder %s155, %s157
      %p161 = scmp.eq.s32.totalorder %s21, 0
      %p162 = por %p160, %p161
      %p163 = scmp.ne.s32.totalorder %s155, %s157
      %p164 = scmp.eq.s32.totalorder %s26, 9
      %p165 = por %p163, %p164
      %p166 = scmp.ne.s32.totalorder %s157, %s158
      %p167 = scmp.eq.s32.totalorder %s26, 0
      %p168 = por %p166, %p167
      %p169 = scmp.ne.s32.totalorder %s157, %s158
      %p170 = scmp.eq.s32.totalorder %s27, 9
      %p171 = por %p169, %p170
      %p173 = scmp.ne.s32.totalorder %s158, %s172
      %p174 = scmp.eq.s32.totalorder %s27, 0
      %p175 = por %p173, %p174
      %s176 = ssub.s32 %s21, %s28
      %p177 = scmp.eq.s32.totalorder %s176, 0
      %s179 = sadd.s32 %s178, 1
      %s180 = scalar_select %p177, %s178, %s179
      %p183 = pneg %p177
      %p184 = scmp.eq.s32.totalorder %s21, 9
      %p185 = por %p183, %p184
      %p186 = scmp.ne.s32.totalorder %s178, %s181
      %p187 = scmp.eq.s32.totalorder %s21, 0
      %p188 = por %p186, %p187
      %p189 = scmp.ne.s32.totalorder %s178, %s181
      %p190 = scmp.eq.s32.totalorder %s26, 9
      %p191 = por %p189, %p190
      %p192 = scmp.ne.s32.totalorder %s181, %s182
      %p193 = scmp.eq.s32.totalorder %s26, 0
      %p194 = por %p192, %p193
      %p195 = scmp.ne.s32.totalorder %s181, %s182
      %p196 = scmp.eq.s32.totalorder %s27, 9
      %p197 = por %p195, %p196
      %p199 = scmp.ne.s32.totalorder %s182, %s198
      %p200 = scmp.eq.s32.totalorder %s27, 0
      %p201 = por %p199, %p200
      %s203 = sadd.s32 %s202, 1
      %p206 = scmp.eq.s32.totalorder %s21, 9
      %p207 = scmp.ne.s32.totalorder %s202, %s204
      %p208 = scmp.eq.s32.totalorder %s21, 0
      %p209 = por %p207, %p208
      %p210 = scmp.ne.s32.totalorder %s202, %s204
      %p211 = scmp.eq.s32.totalorder %s26, 9
      %p212 = por %p210, %p211
      %p213 = scmp.ne.s32.totalorder %s204, %s205
      %p214 = scmp.eq.s32.totalorder %s26, 0
      %p215 = por %p213, %p214
      %p216 = scmp.ne.s32.totalorder %s204, %s205
      %p217 = scmp.eq.s32.totalorder %s27, 9
      %p218 = por %p216, %p217
      %p220 = scmp.ne.s32.totalorder %s205, %s219
      %p221 = scmp.eq.s32.totalorder %s27, 0
      %p222 = por %p220, %p221
      %s224 = sadd.s32 %s223, 1
      %p227 = scmp.eq.s32.totalorder %s21, 9
      %p228 = scmp.ne.s32.totalorder %s223, %s225
      %p229 = scmp.eq.s32.totalorder %s21, 0
      %p230 = por %p228, %p229
      %p231 = scmp.ne.s32.totalorder %s223, %s225
      %p232 = scmp.eq.s32.totalorder %s26, 9
      %p233 = por %p231, %p232
      %p234 = scmp.ne.s32.totalorder %s225, %s226
      %p235 = scmp.eq.s32.totalorder %s26, 0
      %p236 = por %p234, %p235
      %p237 = scmp.ne.s32.totalorder %s225, %s226
      %p238 = scmp.eq.s32.totalorder %s27, 9
      %p239 = por %p237, %p238
      %p241 = scmp.ne.s32.totalorder %s226, %s240
      %p242 = scmp.eq.s32.totalorder %s27, 0
      %p243 = por %p241, %p242
      %s245 = sadd.s32 %s244, 1
      %p248 = scmp.eq.s32.totalorder %s21, 9
      %p249 = scmp.ne.s32.totalorder %s244, %s246
      %p250 = scmp.eq.s32.totalorder %s21, 0
      %p251 = por %p249, %p250
      %p252 = scmp.ne.s32.totalorder %s244, %s246
      %p253 = scmp.eq.s32.totalorder %s26, 9
      %p254 = por %p252, %p253
      %p255 = scmp.ne.s32.totalorder %s246, %s247
      %p256 = scmp.eq.s32.totalorder %s26, 0
      %p257 = por %p255, %p256
      %p258 = scmp.ne.s32.totalorder %s246, %s247
      %p259 = scmp.eq.s32.totalorder %s27, 9
      %p260 = por %p258, %p259
      %p262 = scmp.ne.s32.totalorder %s247, %s261
      %p263 = scmp.eq.s32.totalorder %s27, 0
      %p264 = por %p262, %p263
      %s266 = sadd.s32 %s265, 1
      %p269 = scmp.eq.s32.totalorder %s21, 9
      %p270 = scmp.ne.s32.totalorder %s265, %s267
      %p271 = scmp.eq.s32.totalorder %s21, 0
      %p272 = por %p270, %p271
      %p273 = scmp.ne.s32.totalorder %s265, %s267
      %p274 = scmp.eq.s32.totalorder %s26, 9
      %p275 = por %p273, %p274
      %p276 = scmp.ne.s32.totalorder %s267, %s268
      %p277 = scmp.eq.s32.totalorder %s26, 0
      %p278 = por %p276, %p277
      %p279 = scmp.ne.s32.totalorder %s267, %s268
      %p280 = scmp.eq.s32.totalorder %s27, 9
      %p281 = por %p279, %p280
      %p283 = scmp.ne.s32.totalorder %s268, %s282
      %p284 = scmp.eq.s32.totalorder %s27, 0
      %p285 = por %p283, %p284
      %p286 = scmp.le.s32.totalorder 1, %s21
      %p287 = scmp.lt.s32.totalorder %s21, 11
      %p288 = pnand %p286, %p287
      %p289 = pneg %p288
      // Predicated region
      $region9: #{cnn_forward.1} parent=5 // pred_check
        _
      $region10: #{cnn_forward.1} parent=5 // pred_check_branch
        %291 = sbr.rel (%p288) target = $region12
      $region11: #{cnn_forward.1} parent=5 // pred_region
        %s292 = ssub.s32 %s21, 1
        // Predicated region
        $region13: #{cnn_forward.1} parent=11 // pred_check
          %p293 = pneg %p42
        $region14: #{cnn_forward.1} parent=11 // pred_check_branch
          %295 = sbr.rel (%p293) target = $region16
        $region15: #{cnn_forward.1} parent=11 // pred_region
          _
        $region16: #{cnn_forward.1} parent=11 // pred_fallthru
          _
        // Predicated region
        $region17: #{cnn_forward.1} parent=11 // pred_check
          %p296 = pneg %p63
        $region18: #{cnn_forward.1} parent=11 // pred_check_branch
          %298 = sbr.rel (%p296) target = $region20
        $region19: #{cnn_forward.1} parent=11 // pred_region
          %300 = vsyncadd [#allocation8], 0
          %s301 = sshll.u32 %s1, 4
          %s302 = int_to_ptr.hbm [resolvable:$true] %s301
          %s303 = sshll.u32 [#allocation7], 4
          %s304 = int_to_ptr.vmem [resolvable:$true] %s303
          %309 = dma.hbm_to_vmem [thread:$0]  %s302, 1536, %s304, [#allocation8], 128, 128, 8
        $region20: #{cnn_forward.1} parent=11 // pred_fallthru
          _
        // Predicated region
        $region21: #{cnn_forward.1} parent=11 // pred_check
          %p310 = pneg %p84
        $region22: #{cnn_forward.1} parent=11 // pred_check_branch
          %312 = sbr.rel (%p310) target = $region24
        $region23: #{cnn_forward.1} parent=11 // pred_region
          %314 = vsyncadd [#allocation10], 0
          %s316 = sshll.u32 %s2, 4
          %s317 = int_to_ptr.hbm [resolvable:$true] %s316
          %s318 = sshll.u32 [#allocation9], 4
          %s319 = int_to_ptr.vmem [resolvable:$true] %s318
          %321 = dma.hbm_to_vmem [thread:$0]  %s317, 32, %s319, [#allocation10]
        $region24: #{cnn_forward.1} parent=11 // pred_fallthru
          _
        // Predicated region
        $region25: #{cnn_forward.1} parent=11 // pred_check
          %p322 = pneg %p105
        $region26: #{cnn_forward.1} parent=11 // pred_check_branch
          %324 = sbr.rel (%p322) target = $region28
        $region27: #{cnn_forward.1} parent=11 // pred_region
          %326 = vsyncadd [#allocation10], 0
          %s327 = sshll.u32 %s3, 4
          %s328 = int_to_ptr.hbm [resolvable:$true] %s327
          %s329 = sshll.u32 [#allocation11], 4
          %s330 = int_to_ptr.vmem [resolvable:$true] %s329
          %335 = dma.hbm_to_vmem [thread:$0]  %s328, 11520, %s330, [#allocation10], 192, 192, 12
        $region28: #{cnn_forward.1} parent=11 // pred_fallthru
          _
        // Predicated region
        $region29: #{cnn_forward.1} parent=11 // pred_check
          %p336 = pneg %p126
        $region30: #{cnn_forward.1} parent=11 // pred_check_branch
          %338 = sbr.rel (%p336) target = $region32
        $region31: #{cnn_forward.1} parent=11 // pred_region
          %340 = vsyncadd [#allocation13], 0
          %s342 = sshll.u32 %s4, 4
          %s343 = int_to_ptr.hbm [resolvable:$true] %s342
          %s344 = sshll.u32 [#allocation12], 4
          %s345 = int_to_ptr.vmem [resolvable:$true] %s344
          %347 = dma.hbm_to_vmem [thread:$0]  %s343, 48, %s345, [#allocation13]
        $region32: #{cnn_forward.1} parent=11 // pred_fallthru
          _
        // Predicated region
        $region33: #{cnn_forward.1} parent=11 // pred_check
          %p348 = pneg %p147
        $region34: #{cnn_forward.1} parent=11 // pred_check_branch
          %350 = sbr.rel (%p348) target = $region36
        $region35: #{cnn_forward.1} parent=11 // pred_region
          %352 = vsyncadd [#allocation13], 0
          %s353 = sshll.u32 %s5, 4
          %s354 = int_to_ptr.hbm [resolvable:$true] %s353
          %s355 = sshll.u32 [#allocation14], 4
          %s356 = int_to_ptr.vmem [resolvable:$true] %s355
          %361 = dma.hbm_to_vmem [thread:$0]  %s354, 38400, %s356, [#allocation13], 320, 320, 20
        $region36: #{cnn_forward.1} parent=11 // pred_fallthru
          _
        // Predicated region
        $region37: #{cnn_forward.1} parent=11 // pred_check
          %p362 = pneg %p168
        $region38: #{cnn_forward.1} parent=11 // pred_check_branch
          %364 = sbr.rel (%p362) target = $region40
        $region39: #{cnn_forward.1} parent=11 // pred_region
          %366 = vsyncadd [#allocation16], 0
          %s368 = sshll.u32 %s6, 4
          %s369 = int_to_ptr.hbm [resolvable:$true] %s368
          %s370 = sshll.u32 [#allocation15], 4
          %s371 = int_to_ptr.vmem [resolvable:$true] %s370
          %373 = dma.hbm_to_vmem [thread:$0]  %s369, 80, %s371, [#allocation16]
        $region40: #{cnn_forward.1} parent=11 // pred_fallthru
          _
        // Predicated region
        $region41: #{cnn_forward.1} parent=11 // pred_check
          %p374 = pneg %p215
        $region42: #{cnn_forward.1} parent=11 // pred_check_branch
          %376 = sbr.rel (%p374) target = $region44
        $region43: #{cnn_forward.1} parent=11 // pred_region
          %378 = vsyncadd [#allocation10], 0
          %s380 = sshll.u32 %s8, 4
          %s381 = int_to_ptr.hbm [resolvable:$true] %s380
          %s382 = sshll.u32 [#allocation18], 4
          %s383 = int_to_ptr.vmem [resolvable:$true] %s382
          %385 = dma.hbm_to_vmem [thread:$0]  %s381, 64, %s383, [#allocation10]
        $region44: #{cnn_forward.1} parent=11 // pred_fallthru
          _
        // Predicated region
        $region45: #{cnn_forward.1} parent=11 // pred_check
          %p386 = pneg %p236
        $region46: #{cnn_forward.1} parent=11 // pred_check_branch
          %388 = sbr.rel (%p386) target = $region48
        $region47: #{cnn_forward.1} parent=11 // pred_region
          %390 = vsyncadd [#allocation13], 0
          %s391 = sshll.u32 %s9, 4
          %s392 = int_to_ptr.hbm [resolvable:$true] %s391
          %s393 = sshll.u32 [#allocation19], 4
          %s394 = int_to_ptr.vmem [resolvable:$true] %s393
          %399 = dma.hbm_to_vmem [thread:$0]  %s392, 4096, %s394, [#allocation13], 64, 64, 4
        $region48: #{cnn_forward.1} parent=11 // pred_fallthru
          _
        // Predicated region
        $region49: #{cnn_forward.1} parent=11 // pred_check
          %p400 = pneg %p257
        $region50: #{cnn_forward.1} parent=11 // pred_check_branch
          %402 = sbr.rel (%p400) target = $region52
        $region51: #{cnn_forward.1} parent=11 // pred_region
          %404 = vsyncadd [#allocation16], 0
          %s406 = sshll.u32 %s10, 4
          %s407 = int_to_ptr.hbm [resolvable:$true] %s406
          %s408 = sshll.u32 [#allocation20], 4
          %s409 = int_to_ptr.vmem [resolvable:$true] %s408
          %411 = dma.hbm_to_vmem [thread:$0]  %s407, 16, %s409, [#allocation16]
        $region52: #{cnn_forward.1} parent=11 // pred_fallthru
          _
      $region12: #{cnn_forward.1} parent=5 // pred_fallthru
        _
      %p412 = scmp.lt.s32.totalorder %s21, 10
      // Predicated region
      $region53: #{cnn_forward.1} parent=5 // pred_check
        %p413 = pneg %p412
      $region54: #{cnn_forward.1} parent=5 // pred_check_branch
        %415 = sbr.rel (%p413) target = $region56
      $region55: #{cnn_forward.1} parent=5 // pred_region
        // Predicated region
        $region57: #{cnn_forward.1} parent=55 // pred_check
          %p416 = pneg %p188
        $region58: #{cnn_forward.1} parent=55 // pred_check_branch
          %418 = sbr.rel (%p416) target = $region60
        $region59: #{cnn_forward.1} parent=55 // pred_region
          %s419 = sand.u32 %s21, 1
          %s420 = scalar_lea.sflag [#allocation8], %s419
          %s421 = sand.u32 %s178, 1
          %s422 = smul.addr %s421, 1280
          %s423 = scalar_lea.vmem [#allocation17], %s422
          %425 = vsyncadd %s420, 0
          %s426 = smul.addr %s21, 320
          %s427 = smul.addr %s426, 4
          %s428 = scalar_lea.hbm %s7, %s427
          %s429 = sshll.u32 %s428, 4
          %s430 = int_to_ptr.hbm [resolvable:$true] %s429
          %s431 = sshll.u32 %s423, 4
          %s432 = int_to_ptr.vmem [resolvable:$true] %s431
          %437 = dma.hbm_to_vmem [thread:$0]  %s430, 20480, %s432, %s420, 256, 256, 16
        $region60: #{cnn_forward.1} parent=55 // pred_fallthru
          _
      $region56: #{cnn_forward.1} parent=5 // pred_fallthru
        _
      %p438 = scmp.le.s32.totalorder 1, %s21
      %p439 = scmp.lt.s32.totalorder %s21, 11
      %p440 = pnand %p438, %p439
      %p441 = pneg %p440
      // Predicated region
      $region61: #{cnn_forward.1} parent=5 // pred_check
        _
      $region62: #{cnn_forward.1} parent=5 // pred_check_branch
        %443 = sbr.rel (%p440) target = $region64
      $region63: #{cnn_forward.1} parent=5 // pred_region
        %s444 = ssub.s32 %s21, 1
        // Predicated region
        $region65: #{cnn_forward.1} parent=63 // pred_check
          %p445 = pneg %p63
        $region66: #{cnn_forward.1} parent=63 // pred_check_branch
          %447 = sbr.rel (%p445) target = $region68
        $region67: #{cnn_forward.1} parent=63 // pred_region
          %449 = dma.done [#allocation8], 1536
        $region68: #{cnn_forward.1} parent=63 // pred_fallthru
          _
        // Predicated region
        $region69: #{cnn_forward.1} parent=63 // pred_check
          %p450 = pneg %p84
        $region70: #{cnn_forward.1} parent=63 // pred_check_branch
          %452 = sbr.rel (%p450) target = $region72
        $region71: #{cnn_forward.1} parent=63 // pred_region
          %454 = dma.done [#allocation10], 32
        $region72: #{cnn_forward.1} parent=63 // pred_fallthru
          _
        // Predicated region
        $region73: #{cnn_forward.1} parent=63 // pred_check
          %p455 = pneg %p105
        $region74: #{cnn_forward.1} parent=63 // pred_check_branch
          %457 = sbr.rel (%p455) target = $region76
        $region75: #{cnn_forward.1} parent=63 // pred_region
          %459 = dma.done [#allocation10], 11520
        $region76: #{cnn_forward.1} parent=63 // pred_fallthru
          _
        // Predicated region
        $region77: #{cnn_forward.1} parent=63 // pred_check
          %p460 = pneg %p126
        $region78: #{cnn_forward.1} parent=63 // pred_check_branch
          %462 = sbr.rel (%p460) target = $region80
        $region79: #{cnn_forward.1} parent=63 // pred_region
          %464 = dma.done [#allocation13], 48
        $region80: #{cnn_forward.1} parent=63 // pred_fallthru
          _
        // Predicated region
        $region81: #{cnn_forward.1} parent=63 // pred_check
          %p465 = pneg %p147
        $region82: #{cnn_forward.1} parent=63 // pred_check_branch
          %467 = sbr.rel (%p465) target = $region84
        $region83: #{cnn_forward.1} parent=63 // pred_region
          %469 = dma.done [#allocation13], 38400
        $region84: #{cnn_forward.1} parent=63 // pred_fallthru
          _
        // Predicated region
        $region85: #{cnn_forward.1} parent=63 // pred_check
          %p470 = pneg %p168
        $region86: #{cnn_forward.1} parent=63 // pred_check_branch
          %472 = sbr.rel (%p470) target = $region88
        $region87: #{cnn_forward.1} parent=63 // pred_region
          %474 = dma.done [#allocation16], 80
        $region88: #{cnn_forward.1} parent=63 // pred_fallthru
          _
        %s475 = sand.u32 %s26, 1
        %s476 = scalar_lea.sflag [#allocation8], %s475
        %s477 = sand.u32 %s181, 1
        %s478 = smul.addr %s477, 1280
        %s479 = scalar_lea.vmem [#allocation17], %s478
        // Predicated region
        $region89: #{cnn_forward.1} parent=63 // pred_check
          %p480 = pneg %p194
        $region90: #{cnn_forward.1} parent=63 // pred_check_branch
          %482 = sbr.rel (%p480) target = $region92
        $region91: #{cnn_forward.1} parent=63 // pred_region
          %484 = dma.done %s476, 20480
        $region92: #{cnn_forward.1} parent=63 // pred_fallthru
          _
        // Predicated region
        $region93: #{cnn_forward.1} parent=63 // pred_check
          %p485 = pneg %p215
        $region94: #{cnn_forward.1} parent=63 // pred_check_branch
          %487 = sbr.rel (%p485) target = $region96
        $region95: #{cnn_forward.1} parent=63 // pred_region
          %489 = dma.done [#allocation10], 64
        $region96: #{cnn_forward.1} parent=63 // pred_fallthru
          _
        // Predicated region
        $region97: #{cnn_forward.1} parent=63 // pred_check
          %p490 = pneg %p236
        $region98: #{cnn_forward.1} parent=63 // pred_check_branch
          %492 = sbr.rel (%p490) target = $region100
        $region99: #{cnn_forward.1} parent=63 // pred_region
          %494 = dma.done [#allocation13], 4096
        $region100: #{cnn_forward.1} parent=63 // pred_fallthru
          _
        // Predicated region
        $region101: #{cnn_forward.1} parent=63 // pred_check
          %p495 = pneg %p257
        $region102: #{cnn_forward.1} parent=63 // pred_check_branch
          %497 = sbr.rel (%p495) target = $region104
        $region103: #{cnn_forward.1} parent=63 // pred_region
          %499 = dma.done [#allocation16], 16
        $region104: #{cnn_forward.1} parent=63 // pred_fallthru
          _
        %p500 = pneg %p42
        %p501 = pneg %p39
        %p502 = pneg %p63
        %p503 = pneg %p60
        %p504 = pneg %p84
        %p505 = pneg %p81
        %p506 = pneg %p105
        %p507 = pneg %p102
        %p508 = pneg %p126
        %p509 = pneg %p123
        %p510 = pneg %p147
        %p511 = pneg %p144
        %p512 = pneg %p168
        %p513 = pneg %p165
        %s514 = sand.u32 %s26, 1
        %s515 = scalar_lea.sflag [#allocation8], %s514
        %s516 = sand.u32 %s181, 1
        %s517 = smul.addr %s516, 1280
        %s518 = scalar_lea.vmem [#allocation17], %s517
        %p519 = pneg %p194
        %p520 = pneg %p191
        %p521 = pneg %p215
        %p522 = pneg %p212
        %p523 = pneg %p236
        %p524 = pneg %p233
        %p525 = pneg %p257
        %p526 = pneg %p254
        %p527 = pneg %p278
        %p528 = pneg %p275
        %p530 = scmp.eq.s32.totalorder %s26, 0
        // Predicated region
        $region105: #{cnn_forward.1} parent=63 // pred_check
          %p531 = pneg %p530
        $region106: #{cnn_forward.1} parent=63 // pred_check_branch
          %533 = sbr.rel (%p531) target = $region108
        $region107: #{cnn_forward.1} parent=63 // pred_region
          %v534 = vld [vmem:[%s0] sm:$0xff]
          %v535 = vld [vmem:[%s0 + $0x8] sm:$0xff]
          %v536 = vld [vmem:[%s0 + $0x10] sm:$0xf]
          %vm537 = vcmask 238592
          %538 = vst.msk [vmem:[#allocation2] sm:$0x3] %vm537, 0.0
          %539 = vst.msk [vmem:[#allocation2 + $0x16] sm:$0x3] %vm537, 0.0
          %vm540 = vcmask 244736
          %541 = vst.msk [vmem:[#allocation2 + $0x2] sm:$0xff] %vm540, %v534
          %542 = vst.msk [vmem:[#allocation2 + $0xa] sm:$0xff] %vm540, %v535
          %vm543 = vcmask 240640
          %544 = vst.msk [vmem:[#allocation2 + $0x12] sm:$0xf] %vm543, %v536
          %v545 = vld [vmem:[#allocation2] sm:$0xff]
          %v546 = vld [vmem:[#allocation2 + $0x8] sm:$0xff]
          %v547 = vld [vmem:[#allocation2 + $0x10] sm:$0xf]
          %v548 = vpack.c.bf16 %v546, %v545
          %v549 = vpack.c.bf16 %v547, %v547
          %v550 = vld [vmem:[#allocation7] sm:$0xff]
          %v551 = vld [vmem:[#allocation7 + $0x8] sm:$0xff]
          %v552 = vld [vmem:[#allocation7 + $0x10] sm:$0xff]
          %v553 = vld [vmem:[#allocation7 + $0x18] sm:$0x77]
          %v554 = vld [vmem:[#allocation2 + $0x2] sm:$0xff]
          %v555 = vld [vmem:[#allocation2 + $0xa] sm:$0xff]
          %v556 = vld [vmem:[#allocation2 + $0x12] sm:$0xf]
          %v557 = vpack.c.bf16 %v555, %v554
          %v558 = vpack.c.bf16 %v556, %v556
          %s559 = scalar_lea.vmem [#allocation7], 32
          %v560 = vld [vmem:[%s559] sm:$0xff]
          %v561 = vld [vmem:[%s559 + $0x8] sm:$0xff]
          %v562 = vld [vmem:[%s559 + $0x10] sm:$0xff]
          %v563 = vld [vmem:[%s559 + $0x18] sm:$0x77]
          %v568 = vunpack.c.l.b16 %v560
          %v569 = vunpack.c.h.b16 %v560
          %v570 = vunpack.c.l.b16 %v561
          %v571 = vunpack.c.h.b16 %v561
          %v572 = vunpack.c.l.b16 %v562
          %v573 = vunpack.c.h.b16 %v562
          %v574 = vunpack.c.l.b16 %v563
          %v575 = vunpack.c.h.b16 %v563
          %v576 = vpack.c.b16 %v570, %v568
          %v577 = vpack.c.b16 %v571, %v569
          %v578 = vpack.c.b16 %v574, %v572
          %v579 = vpack.c.b16 %v575, %v573
          %v583 = vsel %vm540, %v557, 0
          %v586 = vsel %vm540, %v558, 0
          %vm588 = vcmask 1046528
          %v590 = vsel %vm588, %v578, 0
          %v593 = vsel %vm588, %v579, 0
          %595 = vmatpush.bf16.msra.mxu0 0
          %596 = vmatpush.bf16.msra.mxu0 0
          %597 = vmatpush.bf16.msra.mxu0 0
          %598 = vmatpush.bf16.msra.mxu0 0
          %599 = vmatpush.bf16.msra.mxu0 0
          %600 = vmatpush.bf16.msra.mxu0 0
          %601 = vmatpush.bf16.msra.mxu0 %v590
          %602 = vmatpush.bf16.msra.mxu0 %v576
          %603 = vmatmul.bf16.gmra.mxu0 %v583
          %v604 = vpop.f32.mrf.mxu0
          %v605 = vadd.f32 0.0, %v604
          %v606 = vpop.f32.mrf.mxu0
          %v607 = vadd.f32 0.0, %v606
          %608 = vmatmul.bf16.gmra.mxu0 %v586
          %v609 = vpop.f32.mrf.mxu0
          %v610 = vadd.f32 0.0, %v609
          %v611 = vpop.f32.mrf.mxu0
          %612 = vdwg.mxu0
          %613 = vmatpush.bf16.msra.mxu0 0
          %614 = vmatpush.bf16.msra.mxu0 0
          %615 = vmatpush.bf16.msra.mxu0 0
          %616 = vmatpush.bf16.msra.mxu0 0
          %617 = vmatpush.bf16.msra.mxu0 0
          %618 = vmatpush.bf16.msra.mxu0 0
          %619 = vmatpush.bf16.msra.mxu0 %v593
          %620 = vmatpush.bf16.msra.mxu0 %v577
          %621 = vmatmul.bf16.gmra.mxu0 %v583
          %v622 = vpop.f32.mrf.mxu0
          %v623 = vadd.f32 0.0, %v622
          %v624 = vpop.f32.mrf.mxu0
          %v625 = vadd.f32 0.0, %v624
          %626 = vmatmul.bf16.gmra.mxu0 %v586
          %v627 = vpop.f32.mrf.mxu0
          %v628 = vadd.f32 0.0, %v627
          %v629 = vpop.f32.mrf.mxu0
          %630 = vdwg.mxu0
          %v635 = vunpack.c.l.b16 %v550
          %v636 = vunpack.c.h.b16 %v550
          %v637 = vunpack.c.l.b16 %v551
          %v638 = vunpack.c.h.b16 %v551
          %v639 = vunpack.c.l.b16 %v552
          %v640 = vunpack.c.h.b16 %v552
          %v641 = vunpack.c.l.b16 %v553
          %v642 = vunpack.c.h.b16 %v553
          %v643 = vpack.c.b16 %v637, %v635
          %v644 = vpack.c.b16 %v638, %v636
          %v645 = vpack.c.b16 %v641, %v639
          %v646 = vpack.c.b16 %v642, %v640
          %v650 = vsel %vm540, %v548, 0
          %v653 = vsel %vm540, %v549, 0
          %v656 = vsel %vm588, %v645, 0
          %v659 = vsel %vm588, %v646, 0
          %661 = vmatpush.bf16.msra.mxu0 0
          %662 = vmatpush.bf16.msra.mxu0 0
          %663 = vmatpush.bf16.msra.mxu0 0
          %664 = vmatpush.bf16.msra.mxu0 0
          %665 = vmatpush.bf16.msra.mxu0 0
          %666 = vmatpush.bf16.msra.mxu0 0
          %667 = vmatpush.bf16.msra.mxu0 %v656
          %668 = vmatpush.bf16.msra.mxu0 %v643
          %669 = vmatmul.bf16.gmra.mxu0 %v650
          %v670 = vpop.f32.mrf.mxu0
          %v671 = vadd.f32 %v605, %v670
          %v672 = vpop.f32.mrf.mxu0
          %v673 = vadd.f32 %v607, %v672
          %674 = vmatmul.bf16.gmra.mxu0 %v653
          %v675 = vpop.f32.mrf.mxu0
          %v676 = vadd.f32 %v610, %v675
          %v677 = vpop.f32.mrf.mxu0
          %678 = vdwg.mxu0
          %679 = vmatpush.bf16.msra.mxu0 0
          %680 = vmatpush.bf16.msra.mxu0 0
          %681 = vmatpush.bf16.msra.mxu0 0
          %682 = vmatpush.bf16.msra.mxu0 0
          %683 = vmatpush.bf16.msra.mxu0 0
          %684 = vmatpush.bf16.msra.mxu0 0
          %685 = vmatpush.bf16.msra.mxu0 %v659
          %686 = vmatpush.bf16.msra.mxu0 %v644
          %687 = vmatmul.bf16.gmra.mxu0 %v650
          %v688 = vpop.f32.mrf.mxu0
          %v689 = vadd.f32 %v623, %v688
          %v690 = vpop.f32.mrf.mxu0
          %v691 = vadd.f32 %v625, %v690
          %692 = vmatmul.bf16.gmra.mxu0 %v653
          %v693 = vpop.f32.mrf.mxu0
          %v694 = vadd.f32 %v628, %v693
          %v695 = vpop.f32.mrf.mxu0
          %696 = vdwg.mxu0
          %v697 = vld [vmem:[#allocation2 + $0x4] sm:$0xff]
          %v698 = vld [vmem:[#allocation2 + $0xc] sm:$0xff]
          %v699 = vld [vmem:[#allocation2 + $0x14] sm:$0xf]
          %v700 = vpack.c.bf16 %v698, %v697
          %v701 = vpack.c.bf16 %v699, %v699
          %s702 = scalar_lea.vmem [#allocation7], 64
          %v703 = vld [vmem:[%s702] sm:$0xff]
          %v704 = vld [vmem:[%s702 + $0x8] sm:$0xff]
          %v705 = vld [vmem:[%s702 + $0x10] sm:$0xff]
          %v706 = vld [vmem:[%s702 + $0x18] sm:$0x77]
          %v711 = vunpack.c.l.b16 %v703
          %v712 = vunpack.c.h.b16 %v703
          %v713 = vunpack.c.l.b16 %v704
          %v714 = vunpack.c.h.b16 %v704
          %v715 = vunpack.c.l.b16 %v705
          %v716 = vunpack.c.h.b16 %v705
          %v717 = vunpack.c.l.b16 %v706
          %v718 = vunpack.c.h.b16 %v706
          %v719 = vpack.c.b16 %v713, %v711
          %v720 = vpack.c.b16 %v714, %v712
          %v721 = vpack.c.b16 %v717, %v715
          %v722 = vpack.c.b16 %v718, %v716
          %v726 = vsel %vm540, %v700, 0
          %v729 = vsel %vm540, %v701, 0
          %v732 = vsel %vm588, %v721, 0
          %v735 = vsel %vm588, %v722, 0
          %737 = vmatpush.bf16.msra.mxu0 0
          %738 = vmatpush.bf16.msra.mxu0 0
          %739 = vmatpush.bf16.msra.mxu0 0
          %740 = vmatpush.bf16.msra.mxu0 0
          %741 = vmatpush.bf16.msra.mxu0 0
          %742 = vmatpush.bf16.msra.mxu0 0
          %743 = vmatpush.bf16.msra.mxu0 %v732
          %744 = vmatpush.bf16.msra.mxu0 %v719
          %745 = vmatmul.bf16.gmra.mxu0 %v726
          %v746 = vpop.f32.mrf.mxu0
          %v747 = vadd.f32 0.0, %v746
          %v748 = vpop.f32.mrf.mxu0
          %v749 = vadd.f32 0.0, %v748
          %750 = vmatmul.bf16.gmra.mxu0 %v729
          %v751 = vpop.f32.mrf.mxu0
          %v752 = vadd.f32 0.0, %v751
          %v753 = vpop.f32.mrf.mxu0
          %754 = vdwg.mxu0
          %755 = vmatpush.bf16.msra.mxu0 0
          %756 = vmatpush.bf16.msra.mxu0 0
          %757 = vmatpush.bf16.msra.mxu0 0
          %758 = vmatpush.bf16.msra.mxu0 0
          %759 = vmatpush.bf16.msra.mxu0 0
          %760 = vmatpush.bf16.msra.mxu0 0
          %761 = vmatpush.bf16.msra.mxu0 %v735
          %762 = vmatpush.bf16.msra.mxu0 %v720
          %763 = vmatmul.bf16.gmra.mxu0 %v726
          %v764 = vpop.f32.mrf.mxu0
          %v765 = vadd.f32 0.0, %v764
          %v766 = vpop.f32.mrf.mxu0
          %v767 = vadd.f32 0.0, %v766
          %768 = vmatmul.bf16.gmra.mxu0 %v729
          %v769 = vpop.f32.mrf.mxu0
          %v770 = vadd.f32 0.0, %v769
          %v771 = vpop.f32.mrf.mxu0
          %772 = vdwg.mxu0
          %v773 = vadd.f32 %v671, %v747
          %v774 = vadd.f32 %v689, %v765
          %v775 = vadd.f32 %v673, %v749
          %v776 = vadd.f32 %v691, %v767
          %v777 = vadd.f32 %v676, %v752
          %v778 = vadd.f32 %v694, %v770
          %v779 = vld [vmem:[#allocation9] sm:$0x3]
          %v781 = vperm.slane %v779, 0
          %v782 = vperm.slane %v779, 1
          %v785 = vadd.f32 %v773, %v781
          %v786 = vadd.f32 %v774, %v782
          %v787 = vadd.f32 %v775, %v781
          %v788 = vadd.f32 %v776, %v782
          %v789 = vadd.f32 %v777, %v781
          %v790 = vadd.f32 %v778, %v782
          %v791 = vmax.f32 %v785, 0.0
          %v792 = vmax.f32 %v786, 0.0
          %v793 = vmax.f32 %v787, 0.0
          %v794 = vmax.f32 %v788, 0.0
          %v795 = vmax.f32 %v789, 0.0
          %v796 = vmax.f32 %v790, 0.0
          %797 = vst [vmem:[#allocation3] sm:$0x3] 0.0
          %vm798 = vcmask 254976
          %799 = vst.msk [vmem:[#allocation3 + $0x8] sm:$0x3] %vm798, 0.0
          %800 = vst [vmem:[#allocation3 + $0x20] sm:$0xc0] 0.0
          %vm801 = vcmask 261126
          %802 = vst.msk [vmem:[#allocation3 + $0x28] sm:$0xc0] %vm801, 0.0
          %vm809 = vcmask 1041408
          %v810 = vrot.slane %v791, 6
          %v811 = vrot.slane %v792, 6
          %v812 = vrot.slane %v793, 6
          %v813 = vsel %vm809, %v810, %v812
          %v814 = vrot.slane %v794, 6
          %v815 = vsel %vm809, %v811, %v814
          %v816 = vrot.slane %v795, 6
          %v817 = vsel %vm809, %v812, %v816
          %v818 = vrot.slane %v796, 6
          %v819 = vsel %vm809, %v814, %v818
          %826 = vst [vmem:[#allocation3] sm:$0xfc] %v810
          %vm827 = vcmask 261122
          %828 = vst.msk [vmem:[#allocation3 + $0x8] sm:$0xfc] %vm827, %v811
          %829 = vst [vmem:[#allocation3 + $0x10] sm:$0xff] %v813
          %vm830 = vcmask 261120
          %831 = vst.msk [vmem:[#allocation3 + $0x18] sm:$0xff] %vm830, %v815
          %832 = vst [vmem:[#allocation3 + $0x20] sm:$0x3f] %v817
          %vm833 = vcmask 259072
          %834 = vst.msk [vmem:[#allocation3 + $0x28] sm:$0x3f] %vm833, %v819
          %v835 = vld [vmem:[#allocation3] sm:$0xff]
          %v836 = vld [vmem:[#allocation3 + $0x8] sm:$0xff]
          %v837 = vld [vmem:[#allocation3 + $0x10] sm:$0xff]
          %v838 = vld [vmem:[#allocation3 + $0x18] sm:$0xff]
          %v839 = vld [vmem:[#allocation3 + $0x20] sm:$0xf]
          %v840 = vld [vmem:[#allocation3 + $0x28] sm:$0xf]
          %v841 = vpack.c.bf16 %v837, %v835
          %v842 = vpack.c.bf16 %v838, %v836
          %v843 = vpack.c.bf16 %v839, %v839
          %v844 = vpack.c.bf16 %v840, %v840
          %v845 = vld [vmem:[#allocation11] sm:$0xff]
          %v846 = vld [vmem:[#allocation11 + $0x8] sm:$0xf]
          %v847 = vld [vmem:[#allocation11 + $0xc] sm:$0xff]
          %v848 = vld [vmem:[#allocation11 + $0x14] sm:$0xf]
          %v849 = vld [vmem:[#allocation11 + $0x18] sm:$0xff]
          %v850 = vld [vmem:[#allocation11 + $0x20] sm:$0xf]
          %v851 = vld [vmem:[#allocation11 + $0x24] sm:$0xff]
          %v852 = vld [vmem:[#allocation11 + $0x2c] sm:$0xf]
          %v853 = vld [vmem:[#allocation11 + $0x30] sm:$0xff]
          %v854 = vld [vmem:[#allocation11 + $0x38] sm:$0xf]
          %v855 = vld [vmem:[#allocation11 + $0x3c] sm:$0xff]
          %v856 = vld [vmem:[#allocation11 + $0x44] sm:$0xf]
          %v857 = vld [vmem:[#allocation11 + $0x48] sm:$0xff]
          %v858 = vld [vmem:[#allocation11 + $0x50] sm:$0xf]
          %v859 = vld [vmem:[#allocation11 + $0x54] sm:$0xff]
          %v860 = vld [vmem:[#allocation11 + $0x5c] sm:$0xf]
          %v861 = vld [vmem:[#allocation11 + $0x60] sm:$0xff]
          %v862 = vld [vmem:[#allocation11 + $0x68] sm:$0xf]
          %v863 = vld [vmem:[#allocation11 + $0x6c] sm:$0xff]
          %v864 = vld [vmem:[#allocation11 + $0x74] sm:$0xf]
          %v865 = vld [vmem:[#allocation11 + $0x78] sm:$0xff]
          %v866 = vld [vmem:[#allocation11 + $0x80] sm:$0xf]
          %v867 = vld [vmem:[#allocation11 + $0x84] sm:$0xff]
          %v868 = vld [vmem:[#allocation11 + $0x8c] sm:$0xf]
          %v869 = vld [vmem:[#allocation11 + $0x90] sm:$0xff]
          %v870 = vld [vmem:[#allocation11 + $0x98] sm:$0xf]
          %v871 = vld [vmem:[#allocation11 + $0x9c] sm:$0xff]
          %v872 = vld [vmem:[#allocation11 + $0xa4] sm:$0xf]
          %v873 = vld [vmem:[#allocation11 + $0xa8] sm:$0xff]
          %v874 = vld [vmem:[#allocation11 + $0xb0] sm:$0xf]
          %v875 = vld [vmem:[#allocation11 + $0xb4] sm:$0xff]
          %v876 = vld [vmem:[#allocation11 + $0xbc] sm:$0xf]
          %v877 = vld [vmem:[#allocation11 + $0xc0] sm:$0xff]
          %v878 = vld [vmem:[#allocation11 + $0xc8] sm:$0xf]
          %v879 = vld [vmem:[#allocation11 + $0xcc] sm:$0xff]
          %v880 = vld [vmem:[#allocation11 + $0xd4] sm:$0xf]
          %v881 = vld [vmem:[#allocation11 + $0xd8] sm:$0xff]
          %v882 = vld [vmem:[#allocation11 + $0xe0] sm:$0xf]
          %v883 = vld [vmem:[#allocation11 + $0xe4] sm:$0xff]
          %v884 = vld [vmem:[#allocation11 + $0xec] sm:$0xf]
          %v885 = vld [vmem:[#allocation3] sm:$0xfc]
          %v886 = vld [vmem:[#allocation3 + $0x8] sm:$0xfc]
          %v887 = vld [vmem:[#allocation3 + $0x20] sm:$0x3f]
          %v888 = vld [vmem:[#allocation3 + $0x28] sm:$0x3f]
          %v889 = vpack.c.bf16 %v837, %v885
          %v890 = vpack.c.bf16 %v838, %v886
          %v891 = vpack.c.bf16 %v887, %v887
          %v892 = vpack.c.bf16 %v888, %v888
          %s893 = scalar_lea.vmem [#allocation11], 240
          %v894 = vld [vmem:[%s893] sm:$0xff]
          %v895 = vld [vmem:[%s893 + $0x8] sm:$0xf]
          %v896 = vld [vmem:[%s893 + $0xc] sm:$0xff]
          %v897 = vld [vmem:[%s893 + $0x14] sm:$0xf]
          %v898 = vld [vmem:[%s893 + $0x18] sm:$0xff]
          %v899 = vld [vmem:[%s893 + $0x20] sm:$0xf]
          %v900 = vld [vmem:[%s893 + $0x24] sm:$0xff]
          %v901 = vld [vmem:[%s893 + $0x2c] sm:$0xf]
          %v902 = vld [vmem:[%s893 + $0x30] sm:$0xff]
          %v903 = vld [vmem:[%s893 + $0x38] sm:$0xf]
          %v904 = vld [vmem:[%s893 + $0x3c] sm:$0xff]
          %v905 = vld [vmem:[%s893 + $0x44] sm:$0xf]
          %v906 = vld [vmem:[%s893 + $0x48] sm:$0xff]
          %v907 = vld [vmem:[%s893 + $0x50] sm:$0xf]
          %v908 = vld [vmem:[%s893 + $0x54] sm:$0xff]
          %v909 = vld [vmem:[%s893 + $0x5c] sm:$0xf]
          %v910 = vld [vmem:[%s893 + $0x60] sm:$0xff]
          %v911 = vld [vmem:[%s893 + $0x68] sm:$0xf]
          %v912 = vld [vmem:[%s893 + $0x6c] sm:$0xff]
          %v913 = vld [vmem:[%s893 + $0x74] sm:$0xf]
          %v914 = vld [vmem:[%s893 + $0x78] sm:$0xff]
          %v915 = vld [vmem:[%s893 + $0x80] sm:$0xf]
          %v916 = vld [vmem:[%s893 + $0x84] sm:$0xff]
          %v917 = vld [vmem:[%s893 + $0x8c] sm:$0xf]
          %v918 = vld [vmem:[%s893 + $0x90] sm:$0xff]
          %v919 = vld [vmem:[%s893 + $0x98] sm:$0xf]
          %v920 = vld [vmem:[%s893 + $0x9c] sm:$0xff]
          %v921 = vld [vmem:[%s893 + $0xa4] sm:$0xf]
          %v922 = vld [vmem:[%s893 + $0xa8] sm:$0xff]
          %v923 = vld [vmem:[%s893 + $0xb0] sm:$0xf]
          %v924 = vld [vmem:[%s893 + $0xb4] sm:$0xff]
          %v925 = vld [vmem:[%s893 + $0xbc] sm:$0xf]
          %v926 = vld [vmem:[%s893 + $0xc0] sm:$0xff]
          %v927 = vld [vmem:[%s893 + $0xc8] sm:$0xf]
          %v928 = vld [vmem:[%s893 + $0xcc] sm:$0xff]
          %v929 = vld [vmem:[%s893 + $0xd4] sm:$0xf]
          %v930 = vld [vmem:[%s893 + $0xd8] sm:$0xff]
          %v931 = vld [vmem:[%s893 + $0xe0] sm:$0xf]
          %v932 = vld [vmem:[%s893 + $0xe4] sm:$0xff]
          %v933 = vld [vmem:[%s893 + $0xec] sm:$0xf]
          %vm938 = vcmask 1046528
          %v939 = vrot.slane %v889, 1
          %v940 = vrot.slane %v891, 1
          %v941 = vsel %vm938, %v939, %v940
          %v942 = vrot.slane %v890, 1
          %v943 = vrot.slane %v892, 1
          %v944 = vsel %vm938, %v942, %v943
          %v987 = vunpack.c.l.b16 %v894
          %v988 = vunpack.c.h.b16 %v894
          %v989 = vunpack.c.l.b16 %v895
          %v990 = vunpack.c.l.b16 %v896
          %v991 = vunpack.c.h.b16 %v896
          %v992 = vunpack.c.l.b16 %v897
          %v993 = vunpack.c.l.b16 %v898
          %v994 = vunpack.c.h.b16 %v898
          %v995 = vunpack.c.l.b16 %v899
          %v996 = vunpack.c.l.b16 %v900
          %v997 = vunpack.c.h.b16 %v900
          %v998 = vunpack.c.l.b16 %v901
          %v999 = vunpack.c.l.b16 %v902
          %v1000 = vunpack.c.h.b16 %v902
          %v1001 = vunpack.c.l.b16 %v903
          %v1002 = vunpack.c.l.b16 %v904
          %v1003 = vunpack.c.h.b16 %v904
          %v1004 = vunpack.c.l.b16 %v905
          %v1005 = vunpack.c.l.b16 %v906
          %v1006 = vunpack.c.h.b16 %v906
          %v1007 = vunpack.c.l.b16 %v907
          %v1008 = vunpack.c.l.b16 %v908
          %v1009 = vunpack.c.h.b16 %v908
          %v1010 = vunpack.c.l.b16 %v909
          %v1011 = vunpack.c.l.b16 %v910
          %v1012 = vunpack.c.h.b16 %v910
          %v1013 = vunpack.c.l.b16 %v911
          %v1014 = vunpack.c.l.b16 %v912
          %v1015 = vunpack.c.h.b16 %v912
          %v1016 = vunpack.c.l.b16 %v913
          %v1017 = vunpack.c.l.b16 %v914
          %v1018 = vunpack.c.h.b16 %v914
          %v1019 = vunpack.c.l.b16 %v915
          %v1020 = vunpack.c.l.b16 %v916
          %v1021 = vunpack.c.h.b16 %v916
          %v1022 = vunpack.c.l.b16 %v917
          %v1023 = vunpack.c.l.b16 %v918
          %v1024 = vunpack.c.h.b16 %v918
          %v1025 = vunpack.c.l.b16 %v919
          %v1026 = vunpack.c.l.b16 %v920
          %v1027 = vunpack.c.h.b16 %v920
          %v1028 = vunpack.c.l.b16 %v921
          %v1029 = vunpack.c.l.b16 %v922
          %v1030 = vunpack.c.h.b16 %v922
          %v1031 = vunpack.c.l.b16 %v923
          %v1032 = vunpack.c.l.b16 %v924
          %v1033 = vunpack.c.h.b16 %v924
          %v1034 = vunpack.c.l.b16 %v925
          %v1035 = vunpack.c.l.b16 %v926
          %v1036 = vunpack.c.h.b16 %v926
          %v1037 = vunpack.c.l.b16 %v927
          %v1038 = vunpack.c.l.b16 %v928
          %v1039 = vunpack.c.h.b16 %v928
          %v1040 = vunpack.c.l.b16 %v929
          %v1041 = vunpack.c.l.b16 %v930
          %v1042 = vunpack.c.h.b16 %v930
          %v1043 = vunpack.c.l.b16 %v931
          %v1044 = vunpack.c.l.b16 %v932
          %v1045 = vunpack.c.h.b16 %v932
          %v1046 = vunpack.c.l.b16 %v933
          %v1047 = vpack.c.b16 %v990, %v987
          %v1048 = vpack.c.b16 %v991, %v988
          %v1049 = vpack.c.b16 %v992, %v989
          %v1050 = vpack.c.b16 %v996, %v993
          %v1051 = vpack.c.b16 %v997, %v994
          %v1052 = vpack.c.b16 %v998, %v995
          %v1053 = vpack.c.b16 %v1002, %v999
          %v1054 = vpack.c.b16 %v1003, %v1000
          %v1055 = vpack.c.b16 %v1004, %v1001
          %v1056 = vpack.c.b16 %v1008, %v1005
          %v1057 = vpack.c.b16 %v1009, %v1006
          %v1058 = vpack.c.b16 %v1010, %v1007
          %v1059 = vpack.c.b16 %v1014, %v1011
          %v1060 = vpack.c.b16 %v1015, %v1012
          %v1061 = vpack.c.b16 %v1016, %v1013
          %v1062 = vpack.c.b16 %v1020, %v1017
          %v1063 = vpack.c.b16 %v1021, %v1018
          %v1064 = vpack.c.b16 %v1022, %v1019
          %v1065 = vpack.c.b16 %v1026, %v1023
          %v1066 = vpack.c.b16 %v1027, %v1024
          %v1067 = vpack.c.b16 %v1028, %v1025
          %v1068 = vpack.c.b16 %v1032, %v1029
          %v1069 = vpack.c.b16 %v1033, %v1030
          %v1070 = vpack.c.b16 %v1034, %v1031
          %v1071 = vpack.c.b16 %v1038, %v1035
          %v1072 = vpack.c.b16 %v1039, %v1036
          %v1073 = vpack.c.b16 %v1040, %v1037
          %v1074 = vpack.c.b16 %v1044, %v1041
          %v1075 = vpack.c.b16 %v1045, %v1042
          %v1076 = vpack.c.b16 %v1046, %v1043
          %v1108 = vsel %vm830, %v944, 0
          %v1111 = vsel %vm830, %v943, 0
          %1113 = vmatpush.bf16.msra.mxu0 %v1068
          %1114 = vmatpush.bf16.msra.mxu0 %v1065
          %1115 = vmatpush.bf16.msra.mxu0 %v1062
          %1116 = vmatpush.bf16.msra.mxu0 %v1059
          %1117 = vmatpush.bf16.msra.mxu0 %v1056
          %1118 = vmatpush.bf16.msra.mxu0 %v1053
          %1119 = vmatpush.bf16.msra.mxu0 %v1050
          %1120 = vmatpush.bf16.msra.mxu0 %v1047
          %1121 = vmatmul.bf16.gmra.mxu0 %v941
          %v1122 = vpop.f32.mrf.mxu0
          %v1123 = vadd.f32 0.0, %v1122
          %v1124 = vpop.f32.mrf.mxu0
          %v1125 = vadd.f32 0.0, %v1124
          %1126 = vmatmul.bf16.gmra.mxu0 %v940
          %v1127 = vpop.f32.mrf.mxu0
          %v1128 = vadd.f32 0.0, %v1127
          %v1129 = vpop.f32.mrf.mxu0
          %1130 = vdwg.mxu0
          %1131 = vmatpush.bf16.msra.mxu0 0
          %1132 = vmatpush.bf16.msra.mxu0 0
          %1133 = vmatpush.bf16.msra.mxu0 0
          %1134 = vmatpush.bf16.msra.mxu0 0
          %1135 = vmatpush.bf16.msra.mxu0 0
          %1136 = vmatpush.bf16.msra.mxu0 0
          %1137 = vmatpush.bf16.msra.mxu0 %v1074
          %1138 = vmatpush.bf16.msra.mxu0 %v1071
          %1139 = vmatmul.bf16.gmra.mxu0 %v1108
          %v1140 = vpop.f32.mrf.mxu0
          %v1141 = vadd.f32 %v1123, %v1140
          %v1142 = vpop.f32.mrf.mxu0
          %v1143 = vadd.f32 %v1125, %v1142
          %1144 = vmatmul.bf16.gmra.mxu0 %v1111
          %v1145 = vpop.f32.mrf.mxu0
          %v1146 = vadd.f32 %v1128, %v1145
          %v1147 = vpop.f32.mrf.mxu0
          %1148 = vdwg.mxu0
          %1149 = vmatpush.bf16.msra.mxu0 %v1069
          %1150 = vmatpush.bf16.msra.mxu0 %v1066
          %1151 = vmatpush.bf16.msra.mxu0 %v1063
          %1152 = vmatpush.bf16.msra.mxu0 %v1060
          %1153 = vmatpush.bf16.msra.mxu0 %v1057
          %1154 = vmatpush.bf16.msra.mxu0 %v1054
          %1155 = vmatpush.bf16.msra.mxu0 %v1051
          %1156 = vmatpush.bf16.msra.mxu0 %v1048
          %1157 = vmatmul.bf16.gmra.mxu0 %v941
          %v1158 = vpop.f32.mrf.mxu0
          %v1159 = vadd.f32 0.0, %v1158
          %v1160 = vpop.f32.mrf.mxu0
          %v1161 = vadd.f32 0.0, %v1160
          %1162 = vmatmul.bf16.gmra.mxu0 %v940
          %v1163 = vpop.f32.mrf.mxu0
          %v1164 = vadd.f32 0.0, %v1163
          %v1165 = vpop.f32.mrf.mxu0
          %1166 = vdwg.mxu0
          %1167 = vmatpush.bf16.msra.mxu0 0
          %1168 = vmatpush.bf16.msra.mxu0 0
          %1169 = vmatpush.bf16.msra.mxu0 0
          %1170 = vmatpush.bf16.msra.mxu0 0
          %1171 = vmatpush.bf16.msra.mxu0 0
          %1172 = vmatpush.bf16.msra.mxu0 0
          %1173 = vmatpush.bf16.msra.mxu0 %v1075
          %1174 = vmatpush.bf16.msra.mxu0 %v1072
          %1175 = vmatmul.bf16.gmra.mxu0 %v1108
          %v1176 = vpop.f32.mrf.mxu0
          %v1177 = vadd.f32 %v1159, %v1176
          %v1178 = vpop.f32.mrf.mxu0
          %v1179 = vadd.f32 %v1161, %v1178
          %1180 = vmatmul.bf16.gmra.mxu0 %v1111
          %v1181 = vpop.f32.mrf.mxu0
          %v1182 = vadd.f32 %v1164, %v1181
          %v1183 = vpop.f32.mrf.mxu0
          %1184 = vdwg.mxu0
          %1185 = vmatpush.bf16.msra.mxu0 %v1070
          %1186 = vmatpush.bf16.msra.mxu0 %v1067
          %1187 = vmatpush.bf16.msra.mxu0 %v1064
          %1188 = vmatpush.bf16.msra.mxu0 %v1061
          %1189 = vmatpush.bf16.msra.mxu0 %v1058
          %1190 = vmatpush.bf16.msra.mxu0 %v1055
          %1191 = vmatpush.bf16.msra.mxu0 %v1052
          %1192 = vmatpush.bf16.msra.mxu0 %v1049
          %1193 = vmatmul.bf16.gmra.mxu0 %v941
          %v1194 = vpop.f32.mrf.mxu0
          %v1195 = vadd.f32 0.0, %v1194
          %v1196 = vpop.f32.mrf.mxu0
          %v1197 = vadd.f32 0.0, %v1196
          %1198 = vmatmul.bf16.gmra.mxu0 %v940
          %v1199 = vpop.f32.mrf.mxu0
          %v1200 = vadd.f32 0.0, %v1199
          %v1201 = vpop.f32.mrf.mxu0
          %1202 = vdwg.mxu0
          %1203 = vmatpush.bf16.msra.mxu0 0
          %1204 = vmatpush.bf16.msra.mxu0 0
          %1205 = vmatpush.bf16.msra.mxu0 0
          %1206 = vmatpush.bf16.msra.mxu0 0
          %1207 = vmatpush.bf16.msra.mxu0 0
          %1208 = vmatpush.bf16.msra.mxu0 0
          %1209 = vmatpush.bf16.msra.mxu0 %v1076
          %1210 = vmatpush.bf16.msra.mxu0 %v1073
          %1211 = vmatmul.bf16.gmra.mxu0 %v1108
          %v1212 = vpop.f32.mrf.mxu0
          %v1213 = vadd.f32 %v1195, %v1212
          %v1214 = vpop.f32.mrf.mxu0
          %v1215 = vadd.f32 %v1197, %v1214
          %1216 = vmatmul.bf16.gmra.mxu0 %v1111
          %v1217 = vpop.f32.mrf.mxu0
          %v1218 = vadd.f32 %v1200, %v1217
          %v1219 = vpop.f32.mrf.mxu0
          %1220 = vdwg.mxu0
          %v1261 = vunpack.c.l.b16 %v845
          %v1262 = vunpack.c.h.b16 %v845
          %v1263 = vunpack.c.l.b16 %v846
          %v1264 = vunpack.c.l.b16 %v847
          %v1265 = vunpack.c.h.b16 %v847
          %v1266 = vunpack.c.l.b16 %v848
          %v1267 = vunpack.c.l.b16 %v849
          %v1268 = vunpack.c.h.b16 %v849
          %v1269 = vunpack.c.l.b16 %v850
          %v1270 = vunpack.c.l.b16 %v851
          %v1271 = vunpack.c.h.b16 %v851
          %v1272 = vunpack.c.l.b16 %v852
          %v1273 = vunpack.c.l.b16 %v853
          %v1274 = vunpack.c.h.b16 %v853
          %v1275 = vunpack.c.l.b16 %v854
          %v1276 = vunpack.c.l.b16 %v855
          %v1277 = vunpack.c.h.b16 %v855
          %v1278 = vunpack.c.l.b16 %v856
          %v1279 = vunpack.c.l.b16 %v857
          %v1280 = vunpack.c.h.b16 %v857
          %v1281 = vunpack.c.l.b16 %v858
          %v1282 = vunpack.c.l.b16 %v859
          %v1283 = vunpack.c.h.b16 %v859
          %v1284 = vunpack.c.l.b16 %v860
          %v1285 = vunpack.c.l.b16 %v861
          %v1286 = vunpack.c.h.b16 %v861
          %v1287 = vunpack.c.l.b16 %v862
          %v1288 = vunpack.c.l.b16 %v863
          %v1289 = vunpack.c.h.b16 %v863
          %v1290 = vunpack.c.l.b16 %v864
          %v1291 = vunpack.c.l.b16 %v865
          %v1292 = vunpack.c.h.b16 %v865
          %v1293 = vunpack.c.l.b16 %v866
          %v1294 = vunpack.c.l.b16 %v867
          %v1295 = vunpack.c.h.b16 %v867
          %v1296 = vunpack.c.l.b16 %v868
          %v1297 = vunpack.c.l.b16 %v869
          %v1298 = vunpack.c.h.b16 %v869
          %v1299 = vunpack.c.l.b16 %v870
          %v1300 = vunpack.c.l.b16 %v871
          %v1301 = vunpack.c.h.b16 %v871
          %v1302 = vunpack.c.l.b16 %v872
          %v1303 = vunpack.c.l.b16 %v873
          %v1304 = vunpack.c.h.b16 %v873
          %v1305 = vunpack.c.l.b16 %v874
          %v1306 = vunpack.c.l.b16 %v875
          %v1307 = vunpack.c.h.b16 %v875
          %v1308 = vunpack.c.l.b16 %v876
          %v1309 = vunpack.c.l.b16 %v877
          %v1310 = vunpack.c.h.b16 %v877
          %v1311 = vunpack.c.l.b16 %v878
          %v1312 = vunpack.c.l.b16 %v879
          %v1313 = vunpack.c.h.b16 %v879
          %v1314 = vunpack.c.l.b16 %v880
          %v1315 = vunpack.c.l.b16 %v881
          %v1316 = vunpack.c.h.b16 %v881
          %v1317 = vunpack.c.l.b16 %v882
          %v1318 = vunpack.c.l.b16 %v883
          %v1319 = vunpack.c.h.b16 %v883
          %v1320 = vunpack.c.l.b16 %v884
          %v1321 = vpack.c.b16 %v1264, %v1261
          %v1322 = vpack.c.b16 %v1265, %v1262
          %v1323 = vpack.c.b16 %v1266, %v1263
          %v1324 = vpack.c.b16 %v1270, %v1267
          %v1325 = vpack.c.b16 %v1271, %v1268
          %v1326 = vpack.c.b16 %v1272, %v1269
          %v1327 = vpack.c.b16 %v1276, %v1273
          %v1328 = vpack.c.b16 %v1277, %v1274
          %v1329 = vpack.c.b16 %v1278, %v1275
          %v1330 = vpack.c.b16 %v1282, %v1279
          %v1331 = vpack.c.b16 %v1283, %v1280
          %v1332 = vpack.c.b16 %v1284, %v1281
          %v1333 = vpack.c.b16 %v1288, %v1285
          %v1334 = vpack.c.b16 %v1289, %v1286
          %v1335 = vpack.c.b16 %v1290, %v1287
          %v1336 = vpack.c.b16 %v1294, %v1291
          %v1337 = vpack.c.b16 %v1295, %v1292
          %v1338 = vpack.c.b16 %v1296, %v1293
          %v1339 = vpack.c.b16 %v1300, %v1297
          %v1340 = vpack.c.b16 %v1301, %v1298
          %v1341 = vpack.c.b16 %v1302, %v1299
          %v1342 = vpack.c.b16 %v1306, %v1303
          %v1343 = vpack.c.b16 %v1307, %v1304
          %v1344 = vpack.c.b16 %v1308, %v1305
          %v1345 = vpack.c.b16 %v1312, %v1309
          %v1346 = vpack.c.b16 %v1313, %v1310
          %v1347 = vpack.c.b16 %v1314, %v1311
          %v1348 = vpack.c.b16 %v1318, %v1315
          %v1349 = vpack.c.b16 %v1319, %v1316
          %v1350 = vpack.c.b16 %v1320, %v1317
          %v1382 = vsel %vm830, %v842, 0
          %v1385 = vsel %vm830, %v844, 0
          %1387 = vmatpush.bf16.msra.mxu0 %v1342
          %1388 = vmatpush.bf16.msra.mxu0 %v1339
          %1389 = vmatpush.bf16.msra.mxu0 %v1336
          %1390 = vmatpush.bf16.msra.mxu0 %v1333
          %1391 = vmatpush.bf16.msra.mxu0 %v1330
          %1392 = vmatpush.bf16.msra.mxu0 %v1327
          %1393 = vmatpush.bf16.msra.mxu0 %v1324
          %1394 = vmatpush.bf16.msra.mxu0 %v1321
          %1395 = vmatmul.bf16.gmra.mxu0 %v841
          %v1396 = vpop.f32.mrf.mxu0
          %v1397 = vadd.f32 %v1141, %v1396
          %v1398 = vpop.f32.mrf.mxu0
          %v1399 = vadd.f32 %v1143, %v1398
          %1400 = vmatmul.bf16.gmra.mxu0 %v843
          %v1401 = vpop.f32.mrf.mxu0
          %v1402 = vadd.f32 %v1146, %v1401
          %v1403 = vpop.f32.mrf.mxu0
          %1404 = vdwg.mxu0
          %1405 = vmatpush.bf16.msra.mxu0 0
          %1406 = vmatpush.bf16.msra.mxu0 0
          %1407 = vmatpush.bf16.msra.mxu0 0
          %1408 = vmatpush.bf16.msra.mxu0 0
          %1409 = vmatpush.bf16.msra.mxu0 0
          %1410 = vmatpush.bf16.msra.mxu0 0
          %1411 = vmatpush.bf16.msra.mxu0 %v1348
          %1412 = vmatpush.bf16.msra.mxu0 %v1345
          %1413 = vmatmul.bf16.gmra.mxu0 %v1382
          %v1414 = vpop.f32.mrf.mxu0
          %v1415 = vadd.f32 %v1397, %v1414
          %v1416 = vpop.f32.mrf.mxu0
          %v1417 = vadd.f32 %v1399, %v1416
          %1418 = vmatmul.bf16.gmra.mxu0 %v1385
          %v1419 = vpop.f32.mrf.mxu0
          %v1420 = vadd.f32 %v1402, %v1419
          %v1421 = vpop.f32.mrf.mxu0
          %1422 = vdwg.mxu0
          %1423 = vmatpush.bf16.msra.mxu0 %v1343
          %1424 = vmatpush.bf16.msra.mxu0 %v1340
          %1425 = vmatpush.bf16.msra.mxu0 %v1337
          %1426 = vmatpush.bf16.msra.mxu0 %v1334
          %1427 = vmatpush.bf16.msra.mxu0 %v1331
          %1428 = vmatpush.bf16.msra.mxu0 %v1328
          %1429 = vmatpush.bf16.msra.mxu0 %v1325
          %1430 = vmatpush.bf16.msra.mxu0 %v1322
          %1431 = vmatmul.bf16.gmra.mxu0 %v841
          %v1432 = vpop.f32.mrf.mxu0
          %v1433 = vadd.f32 %v1177, %v1432
          %v1434 = vpop.f32.mrf.mxu0
          %v1435 = vadd.f32 %v1179, %v1434
          %1436 = vmatmul.bf16.gmra.mxu0 %v843
          %v1437 = vpop.f32.mrf.mxu0
          %v1438 = vadd.f32 %v1182, %v1437
          %v1439 = vpop.f32.mrf.mxu0
          %1440 = vdwg.mxu0
          %1441 = vmatpush.bf16.msra.mxu0 0
          %1442 = vmatpush.bf16.msra.mxu0 0
          %1443 = vmatpush.bf16.msra.mxu0 0
          %1444 = vmatpush.bf16.msra.mxu0 0
          %1445 = vmatpush.bf16.msra.mxu0 0
          %1446 = vmatpush.bf16.msra.mxu0 0
          %1447 = vmatpush.bf16.msra.mxu0 %v1349
          %1448 = vmatpush.bf16.msra.mxu0 %v1346
          %1449 = vmatmul.bf16.gmra.mxu0 %v1382
          %v1450 = vpop.f32.mrf.mxu0
          %v1451 = vadd.f32 %v1433, %v1450
          %v1452 = vpop.f32.mrf.mxu0
          %v1453 = vadd.f32 %v1435, %v1452
          %1454 = vmatmul.bf16.gmra.mxu0 %v1385
          %v1455 = vpop.f32.mrf.mxu0
          %v1456 = vadd.f32 %v1438, %v1455
          %v1457 = vpop.f32.mrf.mxu0
          %1458 = vdwg.mxu0
          %1459 = vmatpush.bf16.msra.mxu0 %v1344
          %1460 = vmatpush.bf16.msra.mxu0 %v1341
          %1461 = vmatpush.bf16.msra.mxu0 %v1338
          %1462 = vmatpush.bf16.msra.mxu0 %v1335
          %1463 = vmatpush.bf16.msra.mxu0 %v1332
          %1464 = vmatpush.bf16.msra.mxu0 %v1329
          %1465 = vmatpush.bf16.msra.mxu0 %v1326
          %1466 = vmatpush.bf16.msra.mxu0 %v1323
          %1467 = vmatmul.bf16.gmra.mxu0 %v841
          %v1468 = vpop.f32.mrf.mxu0
          %v1469 = vadd.f32 %v1213, %v1468
          %v1470 = vpop.f32.mrf.mxu0
          %v1471 = vadd.f32 %v1215, %v1470
          %1472 = vmatmul.bf16.gmra.mxu0 %v843
          %v1473 = vpop.f32.mrf.mxu0
          %v1474 = vadd.f32 %v1218, %v1473
          %v1475 = vpop.f32.mrf.mxu0
          %1476 = vdwg.mxu0
          %1477 = vmatpush.bf16.msra.mxu0 0
          %1478 = vmatpush.bf16.msra.mxu0 0
          %1479 = vmatpush.bf16.msra.mxu0 0
          %1480 = vmatpush.bf16.msra.mxu0 0
          %1481 = vmatpush.bf16.msra.mxu0 0
          %1482 = vmatpush.bf16.msra.mxu0 0
          %1483 = vmatpush.bf16.msra.mxu0 %v1350
          %1484 = vmatpush.bf16.msra.mxu0 %v1347
          %1485 = vmatmul.bf16.gmra.mxu0 %v1382
          %v1486 = vpop.f32.mrf.mxu0
          %v1487 = vadd.f32 %v1469, %v1486
          %v1488 = vpop.f32.mrf.mxu0
          %v1489 = vadd.f32 %v1471, %v1488
          %1490 = vmatmul.bf16.gmra.mxu0 %v1385
          %v1491 = vpop.f32.mrf.mxu0
          %v1492 = vadd.f32 %v1474, %v1491
          %v1493 = vpop.f32.mrf.mxu0
          %1494 = vdwg.mxu0
          %v1495 = vld [vmem:[#allocation3] sm:$0xf0]
          %v1496 = vld [vmem:[#allocation3 + $0x8] sm:$0xf0]
          %v1497 = vld [vmem:[#allocation3 + $0x20] sm:$0xff]
          %v1498 = vld [vmem:[#allocation3 + $0x28] sm:$0xff]
          %v1499 = vpack.c.bf16 %v837, %v1495
          %v1500 = vpack.c.bf16 %v838, %v1496
          %v1501 = vpack.c.bf16 %v1497, %v1497
          %v1502 = vpack.c.bf16 %v1498, %v1498
          %s1503 = scalar_lea.vmem [#allocation11], 480
          %v1504 = vld [vmem:[%s1503] sm:$0xff]
          %v1505 = vld [vmem:[%s1503 + $0x8] sm:$0xf]
          %v1506 = vld [vmem:[%s1503 + $0xc] sm:$0xff]
          %v1507 = vld [vmem:[%s1503 + $0x14] sm:$0xf]
          %v1508 = vld [vmem:[%s1503 + $0x18] sm:$0xff]
          %v1509 = vld [vmem:[%s1503 + $0x20] sm:$0xf]
          %v1510 = vld [vmem:[%s1503 + $0x24] sm:$0xff]
          %v1511 = vld [vmem:[%s1503 + $0x2c] sm:$0xf]
          %v1512 = vld [vmem:[%s1503 + $0x30] sm:$0xff]
          %v1513 = vld [vmem:[%s1503 + $0x38] sm:$0xf]
          %v1514 = vld [vmem:[%s1503 + $0x3c] sm:$0xff]
          %v1515 = vld [vmem:[%s1503 + $0x44] sm:$0xf]
          %v1516 = vld [vmem:[%s1503 + $0x48] sm:$0xff]
          %v1517 = vld [vmem:[%s1503 + $0x50] sm:$0xf]
          %v1518 = vld [vmem:[%s1503 + $0x54] sm:$0xff]
          %v1519 = vld [vmem:[%s1503 + $0x5c] sm:$0xf]
          %v1520 = vld [vmem:[%s1503 + $0x60] sm:$0xff]
          %v1521 = vld [vmem:[%s1503 + $0x68] sm:$0xf]
          %v1522 = vld [vmem:[%s1503 + $0x6c] sm:$0xff]
          %v1523 = vld [vmem:[%s1503 + $0x74] sm:$0xf]
          %v1524 = vld [vmem:[%s1503 + $0x78] sm:$0xff]
          %v1525 = vld [vmem:[%s1503 + $0x80] sm:$0xf]
          %v1526 = vld [vmem:[%s1503 + $0x84] sm:$0xff]
          %v1527 = vld [vmem:[%s1503 + $0x8c] sm:$0xf]
          %v1528 = vld [vmem:[%s1503 + $0x90] sm:$0xff]
          %v1529 = vld [vmem:[%s1503 + $0x98] sm:$0xf]
          %v1530 = vld [vmem:[%s1503 + $0x9c] sm:$0xff]
          %v1531 = vld [vmem:[%s1503 + $0xa4] sm:$0xf]
          %v1532 = vld [vmem:[%s1503 + $0xa8] sm:$0xff]
          %v1533 = vld [vmem:[%s1503 + $0xb0] sm:$0xf]
          %v1534 = vld [vmem:[%s1503 + $0xb4] sm:$0xff]
          %v1535 = vld [vmem:[%s1503 + $0xbc] sm:$0xf]
          %v1536 = vld [vmem:[%s1503 + $0xc0] sm:$0xff]
          %v1537 = vld [vmem:[%s1503 + $0xc8] sm:$0xf]
          %v1538 = vld [vmem:[%s1503 + $0xcc] sm:$0xff]
          %v1539 = vld [vmem:[%s1503 + $0xd4] sm:$0xf]
          %v1540 = vld [vmem:[%s1503 + $0xd8] sm:$0xff]
          %v1541 = vld [vmem:[%s1503 + $0xe0] sm:$0xf]
          %v1542 = vld [vmem:[%s1503 + $0xe4] sm:$0xff]
          %v1543 = vld [vmem:[%s1503 + $0xec] sm:$0xf]
          %vm1548 = vcmask 1045504
          %v1549 = vrot.slane %v1499, 2
          %v1550 = vrot.slane %v1501, 2
          %v1551 = vsel %vm1548, %v1549, %v1550
          %v1552 = vrot.slane %v1500, 2
          %v1553 = vrot.slane %v1502, 2
          %v1554 = vsel %vm1548, %v1552, %v1553
          %v1597 = vunpack.c.l.b16 %v1504
          %v1598 = vunpack.c.h.b16 %v1504
          %v1599 = vunpack.c.l.b16 %v1505
          %v1600 = vunpack.c.l.b16 %v1506
          %v1601 = vunpack.c.h.b16 %v1506
          %v1602 = vunpack.c.l.b16 %v1507
          %v1603 = vunpack.c.l.b16 %v1508
          %v1604 = vunpack.c.h.b16 %v1508
          %v1605 = vunpack.c.l.b16 %v1509
          %v1606 = vunpack.c.l.b16 %v1510
          %v1607 = vunpack.c.h.b16 %v1510
          %v1608 = vunpack.c.l.b16 %v1511
          %v1609 = vunpack.c.l.b16 %v1512
          %v1610 = vunpack.c.h.b16 %v1512
          %v1611 = vunpack.c.l.b16 %v1513
          %v1612 = vunpack.c.l.b16 %v1514
          %v1613 = vunpack.c.h.b16 %v1514
          %v1614 = vunpack.c.l.b16 %v1515
          %v1615 = vunpack.c.l.b16 %v1516
          %v1616 = vunpack.c.h.b16 %v1516
          %v1617 = vunpack.c.l.b16 %v1517
          %v1618 = vunpack.c.l.b16 %v1518
          %v1619 = vunpack.c.h.b16 %v1518
          %v1620 = vunpack.c.l.b16 %v1519
          %v1621 = vunpack.c.l.b16 %v1520
          %v1622 = vunpack.c.h.b16 %v1520
          %v1623 = vunpack.c.l.b16 %v1521
          %v1624 = vunpack.c.l.b16 %v1522
          %v1625 = vunpack.c.h.b16 %v1522
          %v1626 = vunpack.c.l.b16 %v1523
          %v1627 = vunpack.c.l.b16 %v1524
          %v1628 = vunpack.c.h.b16 %v1524
          %v1629 = vunpack.c.l.b16 %v1525
          %v1630 = vunpack.c.l.b16 %v1526
          %v1631 = vunpack.c.h.b16 %v1526
          %v1632 = vunpack.c.l.b16 %v1527
          %v1633 = vunpack.c.l.b16 %v1528
          %v1634 = vunpack.c.h.b16 %v1528
          %v1635 = vunpack.c.l.b16 %v1529
          %v1636 = vunpack.c.l.b16 %v1530
          %v1637 = vunpack.c.h.b16 %v1530
          %v1638 = vunpack.c.l.b16 %v1531
          %v1639 = vunpack.c.l.b16 %v1532
          %v1640 = vunpack.c.h.b16 %v1532
          %v1641 = vunpack.c.l.b16 %v1533
          %v1642 = vunpack.c.l.b16 %v1534
          %v1643 = vunpack.c.h.b16 %v1534
          %v1644 = vunpack.c.l.b16 %v1535
          %v1645 = vunpack.c.l.b16 %v1536
          %v1646 = vunpack.c.h.b16 %v1536
          %v1647 = vunpack.c.l.b16 %v1537
          %v1648 = vunpack.c.l.b16 %v1538
          %v1649 = vunpack.c.h.b16 %v1538
          %v1650 = vunpack.c.l.b16 %v1539
          %v1651 = vunpack.c.l.b16 %v1540
          %v1652 = vunpack.c.h.b16 %v1540
          %v1653 = vunpack.c.l.b16 %v1541
          %v1654 = vunpack.c.l.b16 %v1542
          %v1655 = vunpack.c.h.b16 %v1542
          %v1656 = vunpack.c.l.b16 %v1543
          %v1657 = vpack.c.b16 %v1600, %v1597
          %v1658 = vpack.c.b16 %v1601, %v1598
          %v1659 = vpack.c.b16 %v1602, %v1599
          %v1660 = vpack.c.b16 %v1606, %v1603
          %v1661 = vpack.c.b16 %v1607, %v1604
          %v1662 = vpack.c.b16 %v1608, %v1605
          %v1663 = vpack.c.b16 %v1612, %v1609
          %v1664 = vpack.c.b16 %v1613, %v1610
          %v1665 = vpack.c.b16 %v1614, %v1611
          %v1666 = vpack.c.b16 %v1618, %v1615
          %v1667 = vpack.c.b16 %v1619, %v1616
          %v1668 = vpack.c.b16 %v1620, %v1617
          %v1669 = vpack.c.b16 %v1624, %v1621
          %v1670 = vpack.c.b16 %v1625, %v1622
          %v1671 = vpack.c.b16 %v1626, %v1623
          %v1672 = vpack.c.b16 %v1630, %v1627
          %v1673 = vpack.c.b16 %v1631, %v1628
          %v1674 = vpack.c.b16 %v1632, %v1629
          %v1675 = vpack.c.b16 %v1636, %v1633
          %v1676 = vpack.c.b16 %v1637, %v1634
          %v1677 = vpack.c.b16 %v1638, %v1635
          %v1678 = vpack.c.b16 %v1642, %v1639
          %v1679 = vpack.c.b16 %v1643, %v1640
          %v1680 = vpack.c.b16 %v1644, %v1641
          %v1681 = vpack.c.b16 %v1648, %v1645
          %v1682 = vpack.c.b16 %v1649, %v1646
          %v1683 = vpack.c.b16 %v1650, %v1647
          %v1684 = vpack.c.b16 %v1654, %v1651
          %v1685 = vpack.c.b16 %v1655, %v1652
          %v1686 = vpack.c.b16 %v1656, %v1653
          %v1718 = vsel %vm830, %v1554, 0
          %v1721 = vsel %vm830, %v1553, 0
          %1723 = vmatpush.bf16.msra.mxu0 %v1678
          %1724 = vmatpush.bf16.msra.mxu0 %v1675
          %1725 = vmatpush.bf16.msra.mxu0 %v1672
          %1726 = vmatpush.bf16.msra.mxu0 %v1669
          %1727 = vmatpush.bf16.msra.mxu0 %v1666
          %1728 = vmatpush.bf16.msra.mxu0 %v1663
          %1729 = vmatpush.bf16.msra.mxu0 %v1660
          %1730 = vmatpush.bf16.msra.mxu0 %v1657
          %1731 = vmatmul.bf16.gmra.mxu0 %v1551
          %v1732 = vpop.f32.mrf.mxu0
          %v1733 = vadd.f32 0.0, %v1732
          %v1734 = vpop.f32.mrf.mxu0
          %v1735 = vadd.f32 0.0, %v1734
          %1736 = vmatmul.bf16.gmra.mxu0 %v1550
          %v1737 = vpop.f32.mrf.mxu0
          %v1738 = vadd.f32 0.0, %v1737
          %v1739 = vpop.f32.mrf.mxu0
          %1740 = vdwg.mxu0
          %1741 = vmatpush.bf16.msra.mxu0 0
          %1742 = vmatpush.bf16.msra.mxu0 0
          %1743 = vmatpush.bf16.msra.mxu0 0
          %1744 = vmatpush.bf16.msra.mxu0 0
          %1745 = vmatpush.bf16.msra.mxu0 0
          %1746 = vmatpush.bf16.msra.mxu0 0
          %1747 = vmatpush.bf16.msra.mxu0 %v1684
          %1748 = vmatpush.bf16.msra.mxu0 %v1681
          %1749 = vmatmul.bf16.gmra.mxu0 %v1718
          %v1750 = vpop.f32.mrf.mxu0
          %v1751 = vadd.f32 %v1733, %v1750
          %v1752 = vpop.f32.mrf.mxu0
          %v1753 = vadd.f32 %v1735, %v1752
          %1754 = vmatmul.bf16.gmra.mxu0 %v1721
          %v1755 = vpop.f32.mrf.mxu0
          %v1756 = vadd.f32 %v1738, %v1755
          %v1757 = vpop.f32.mrf.mxu0
          %1758 = vdwg.mxu0
          %1759 = vmatpush.bf16.msra.mxu0 %v1679
          %1760 = vmatpush.bf16.msra.mxu0 %v1676
          %1761 = vmatpush.bf16.msra.mxu0 %v1673
          %1762 = vmatpush.bf16.msra.mxu0 %v1670
          %1763 = vmatpush.bf16.msra.mxu0 %v1667
          %1764 = vmatpush.bf16.msra.mxu0 %v1664
          %1765 = vmatpush.bf16.msra.mxu0 %v1661
          %1766 = vmatpush.bf16.msra.mxu0 %v1658
          %1767 = vmatmul.bf16.gmra.mxu0 %v1551
          %v1768 = vpop.f32.mrf.mxu0
          %v1769 = vadd.f32 0.0, %v1768
          %v1770 = vpop.f32.mrf.mxu0
          %v1771 = vadd.f32 0.0, %v1770
          %1772 = vmatmul.bf16.gmra.mxu0 %v1550
          %v1773 = vpop.f32.mrf.mxu0
          %v1774 = vadd.f32 0.0, %v1773
          %v1775 = vpop.f32.mrf.mxu0
          %1776 = vdwg.mxu0
          %1777 = vmatpush.bf16.msra.mxu0 0
          %1778 = vmatpush.bf16.msra.mxu0 0
          %1779 = vmatpush.bf16.msra.mxu0 0
          %1780 = vmatpush.bf16.msra.mxu0 0
          %1781 = vmatpush.bf16.msra.mxu0 0
          %1782 = vmatpush.bf16.msra.mxu0 0
          %1783 = vmatpush.bf16.msra.mxu0 %v1685
          %1784 = vmatpush.bf16.msra.mxu0 %v1682
          %1785 = vmatmul.bf16.gmra.mxu0 %v1718
          %v1786 = vpop.f32.mrf.mxu0
          %v1787 = vadd.f32 %v1769, %v1786
          %v1788 = vpop.f32.mrf.mxu0
          %v1789 = vadd.f32 %v1771, %v1788
          %1790 = vmatmul.bf16.gmra.mxu0 %v1721
          %v1791 = vpop.f32.mrf.mxu0
          %v1792 = vadd.f32 %v1774, %v1791
          %v1793 = vpop.f32.mrf.mxu0
          %1794 = vdwg.mxu0
          %1795 = vmatpush.bf16.msra.mxu0 %v1680
          %1796 = vmatpush.bf16.msra.mxu0 %v1677
          %1797 = vmatpush.bf16.msra.mxu0 %v1674
          %1798 = vmatpush.bf16.msra.mxu0 %v1671
          %1799 = vmatpush.bf16.msra.mxu0 %v1668
          %1800 = vmatpush.bf16.msra.mxu0 %v1665
          %1801 = vmatpush.bf16.msra.mxu0 %v1662
          %1802 = vmatpush.bf16.msra.mxu0 %v1659
          %1803 = vmatmul.bf16.gmra.mxu0 %v1551
          %v1804 = vpop.f32.mrf.mxu0
          %v1805 = vadd.f32 0.0, %v1804
          %v1806 = vpop.f32.mrf.mxu0
          %v1807 = vadd.f32 0.0, %v1806
          %1808 = vmatmul.bf16.gmra.mxu0 %v1550
          %v1809 = vpop.f32.mrf.mxu0
          %v1810 = vadd.f32 0.0, %v1809
          %v1811 = vpop.f32.mrf.mxu0
          %1812 = vdwg.mxu0
          %1813 = vmatpush.bf16.msra.mxu0 0
          %1814 = vmatpush.bf16.msra.mxu0 0
          %1815 = vmatpush.bf16.msra.mxu0 0
          %1816 = vmatpush.bf16.msra.mxu0 0
          %1817 = vmatpush.bf16.msra.mxu0 0
          %1818 = vmatpush.bf16.msra.mxu0 0
          %1819 = vmatpush.bf16.msra.mxu0 %v1686
          %1820 = vmatpush.bf16.msra.mxu0 %v1683
          %1821 = vmatmul.bf16.gmra.mxu0 %v1718
          %v1822 = vpop.f32.mrf.mxu0
          %v1823 = vadd.f32 %v1805, %v1822
          %v1824 = vpop.f32.mrf.mxu0
          %v1825 = vadd.f32 %v1807, %v1824
          %1826 = vmatmul.bf16.gmra.mxu0 %v1721
          %v1827 = vpop.f32.mrf.mxu0
          %v1828 = vadd.f32 %v1810, %v1827
          %v1829 = vpop.f32.mrf.mxu0
          %1830 = vdwg.mxu0
          %v1831 = vadd.f32 %v1415, %v1751
          %v1832 = vadd.f32 %v1451, %v1787
          %v1833 = vadd.f32 %v1487, %v1823
          %v1834 = vadd.f32 %v1417, %v1753
          %v1835 = vadd.f32 %v1453, %v1789
          %v1836 = vadd.f32 %v1489, %v1825
          %v1837 = vadd.f32 %v1420, %v1756
          %v1838 = vadd.f32 %v1456, %v1792
          %v1839 = vadd.f32 %v1492, %v1828
          %v1840 = vld [vmem:[#allocation12] sm:$0x7]
          %v1842 = vperm.slane %v1840, 0
          %v1843 = vperm.slane %v1840, 1
          %v1844 = vperm.slane %v1840, 2
          %v1848 = vadd.f32 %v1831, %v1842
          %v1849 = vadd.f32 %v1832, %v1843
          %v1850 = vadd.f32 %v1833, %v1844
          %v1851 = vadd.f32 %v1834, %v1842
          %v1852 = vadd.f32 %v1835, %v1843
          %v1853 = vadd.f32 %v1836, %v1844
          %v1854 = vadd.f32 %v1837, %v1842
          %v1855 = vadd.f32 %v1838, %v1843
          %v1856 = vadd.f32 %v1839, %v1844
          %v1857 = vmax.f32 %v1848, 0.0
          %v1858 = vmax.f32 %v1849, 0.0
          %v1859 = vmax.f32 %v1850, 0.0
          %v1860 = vmax.f32 %v1851, 0.0
          %v1861 = vmax.f32 %v1852, 0.0
          %v1862 = vmax.f32 %v1853, 0.0
          %v1863 = vmax.f32 %v1854, 0.0
          %v1864 = vmax.f32 %v1855, 0.0
          %v1865 = vmax.f32 %v1856, 0.0
          %1866 = vst [vmem:[#allocation4] sm:$0x3] 0.0
          %1867 = vst [vmem:[#allocation4 + $0x8] sm:$0x3] 0.0
          %vm1868 = vcmask 517120
          %1869 = vst.msk [vmem:[#allocation4 + $0x10] sm:$0x3] %vm1868, 0.0
          %1870 = vst [vmem:[#allocation4 + $0x30] sm:$0xc0] 0.0
          %1871 = vst [vmem:[#allocation4 + $0x38] sm:$0xc0] 0.0
          %vm1872 = vcmask 523270
          %1873 = vst.msk [vmem:[#allocation4 + $0x40] sm:$0xc0] %vm1872, 0.0
          %v1883 = vrot.slane %v1857, 6
          %v1884 = vrot.slane %v1858, 6
          %v1885 = vrot.slane %v1859, 6
          %v1886 = vrot.slane %v1860, 6
          %v1887 = vsel %vm809, %v1883, %v1886
          %v1888 = vrot.slane %v1861, 6
          %v1889 = vsel %vm809, %v1884, %v1888
          %v1890 = vrot.slane %v1862, 6
          %v1891 = vsel %vm809, %v1885, %v1890
          %v1892 = vrot.slane %v1863, 6
          %v1893 = vsel %vm809, %v1886, %v1892
          %v1894 = vrot.slane %v1864, 6
          %v1895 = vsel %vm809, %v1888, %v1894
          %v1896 = vrot.slane %v1865, 6
          %v1897 = vsel %vm809, %v1890, %v1896
          %1907 = vst [vmem:[#allocation4] sm:$0xfc] %v1883
          %1908 = vst [vmem:[#allocation4 + $0x8] sm:$0xfc] %v1884
          %vm1909 = vcmask 523266
          %1910 = vst.msk [vmem:[#allocation4 + $0x10] sm:$0xfc] %vm1909, %v1885
          %1911 = vst [vmem:[#allocation4 + $0x18] sm:$0xff] %v1887
          %1912 = vst [vmem:[#allocation4 + $0x20] sm:$0xff] %v1889
          %vm1913 = vcmask 523264
          %1914 = vst.msk [vmem:[#allocation4 + $0x28] sm:$0xff] %vm1913, %v1891
          %1915 = vst [vmem:[#allocation4 + $0x30] sm:$0x3f] %v1893
          %1916 = vst [vmem:[#allocation4 + $0x38] sm:$0x3f] %v1895
          %vm1917 = vcmask 521216
          %1918 = vst.msk [vmem:[#allocation4 + $0x40] sm:$0x3f] %vm1917, %v1897
          %v1919 = vld [vmem:[#allocation4] sm:$0xff]
          %v1920 = vld [vmem:[#allocation4 + $0x8] sm:$0xff]
          %v1921 = vld [vmem:[#allocation4 + $0x10] sm:$0xff]
          %v1922 = vld [vmem:[#allocation4 + $0x18] sm:$0xff]
          %v1923 = vld [vmem:[#allocation4 + $0x20] sm:$0xff]
          %v1924 = vld [vmem:[#allocation4 + $0x28] sm:$0xff]
          %v1925 = vld [vmem:[#allocation4 + $0x30] sm:$0xf]
          %v1926 = vld [vmem:[#allocation4 + $0x38] sm:$0xf]
          %v1927 = vld [vmem:[#allocation4 + $0x40] sm:$0xf]
          %v1928 = vpack.c.bf16 %v1922, %v1919
          %v1929 = vpack.c.bf16 %v1923, %v1920
          %v1930 = vpack.c.bf16 %v1924, %v1921
          %v1931 = vpack.c.bf16 %v1925, %v1925
          %v1932 = vpack.c.bf16 %v1926, %v1926
          %v1933 = vpack.c.bf16 %v1927, %v1927
          %v1934 = vld [vmem:[#allocation14] sm:$0xff]
          %v1935 = vld [vmem:[#allocation14 + $0x8] sm:$0xff]
          %v1936 = vld [vmem:[#allocation14 + $0x10] sm:$0xf]
          %v1937 = vld [vmem:[#allocation14 + $0x14] sm:$0xff]
          %v1938 = vld [vmem:[#allocation14 + $0x1c] sm:$0xff]
          %v1939 = vld [vmem:[#allocation14 + $0x24] sm:$0xf]
          %v1940 = vld [vmem:[#allocation14 + $0x28] sm:$0xff]
          %v1941 = vld [vmem:[#allocation14 + $0x30] sm:$0xff]
          %v1942 = vld [vmem:[#allocation14 + $0x38] sm:$0xf]
          %v1943 = vld [vmem:[#allocation14 + $0x3c] sm:$0xff]
          %v1944 = vld [vmem:[#allocation14 + $0x44] sm:$0xff]
          %v1945 = vld [vmem:[#allocation14 + $0x4c] sm:$0xf]
          %v1946 = vld [vmem:[#allocation14 + $0x50] sm:$0xff]
          %v1947 = vld [vmem:[#allocation14 + $0x58] sm:$0xff]
          %v1948 = vld [vmem:[#allocation14 + $0x60] sm:$0xf]
          %v1949 = vld [vmem:[#allocation14 + $0x64] sm:$0xff]
          %v1950 = vld [vmem:[#allocation14 + $0x6c] sm:$0xff]
          %v1951 = vld [vmem:[#allocation14 + $0x74] sm:$0xf]
          %v1952 = vld [vmem:[#allocation14 + $0x78] sm:$0xff]
          %v1953 = vld [vmem:[#allocation14 + $0x80] sm:$0xff]
          %v1954 = vld [vmem:[#allocation14 + $0x88] sm:$0xf]
          %v1955 = vld [vmem:[#allocation14 + $0x8c] sm:$0xff]
          %v1956 = vld [vmem:[#allocation14 + $0x94] sm:$0xff]
          %v1957 = vld [vmem:[#allocation14 + $0x9c] sm:$0xf]
          %v1958 = vld [vmem:[#allocation14 + $0xa0] sm:$0xff]
          %v1959 = vld [vmem:[#allocation14 + $0xa8] sm:$0xff]
          %v1960 = vld [vmem:[#allocation14 + $0xb0] sm:$0xf]
          %v1961 = vld [vmem:[#allocation14 + $0xb4] sm:$0xff]
          %v1962 = vld [vmem:[#allocation14 + $0xbc] sm:$0xff]
          %v1963 = vld [vmem:[#allocation14 + $0xc4] sm:$0xf]
          %v1964 = vld [vmem:[#allocation14 + $0xc8] sm:$0xff]
          %v1965 = vld [vmem:[#allocation14 + $0xd0] sm:$0xff]
          %v1966 = vld [vmem:[#allocation14 + $0xd8] sm:$0xf]
          %v1967 = vld [vmem:[#allocation14 + $0xdc] sm:$0xff]
          %v1968 = vld [vmem:[#allocation14 + $0xe4] sm:$0xff]
          %v1969 = vld [vmem:[#allocation14 + $0xec] sm:$0xf]
          %v1970 = vld [vmem:[#allocation14 + $0xf0] sm:$0xff]
          %v1971 = vld [vmem:[#allocation14 + $0xf8] sm:$0xff]
          %v1972 = vld [vmem:[#allocation14 + $0x100] sm:$0xf]
          %v1973 = vld [vmem:[#allocation14 + $0x104] sm:$0xff]
          %v1974 = vld [vmem:[#allocation14 + $0x10c] sm:$0xff]
          %v1975 = vld [vmem:[#allocation14 + $0x114] sm:$0xf]
          %v1976 = vld [vmem:[#allocation14 + $0x118] sm:$0xff]
          %v1977 = vld [vmem:[#allocation14 + $0x120] sm:$0xff]
          %v1978 = vld [vmem:[#allocation14 + $0x128] sm:$0xf]
          %v1979 = vld [vmem:[#allocation14 + $0x12c] sm:$0xff]
          %v1980 = vld [vmem:[#allocation14 + $0x134] sm:$0xff]
          %v1981 = vld [vmem:[#allocation14 + $0x13c] sm:$0xf]
          %v1982 = vld [vmem:[#allocation14 + $0x140] sm:$0xff]
          %v1983 = vld [vmem:[#allocation14 + $0x148] sm:$0xff]
          %v1984 = vld [vmem:[#allocation14 + $0x150] sm:$0xf]
          %v1985 = vld [vmem:[#allocation14 + $0x154] sm:$0xff]
          %v1986 = vld [vmem:[#allocation14 + $0x15c] sm:$0xff]
          %v1987 = vld [vmem:[#allocation14 + $0x164] sm:$0xf]
          %v1988 = vld [vmem:[#allocation14 + $0x168] sm:$0xff]
          %v1989 = vld [vmem:[#allocation14 + $0x170] sm:$0xff]
          %v1990 = vld [vmem:[#allocation14 + $0x178] sm:$0xf]
          %v1991 = vld [vmem:[#allocation14 + $0x17c] sm:$0xff]
          %v1992 = vld [vmem:[#allocation14 + $0x184] sm:$0xff]
          %v1993 = vld [vmem:[#allocation14 + $0x18c] sm:$0xf]
          %v1994 = vld [vmem:[#allocation14 + $0x190] sm:$0xff]
          %v1995 = vld [vmem:[#allocation14 + $0x198] sm:$0xff]
          %v1996 = vld [vmem:[#allocation14 + $0x1a0] sm:$0xf]
          %v1997 = vld [vmem:[#allocation14 + $0x1a4] sm:$0xff]
          %v1998 = vld [vmem:[#allocation14 + $0x1ac] sm:$0xff]
          %v1999 = vld [vmem:[#allocation14 + $0x1b4] sm:$0xf]
          %v2000 = vld [vmem:[#allocation14 + $0x1b8] sm:$0xff]
          %v2001 = vld [vmem:[#allocation14 + $0x1c0] sm:$0xff]
          %v2002 = vld [vmem:[#allocation14 + $0x1c8] sm:$0xf]
          %v2003 = vld [vmem:[#allocation14 + $0x1cc] sm:$0xff]
          %v2004 = vld [vmem:[#allocation14 + $0x1d4] sm:$0xff]
          %v2005 = vld [vmem:[#allocation14 + $0x1dc] sm:$0xf]
          %v2006 = vld [vmem:[#allocation14 + $0x1e0] sm:$0xff]
          %v2007 = vld [vmem:[#allocation14 + $0x1e8] sm:$0xff]
          %v2008 = vld [vmem:[#allocation14 + $0x1f0] sm:$0xf]
          %v2009 = vld [vmem:[#allocation14 + $0x1f4] sm:$0xff]
          %v2010 = vld [vmem:[#allocation14 + $0x1fc] sm:$0xff]
          %v2011 = vld [vmem:[#allocation14 + $0x204] sm:$0xf]
          %v2012 = vld [vmem:[#allocation14 + $0x208] sm:$0xff]
          %v2013 = vld [vmem:[#allocation14 + $0x210] sm:$0xff]
          %v2014 = vld [vmem:[#allocation14 + $0x218] sm:$0xf]
          %v2015 = vld [vmem:[#allocation14 + $0x21c] sm:$0xff]
          %v2016 = vld [vmem:[#allocation14 + $0x224] sm:$0xff]
          %v2017 = vld [vmem:[#allocation14 + $0x22c] sm:$0xf]
          %v2018 = vld [vmem:[#allocation14 + $0x230] sm:$0xff]
          %v2019 = vld [vmem:[#allocation14 + $0x238] sm:$0xff]
          %v2020 = vld [vmem:[#allocation14 + $0x240] sm:$0xf]
          %v2021 = vld [vmem:[#allocation14 + $0x244] sm:$0xff]
          %v2022 = vld [vmem:[#allocation14 + $0x24c] sm:$0xff]
          %v2023 = vld [vmem:[#allocation14 + $0x254] sm:$0xf]
          %v2024 = vld [vmem:[#allocation14 + $0x258] sm:$0xff]
          %v2025 = vld [vmem:[#allocation14 + $0x260] sm:$0xff]
          %v2026 = vld [vmem:[#allocation14 + $0x268] sm:$0xf]
          %v2027 = vld [vmem:[#allocation14 + $0x26c] sm:$0xff]
          %v2028 = vld [vmem:[#allocation14 + $0x274] sm:$0xff]
          %v2029 = vld [vmem:[#allocation14 + $0x27c] sm:$0xf]
          %v2030 = vld [vmem:[#allocation14 + $0x280] sm:$0xff]
          %v2031 = vld [vmem:[#allocation14 + $0x288] sm:$0xff]
          %v2032 = vld [vmem:[#allocation14 + $0x290] sm:$0xf]
          %v2033 = vld [vmem:[#allocation14 + $0x294] sm:$0xff]
          %v2034 = vld [vmem:[#allocation14 + $0x29c] sm:$0xff]
          %v2035 = vld [vmem:[#allocation14 + $0x2a4] sm:$0xf]
          %v2036 = vld [vmem:[#allocation14 + $0x2a8] sm:$0xff]
          %v2037 = vld [vmem:[#allocation14 + $0x2b0] sm:$0xff]
          %v2038 = vld [vmem:[#allocation14 + $0x2b8] sm:$0xf]
          %v2039 = vld [vmem:[#allocation14 + $0x2bc] sm:$0xff]
          %v2040 = vld [vmem:[#allocation14 + $0x2c4] sm:$0xff]
          %v2041 = vld [vmem:[#allocation14 + $0x2cc] sm:$0xf]
          %v2042 = vld [vmem:[#allocation14 + $0x2d0] sm:$0xff]
          %v2043 = vld [vmem:[#allocation14 + $0x2d8] sm:$0xff]
          %v2044 = vld [vmem:[#allocation14 + $0x2e0] sm:$0xf]
          %v2045 = vld [vmem:[#allocation14 + $0x2e4] sm:$0xff]
          %v2046 = vld [vmem:[#allocation14 + $0x2ec] sm:$0xff]
          %v2047 = vld [vmem:[#allocation14 + $0x2f4] sm:$0xf]
          %v2048 = vld [vmem:[#allocation14 + $0x2f8] sm:$0xff]
          %v2049 = vld [vmem:[#allocation14 + $0x300] sm:$0xff]
          %v2050 = vld [vmem:[#allocation14 + $0x308] sm:$0xf]
          %v2051 = vld [vmem:[#allocation14 + $0x30c] sm:$0xff]
          %v2052 = vld [vmem:[#allocation14 + $0x314] sm:$0xff]
          %v2053 = vld [vmem:[#allocation14 + $0x31c] sm:$0xf]
          %v2054 = vld [vmem:[#allocation4] sm:$0xfc]
          %v2055 = vld [vmem:[#allocation4 + $0x8] sm:$0xfc]
          %v2056 = vld [vmem:[#allocation4 + $0x10] sm:$0xfc]
          %v2057 = vld [vmem:[#allocation4 + $0x30] sm:$0x3f]
          %v2058 = vld [vmem:[#allocation4 + $0x38] sm:$0x3f]
          %v2059 = vld [vmem:[#allocation4 + $0x40] sm:$0x3f]
          %v2060 = vpack.c.bf16 %v1922, %v2054
          %v2061 = vpack.c.bf16 %v1923, %v2055
          %v2062 = vpack.c.bf16 %v1924, %v2056
          %v2063 = vpack.c.bf16 %v2057, %v2057
          %v2064 = vpack.c.bf16 %v2058, %v2058
          %v2065 = vpack.c.bf16 %v2059, %v2059
          %s2066 = scalar_lea.vmem [#allocation14], 800
          %v2067 = vld [vmem:[%s2066] sm:$0xff]
          %v2068 = vld [vmem:[%s2066 + $0x8] sm:$0xff]
          %v2069 = vld [vmem:[%s2066 + $0x10] sm:$0xf]
          %v2070 = vld [vmem:[%s2066 + $0x14] sm:$0xff]
          %v2071 = vld [vmem:[%s2066 + $0x1c] sm:$0xff]
          %v2072 = vld [vmem:[%s2066 + $0x24] sm:$0xf]
          %v2073 = vld [vmem:[%s2066 + $0x28] sm:$0xff]
          %v2074 = vld [vmem:[%s2066 + $0x30] sm:$0xff]
          %v2075 = vld [vmem:[%s2066 + $0x38] sm:$0xf]
          %v2076 = vld [vmem:[%s2066 + $0x3c] sm:$0xff]
          %v2077 = vld [vmem:[%s2066 + $0x44] sm:$0xff]
          %v2078 = vld [vmem:[%s2066 + $0x4c] sm:$0xf]
          %v2079 = vld [vmem:[%s2066 + $0x50] sm:$0xff]
          %v2080 = vld [vmem:[%s2066 + $0x58] sm:$0xff]
          %v2081 = vld [vmem:[%s2066 + $0x60] sm:$0xf]
          %v2082 = vld [vmem:[%s2066 + $0x64] sm:$0xff]
          %v2083 = vld [vmem:[%s2066 + $0x6c] sm:$0xff]
          %v2084 = vld [vmem:[%s2066 + $0x74] sm:$0xf]
          %v2085 = vld [vmem:[%s2066 + $0x78] sm:$0xff]
          %v2086 = vld [vmem:[%s2066 + $0x80] sm:$0xff]
          %v2087 = vld [vmem:[%s2066 + $0x88] sm:$0xf]
          %v2088 = vld [vmem:[%s2066 + $0x8c] sm:$0xff]
          %v2089 = vld [vmem:[%s2066 + $0x94] sm:$0xff]
          %v2090 = vld [vmem:[%s2066 + $0x9c] sm:$0xf]
          %v2091 = vld [vmem:[%s2066 + $0xa0] sm:$0xff]
          %v2092 = vld [vmem:[%s2066 + $0xa8] sm:$0xff]
          %v2093 = vld [vmem:[%s2066 + $0xb0] sm:$0xf]
          %v2094 = vld [vmem:[%s2066 + $0xb4] sm:$0xff]
          %v2095 = vld [vmem:[%s2066 + $0xbc] sm:$0xff]
          %v2096 = vld [vmem:[%s2066 + $0xc4] sm:$0xf]
          %v2097 = vld [vmem:[%s2066 + $0xc8] sm:$0xff]
          %v2098 = vld [vmem:[%s2066 + $0xd0] sm:$0xff]
          %v2099 = vld [vmem:[%s2066 + $0xd8] sm:$0xf]
          %v2100 = vld [vmem:[%s2066 + $0xdc] sm:$0xff]
          %v2101 = vld [vmem:[%s2066 + $0xe4] sm:$0xff]
          %v2102 = vld [vmem:[%s2066 + $0xec] sm:$0xf]
          %v2103 = vld [vmem:[%s2066 + $0xf0] sm:$0xff]
          %v2104 = vld [vmem:[%s2066 + $0xf8] sm:$0xff]
          %v2105 = vld [vmem:[%s2066 + $0x100] sm:$0xf]
          %v2106 = vld [vmem:[%s2066 + $0x104] sm:$0xff]
          %v2107 = vld [vmem:[%s2066 + $0x10c] sm:$0xff]
          %v2108 = vld [vmem:[%s2066 + $0x114] sm:$0xf]
          %v2109 = vld [vmem:[%s2066 + $0x118] sm:$0xff]
          %v2110 = vld [vmem:[%s2066 + $0x120] sm:$0xff]
          %v2111 = vld [vmem:[%s2066 + $0x128] sm:$0xf]
          %v2112 = vld [vmem:[%s2066 + $0x12c] sm:$0xff]
          %v2113 = vld [vmem:[%s2066 + $0x134] sm:$0xff]
          %v2114 = vld [vmem:[%s2066 + $0x13c] sm:$0xf]
          %v2115 = vld [vmem:[%s2066 + $0x140] sm:$0xff]
          %v2116 = vld [vmem:[%s2066 + $0x148] sm:$0xff]
          %v2117 = vld [vmem:[%s2066 + $0x150] sm:$0xf]
          %v2118 = vld [vmem:[%s2066 + $0x154] sm:$0xff]
          %v2119 = vld [vmem:[%s2066 + $0x15c] sm:$0xff]
          %v2120 = vld [vmem:[%s2066 + $0x164] sm:$0xf]
          %v2121 = vld [vmem:[%s2066 + $0x168] sm:$0xff]
          %v2122 = vld [vmem:[%s2066 + $0x170] sm:$0xff]
          %v2123 = vld [vmem:[%s2066 + $0x178] sm:$0xf]
          %v2124 = vld [vmem:[%s2066 + $0x17c] sm:$0xff]
          %v2125 = vld [vmem:[%s2066 + $0x184] sm:$0xff]
          %v2126 = vld [vmem:[%s2066 + $0x18c] sm:$0xf]
          %v2127 = vld [vmem:[%s2066 + $0x190] sm:$0xff]
          %v2128 = vld [vmem:[%s2066 + $0x198] sm:$0xff]
          %v2129 = vld [vmem:[%s2066 + $0x1a0] sm:$0xf]
          %v2130 = vld [vmem:[%s2066 + $0x1a4] sm:$0xff]
          %v2131 = vld [vmem:[%s2066 + $0x1ac] sm:$0xff]
          %v2132 = vld [vmem:[%s2066 + $0x1b4] sm:$0xf]
          %v2133 = vld [vmem:[%s2066 + $0x1b8] sm:$0xff]
          %v2134 = vld [vmem:[%s2066 + $0x1c0] sm:$0xff]
          %v2135 = vld [vmem:[%s2066 + $0x1c8] sm:$0xf]
          %v2136 = vld [vmem:[%s2066 + $0x1cc] sm:$0xff]
          %v2137 = vld [vmem:[%s2066 + $0x1d4] sm:$0xff]
          %v2138 = vld [vmem:[%s2066 + $0x1dc] sm:$0xf]
          %v2139 = vld [vmem:[%s2066 + $0x1e0] sm:$0xff]
          %v2140 = vld [vmem:[%s2066 + $0x1e8] sm:$0xff]
          %v2141 = vld [vmem:[%s2066 + $0x1f0] sm:$0xf]
          %v2142 = vld [vmem:[%s2066 + $0x1f4] sm:$0xff]
          %v2143 = vld [vmem:[%s2066 + $0x1fc] sm:$0xff]
          %v2144 = vld [vmem:[%s2066 + $0x204] sm:$0xf]
          %v2145 = vld [vmem:[%s2066 + $0x208] sm:$0xff]
          %v2146 = vld [vmem:[%s2066 + $0x210] sm:$0xff]
          %v2147 = vld [vmem:[%s2066 + $0x218] sm:$0xf]
          %v2148 = vld [vmem:[%s2066 + $0x21c] sm:$0xff]
          %v2149 = vld [vmem:[%s2066 + $0x224] sm:$0xff]
          %v2150 = vld [vmem:[%s2066 + $0x22c] sm:$0xf]
          %v2151 = vld [vmem:[%s2066 + $0x230] sm:$0xff]
          %v2152 = vld [vmem:[%s2066 + $0x238] sm:$0xff]
          %v2153 = vld [vmem:[%s2066 + $0x240] sm:$0xf]
          %v2154 = vld [vmem:[%s2066 + $0x244] sm:$0xff]
          %v2155 = vld [vmem:[%s2066 + $0x24c] sm:$0xff]
          %v2156 = vld [vmem:[%s2066 + $0x254] sm:$0xf]
          %v2157 = vld [vmem:[%s2066 + $0x258] sm:$0xff]
          %v2158 = vld [vmem:[%s2066 + $0x260] sm:$0xff]
          %v2159 = vld [vmem:[%s2066 + $0x268] sm:$0xf]
          %v2160 = vld [vmem:[%s2066 + $0x26c] sm:$0xff]
          %v2161 = vld [vmem:[%s2066 + $0x274] sm:$0xff]
          %v2162 = vld [vmem:[%s2066 + $0x27c] sm:$0xf]
          %v2163 = vld [vmem:[%s2066 + $0x280] sm:$0xff]
          %v2164 = vld [vmem:[%s2066 + $0x288] sm:$0xff]
          %v2165 = vld [vmem:[%s2066 + $0x290] sm:$0xf]
          %v2166 = vld [vmem:[%s2066 + $0x294] sm:$0xff]
          %v2167 = vld [vmem:[%s2066 + $0x29c] sm:$0xff]
          %v2168 = vld [vmem:[%s2066 + $0x2a4] sm:$0xf]
          %v2169 = vld [vmem:[%s2066 + $0x2a8] sm:$0xff]
          %v2170 = vld [vmem:[%s2066 + $0x2b0] sm:$0xff]
          %v2171 = vld [vmem:[%s2066 + $0x2b8] sm:$0xf]
          %v2172 = vld [vmem:[%s2066 + $0x2bc] sm:$0xff]
          %v2173 = vld [vmem:[%s2066 + $0x2c4] sm:$0xff]
          %v2174 = vld [vmem:[%s2066 + $0x2cc] sm:$0xf]
          %v2175 = vld [vmem:[%s2066 + $0x2d0] sm:$0xff]
          %v2176 = vld [vmem:[%s2066 + $0x2d8] sm:$0xff]
          %v2177 = vld [vmem:[%s2066 + $0x2e0] sm:$0xf]
          %v2178 = vld [vmem:[%s2066 + $0x2e4] sm:$0xff]
          %v2179 = vld [vmem:[%s2066 + $0x2ec] sm:$0xff]
          %v2180 = vld [vmem:[%s2066 + $0x2f4] sm:$0xf]
          %v2181 = vld [vmem:[%s2066 + $0x2f8] sm:$0xff]
          %v2182 = vld [vmem:[%s2066 + $0x300] sm:$0xff]
          %v2183 = vld [vmem:[%s2066 + $0x308] sm:$0xf]
          %v2184 = vld [vmem:[%s2066 + $0x30c] sm:$0xff]
          %v2185 = vld [vmem:[%s2066 + $0x314] sm:$0xff]
          %v2186 = vld [vmem:[%s2066 + $0x31c] sm:$0xf]
          %v2193 = vrot.slane %v2060, 1
          %v2194 = vrot.slane %v2063, 1
          %v2195 = vsel %vm938, %v2193, %v2194
          %v2196 = vrot.slane %v2061, 1
          %v2197 = vrot.slane %v2064, 1
          %v2198 = vsel %vm938, %v2196, %v2197
          %v2199 = vrot.slane %v2062, 1
          %v2200 = vrot.slane %v2065, 1
          %v2201 = vsel %vm938, %v2199, %v2200
          %v2326 = vunpack.c.l.b16 %v2067
          %v2327 = vunpack.c.h.b16 %v2067
          %v2328 = vunpack.c.l.b16 %v2068
          %v2329 = vunpack.c.h.b16 %v2068
          %v2330 = vunpack.c.l.b16 %v2069
          %v2331 = vunpack.c.l.b16 %v2070
          %v2332 = vunpack.c.h.b16 %v2070
          %v2333 = vunpack.c.l.b16 %v2071
          %v2334 = vunpack.c.h.b16 %v2071
          %v2335 = vunpack.c.l.b16 %v2072
          %v2336 = vunpack.c.l.b16 %v2073
          %v2337 = vunpack.c.h.b16 %v2073
          %v2338 = vunpack.c.l.b16 %v2074
          %v2339 = vunpack.c.h.b16 %v2074
          %v2340 = vunpack.c.l.b16 %v2075
          %v2341 = vunpack.c.l.b16 %v2076
          %v2342 = vunpack.c.h.b16 %v2076
          %v2343 = vunpack.c.l.b16 %v2077
          %v2344 = vunpack.c.h.b16 %v2077
          %v2345 = vunpack.c.l.b16 %v2078
          %v2346 = vunpack.c.l.b16 %v2079
          %v2347 = vunpack.c.h.b16 %v2079
          %v2348 = vunpack.c.l.b16 %v2080
          %v2349 = vunpack.c.h.b16 %v2080
          %v2350 = vunpack.c.l.b16 %v2081
          %v2351 = vunpack.c.l.b16 %v2082
          %v2352 = vunpack.c.h.b16 %v2082
          %v2353 = vunpack.c.l.b16 %v2083
          %v2354 = vunpack.c.h.b16 %v2083
          %v2355 = vunpack.c.l.b16 %v2084
          %v2356 = vunpack.c.l.b16 %v2085
          %v2357 = vunpack.c.h.b16 %v2085
          %v2358 = vunpack.c.l.b16 %v2086
          %v2359 = vunpack.c.h.b16 %v2086
          %v2360 = vunpack.c.l.b16 %v2087
          %v2361 = vunpack.c.l.b16 %v2088
          %v2362 = vunpack.c.h.b16 %v2088
          %v2363 = vunpack.c.l.b16 %v2089
          %v2364 = vunpack.c.h.b16 %v2089
          %v2365 = vunpack.c.l.b16 %v2090
          %v2366 = vunpack.c.l.b16 %v2091
          %v2367 = vunpack.c.h.b16 %v2091
          %v2368 = vunpack.c.l.b16 %v2092
          %v2369 = vunpack.c.h.b16 %v2092
          %v2370 = vunpack.c.l.b16 %v2093
          %v2371 = vunpack.c.l.b16 %v2094
          %v2372 = vunpack.c.h.b16 %v2094
          %v2373 = vunpack.c.l.b16 %v2095
          %v2374 = vunpack.c.h.b16 %v2095
          %v2375 = vunpack.c.l.b16 %v2096
          %v2376 = vunpack.c.l.b16 %v2097
          %v2377 = vunpack.c.h.b16 %v2097
          %v2378 = vunpack.c.l.b16 %v2098
          %v2379 = vunpack.c.h.b16 %v2098
          %v2380 = vunpack.c.l.b16 %v2099
          %v2381 = vunpack.c.l.b16 %v2100
          %v2382 = vunpack.c.h.b16 %v2100
          %v2383 = vunpack.c.l.b16 %v2101
          %v2384 = vunpack.c.h.b16 %v2101
          %v2385 = vunpack.c.l.b16 %v2102
          %v2386 = vunpack.c.l.b16 %v2103
          %v2387 = vunpack.c.h.b16 %v2103
          %v2388 = vunpack.c.l.b16 %v2104
          %v2389 = vunpack.c.h.b16 %v2104
          %v2390 = vunpack.c.l.b16 %v2105
          %v2391 = vunpack.c.l.b16 %v2106
          %v2392 = vunpack.c.h.b16 %v2106
          %v2393 = vunpack.c.l.b16 %v2107
          %v2394 = vunpack.c.h.b16 %v2107
          %v2395 = vunpack.c.l.b16 %v2108
          %v2396 = vunpack.c.l.b16 %v2109
          %v2397 = vunpack.c.h.b16 %v2109
          %v2398 = vunpack.c.l.b16 %v2110
          %v2399 = vunpack.c.h.b16 %v2110
          %v2400 = vunpack.c.l.b16 %v2111
          %v2401 = vunpack.c.l.b16 %v2112
          %v2402 = vunpack.c.h.b16 %v2112
          %v2403 = vunpack.c.l.b16 %v2113
          %v2404 = vunpack.c.h.b16 %v2113
          %v2405 = vunpack.c.l.b16 %v2114
          %v2406 = vunpack.c.l.b16 %v2115
          %v2407 = vunpack.c.h.b16 %v2115
          %v2408 = vunpack.c.l.b16 %v2116
          %v2409 = vunpack.c.h.b16 %v2116
          %v2410 = vunpack.c.l.b16 %v2117
          %v2411 = vunpack.c.l.b16 %v2118
          %v2412 = vunpack.c.h.b16 %v2118
          %v2413 = vunpack.c.l.b16 %v2119
          %v2414 = vunpack.c.h.b16 %v2119
          %v2415 = vunpack.c.l.b16 %v2120
          %v2416 = vunpack.c.l.b16 %v2121
          %v2417 = vunpack.c.h.b16 %v2121
          %v2418 = vunpack.c.l.b16 %v2122
          %v2419 = vunpack.c.h.b16 %v2122
          %v2420 = vunpack.c.l.b16 %v2123
          %v2421 = vunpack.c.l.b16 %v2124
          %v2422 = vunpack.c.h.b16 %v2124
          %v2423 = vunpack.c.l.b16 %v2125
          %v2424 = vunpack.c.h.b16 %v2125
          %v2425 = vunpack.c.l.b16 %v2126
          %v2426 = vunpack.c.l.b16 %v2127
          %v2427 = vunpack.c.h.b16 %v2127
          %v2428 = vunpack.c.l.b16 %v2128
          %v2429 = vunpack.c.h.b16 %v2128
          %v2430 = vunpack.c.l.b16 %v2129
          %v2431 = vunpack.c.l.b16 %v2130
          %v2432 = vunpack.c.h.b16 %v2130
          %v2433 = vunpack.c.l.b16 %v2131
          %v2434 = vunpack.c.h.b16 %v2131
          %v2435 = vunpack.c.l.b16 %v2132
          %v2436 = vunpack.c.l.b16 %v2133
          %v2437 = vunpack.c.h.b16 %v2133
          %v2438 = vunpack.c.l.b16 %v2134
          %v2439 = vunpack.c.h.b16 %v2134
          %v2440 = vunpack.c.l.b16 %v2135
          %v2441 = vunpack.c.l.b16 %v2136
          %v2442 = vunpack.c.h.b16 %v2136
          %v2443 = vunpack.c.l.b16 %v2137
          %v2444 = vunpack.c.h.b16 %v2137
          %v2445 = vunpack.c.l.b16 %v2138
          %v2446 = vunpack.c.l.b16 %v2139
          %v2447 = vunpack.c.h.b16 %v2139
          %v2448 = vunpack.c.l.b16 %v2140
          %v2449 = vunpack.c.h.b16 %v2140
          %v2450 = vunpack.c.l.b16 %v2141
          %v2451 = vunpack.c.l.b16 %v2142
          %v2452 = vunpack.c.h.b16 %v2142
          %v2453 = vunpack.c.l.b16 %v2143
          %v2454 = vunpack.c.h.b16 %v2143
          %v2455 = vunpack.c.l.b16 %v2144
          %v2456 = vunpack.c.l.b16 %v2145
          %v2457 = vunpack.c.h.b16 %v2145
          %v2458 = vunpack.c.l.b16 %v2146
          %v2459 = vunpack.c.h.b16 %v2146
          %v2460 = vunpack.c.l.b16 %v2147
          %v2461 = vunpack.c.l.b16 %v2148
          %v2462 = vunpack.c.h.b16 %v2148
          %v2463 = vunpack.c.l.b16 %v2149
          %v2464 = vunpack.c.h.b16 %v2149
          %v2465 = vunpack.c.l.b16 %v2150
          %v2466 = vunpack.c.l.b16 %v2151
          %v2467 = vunpack.c.h.b16 %v2151
          %v2468 = vunpack.c.l.b16 %v2152
          %v2469 = vunpack.c.h.b16 %v2152
          %v2470 = vunpack.c.l.b16 %v2153
          %v2471 = vunpack.c.l.b16 %v2154
          %v2472 = vunpack.c.h.b16 %v2154
          %v2473 = vunpack.c.l.b16 %v2155
          %v2474 = vunpack.c.h.b16 %v2155
          %v2475 = vunpack.c.l.b16 %v2156
          %v2476 = vunpack.c.l.b16 %v2157
          %v2477 = vunpack.c.h.b16 %v2157
          %v2478 = vunpack.c.l.b16 %v2158
          %v2479 = vunpack.c.h.b16 %v2158
          %v2480 = vunpack.c.l.b16 %v2159
          %v2481 = vunpack.c.l.b16 %v2160
          %v2482 = vunpack.c.h.b16 %v2160
          %v2483 = vunpack.c.l.b16 %v2161
          %v2484 = vunpack.c.h.b16 %v2161
          %v2485 = vunpack.c.l.b16 %v2162
          %v2486 = vunpack.c.l.b16 %v2163
          %v2487 = vunpack.c.h.b16 %v2163
          %v2488 = vunpack.c.l.b16 %v2164
          %v2489 = vunpack.c.h.b16 %v2164
          %v2490 = vunpack.c.l.b16 %v2165
          %v2491 = vunpack.c.l.b16 %v2166
          %v2492 = vunpack.c.h.b16 %v2166
          %v2493 = vunpack.c.l.b16 %v2167
          %v2494 = vunpack.c.h.b16 %v2167
          %v2495 = vunpack.c.l.b16 %v2168
          %v2496 = vunpack.c.l.b16 %v2169
          %v2497 = vunpack.c.h.b16 %v2169
          %v2498 = vunpack.c.l.b16 %v2170
          %v2499 = vunpack.c.h.b16 %v2170
          %v2500 = vunpack.c.l.b16 %v2171
          %v2501 = vunpack.c.l.b16 %v2172
          %v2502 = vunpack.c.h.b16 %v2172
          %v2503 = vunpack.c.l.b16 %v2173
          %v2504 = vunpack.c.h.b16 %v2173
          %v2505 = vunpack.c.l.b16 %v2174
          %v2506 = vunpack.c.l.b16 %v2175
          %v2507 = vunpack.c.h.b16 %v2175
          %v2508 = vunpack.c.l.b16 %v2176
          %v2509 = vunpack.c.h.b16 %v2176
          %v2510 = vunpack.c.l.b16 %v2177
          %v2511 = vunpack.c.l.b16 %v2178
          %v2512 = vunpack.c.h.b16 %v2178
          %v2513 = vunpack.c.l.b16 %v2179
          %v2514 = vunpack.c.h.b16 %v2179
          %v2515 = vunpack.c.l.b16 %v2180
          %v2516 = vunpack.c.l.b16 %v2181
          %v2517 = vunpack.c.h.b16 %v2181
          %v2518 = vunpack.c.l.b16 %v2182
          %v2519 = vunpack.c.h.b16 %v2182
          %v2520 = vunpack.c.l.b16 %v2183
          %v2521 = vunpack.c.l.b16 %v2184
          %v2522 = vunpack.c.h.b16 %v2184
          %v2523 = vunpack.c.l.b16 %v2185
          %v2524 = vunpack.c.h.b16 %v2185
          %v2525 = vunpack.c.l.b16 %v2186
          %v2526 = vpack.c.b16 %v2331, %v2326
          %v2527 = vpack.c.b16 %v2332, %v2327
          %v2528 = vpack.c.b16 %v2333, %v2328
          %v2529 = vpack.c.b16 %v2334, %v2329
          %v2530 = vpack.c.b16 %v2335, %v2330
          %v2531 = vpack.c.b16 %v2341, %v2336
          %v2532 = vpack.c.b16 %v2342, %v2337
          %v2533 = vpack.c.b16 %v2343, %v2338
          %v2534 = vpack.c.b16 %v2344, %v2339
          %v2535 = vpack.c.b16 %v2345, %v2340
          %v2536 = vpack.c.b16 %v2351, %v2346
          %v2537 = vpack.c.b16 %v2352, %v2347
          %v2538 = vpack.c.b16 %v2353, %v2348
          %v2539 = vpack.c.b16 %v2354, %v2349
          %v2540 = vpack.c.b16 %v2355, %v2350
          %v2541 = vpack.c.b16 %v2361, %v2356
          %v2542 = vpack.c.b16 %v2362, %v2357
          %v2543 = vpack.c.b16 %v2363, %v2358
          %v2544 = vpack.c.b16 %v2364, %v2359
          %v2545 = vpack.c.b16 %v2365, %v2360
          %v2546 = vpack.c.b16 %v2371, %v2366
          %v2547 = vpack.c.b16 %v2372, %v2367
          %v2548 = vpack.c.b16 %v2373, %v2368
          %v2549 = vpack.c.b16 %v2374, %v2369
          %v2550 = vpack.c.b16 %v2375, %v2370
          %v2551 = vpack.c.b16 %v2381, %v2376
          %v2552 = vpack.c.b16 %v2382, %v2377
          %v2553 = vpack.c.b16 %v2383, %v2378
          %v2554 = vpack.c.b16 %v2384, %v2379
          %v2555 = vpack.c.b16 %v2385, %v2380
          %v2556 = vpack.c.b16 %v2391, %v2386
          %v2557 = vpack.c.b16 %v2392, %v2387
          %v2558 = vpack.c.b16 %v2393, %v2388
          %v2559 = vpack.c.b16 %v2394, %v2389
          %v2560 = vpack.c.b16 %v2395, %v2390
          %v2561 = vpack.c.b16 %v2401, %v2396
          %v2562 = vpack.c.b16 %v2402, %v2397
          %v2563 = vpack.c.b16 %v2403, %v2398
          %v2564 = vpack.c.b16 %v2404, %v2399
          %v2565 = vpack.c.b16 %v2405, %v2400
          %v2566 = vpack.c.b16 %v2411, %v2406
          %v2567 = vpack.c.b16 %v2412, %v2407
          %v2568 = vpack.c.b16 %v2413, %v2408
          %v2569 = vpack.c.b16 %v2414, %v2409
          %v2570 = vpack.c.b16 %v2415, %v2410
          %v2571 = vpack.c.b16 %v2421, %v2416
          %v2572 = vpack.c.b16 %v2422, %v2417
          %v2573 = vpack.c.b16 %v2423, %v2418
          %v2574 = vpack.c.b16 %v2424, %v2419
          %v2575 = vpack.c.b16 %v2425, %v2420
          %v2576 = vpack.c.b16 %v2431, %v2426
          %v2577 = vpack.c.b16 %v2432, %v2427
          %v2578 = vpack.c.b16 %v2433, %v2428
          %v2579 = vpack.c.b16 %v2434, %v2429
          %v2580 = vpack.c.b16 %v2435, %v2430
          %v2581 = vpack.c.b16 %v2441, %v2436
          %v2582 = vpack.c.b16 %v2442, %v2437
          %v2583 = vpack.c.b16 %v2443, %v2438
          %v2584 = vpack.c.b16 %v2444, %v2439
          %v2585 = vpack.c.b16 %v2445, %v2440
          %v2586 = vpack.c.b16 %v2451, %v2446
          %v2587 = vpack.c.b16 %v2452, %v2447
          %v2588 = vpack.c.b16 %v2453, %v2448
          %v2589 = vpack.c.b16 %v2454, %v2449
          %v2590 = vpack.c.b16 %v2455, %v2450
          %v2591 = vpack.c.b16 %v2461, %v2456
          %v2592 = vpack.c.b16 %v2462, %v2457
          %v2593 = vpack.c.b16 %v2463, %v2458
          %v2594 = vpack.c.b16 %v2464, %v2459
          %v2595 = vpack.c.b16 %v2465, %v2460
          %v2596 = vpack.c.b16 %v2471, %v2466
          %v2597 = vpack.c.b16 %v2472, %v2467
          %v2598 = vpack.c.b16 %v2473, %v2468
          %v2599 = vpack.c.b16 %v2474, %v2469
          %v2600 = vpack.c.b16 %v2475, %v2470
          %v2601 = vpack.c.b16 %v2481, %v2476
          %v2602 = vpack.c.b16 %v2482, %v2477
          %v2603 = vpack.c.b16 %v2483, %v2478
          %v2604 = vpack.c.b16 %v2484, %v2479
          %v2605 = vpack.c.b16 %v2485, %v2480
          %v2606 = vpack.c.b16 %v2491, %v2486
          %v2607 = vpack.c.b16 %v2492, %v2487
          %v2608 = vpack.c.b16 %v2493, %v2488
          %v2609 = vpack.c.b16 %v2494, %v2489
          %v2610 = vpack.c.b16 %v2495, %v2490
          %v2611 = vpack.c.b16 %v2501, %v2496
          %v2612 = vpack.c.b16 %v2502, %v2497
          %v2613 = vpack.c.b16 %v2503, %v2498
          %v2614 = vpack.c.b16 %v2504, %v2499
          %v2615 = vpack.c.b16 %v2505, %v2500
          %v2616 = vpack.c.b16 %v2511, %v2506
          %v2617 = vpack.c.b16 %v2512, %v2507
          %v2618 = vpack.c.b16 %v2513, %v2508
          %v2619 = vpack.c.b16 %v2514, %v2509
          %v2620 = vpack.c.b16 %v2515, %v2510
          %v2621 = vpack.c.b16 %v2521, %v2516
          %v2622 = vpack.c.b16 %v2522, %v2517
          %v2623 = vpack.c.b16 %v2523, %v2518
          %v2624 = vpack.c.b16 %v2524, %v2519
          %v2625 = vpack.c.b16 %v2525, %v2520
          %v2727 = vsel %vm1913, %v2201, 0
          %v2730 = vsel %vm1913, %v2200, 0
          %2732 = vmatpush.bf16.msra.mxu0 %v2561
          %2733 = vmatpush.bf16.msra.mxu0 %v2556
          %2734 = vmatpush.bf16.msra.mxu0 %v2551
          %2735 = vmatpush.bf16.msra.mxu0 %v2546
          %2736 = vmatpush.bf16.msra.mxu0 %v2541
          %2737 = vmatpush.bf16.msra.mxu0 %v2536
          %2738 = vmatpush.bf16.msra.mxu0 %v2531
          %2739 = vmatpush.bf16.msra.mxu0 %v2526
          %2740 = vmatmul.bf16.gmra.mxu0 %v2195
          %v2741 = vpop.f32.mrf.mxu0
          %v2742 = vadd.f32 0.0, %v2741
          %v2743 = vpop.f32.mrf.mxu0
          %v2744 = vadd.f32 0.0, %v2743
          %2745 = vmatmul.bf16.gmra.mxu0 %v2194
          %v2746 = vpop.f32.mrf.mxu0
          %v2747 = vadd.f32 0.0, %v2746
          %v2748 = vpop.f32.mrf.mxu0
          %2749 = vdwg.mxu0
          %2750 = vmatpush.bf16.msra.mxu0 %v2601
          %2751 = vmatpush.bf16.msra.mxu0 %v2596
          %2752 = vmatpush.bf16.msra.mxu0 %v2591
          %2753 = vmatpush.bf16.msra.mxu0 %v2586
          %2754 = vmatpush.bf16.msra.mxu0 %v2581
          %2755 = vmatpush.bf16.msra.mxu0 %v2576
          %2756 = vmatpush.bf16.msra.mxu0 %v2571
          %2757 = vmatpush.bf16.msra.mxu0 %v2566
          %2758 = vmatmul.bf16.gmra.mxu0 %v2198
          %v2759 = vpop.f32.mrf.mxu0
          %v2760 = vadd.f32 %v2742, %v2759
          %v2761 = vpop.f32.mrf.mxu0
          %v2762 = vadd.f32 %v2744, %v2761
          %2763 = vmatmul.bf16.gmra.mxu0 %v2197
          %v2764 = vpop.f32.mrf.mxu0
          %v2765 = vadd.f32 %v2747, %v2764
          %v2766 = vpop.f32.mrf.mxu0
          %2767 = vdwg.mxu0
          %2768 = vmatpush.bf16.msra.mxu0 0
          %2769 = vmatpush.bf16.msra.mxu0 0
          %2770 = vmatpush.bf16.msra.mxu0 0
          %2771 = vmatpush.bf16.msra.mxu0 0
          %2772 = vmatpush.bf16.msra.mxu0 %v2621
          %2773 = vmatpush.bf16.msra.mxu0 %v2616
          %2774 = vmatpush.bf16.msra.mxu0 %v2611
          %2775 = vmatpush.bf16.msra.mxu0 %v2606
          %2776 = vmatmul.bf16.gmra.mxu0 %v2727
          %v2777 = vpop.f32.mrf.mxu0
          %v2778 = vadd.f32 %v2760, %v2777
          %v2779 = vpop.f32.mrf.mxu0
          %v2780 = vadd.f32 %v2762, %v2779
          %2781 = vmatmul.bf16.gmra.mxu0 %v2730
          %v2782 = vpop.f32.mrf.mxu0
          %v2783 = vadd.f32 %v2765, %v2782
          %v2784 = vpop.f32.mrf.mxu0
          %2785 = vdwg.mxu0
          %2786 = vmatpush.bf16.msra.mxu0 %v2562
          %2787 = vmatpush.bf16.msra.mxu0 %v2557
          %2788 = vmatpush.bf16.msra.mxu0 %v2552
          %2789 = vmatpush.bf16.msra.mxu0 %v2547
          %2790 = vmatpush.bf16.msra.mxu0 %v2542
          %2791 = vmatpush.bf16.msra.mxu0 %v2537
          %2792 = vmatpush.bf16.msra.mxu0 %v2532
          %2793 = vmatpush.bf16.msra.mxu0 %v2527
          %2794 = vmatmul.bf16.gmra.mxu0 %v2195
          %v2795 = vpop.f32.mrf.mxu0
          %v2796 = vadd.f32 0.0, %v2795
          %v2797 = vpop.f32.mrf.mxu0
          %v2798 = vadd.f32 0.0, %v2797
          %2799 = vmatmul.bf16.gmra.mxu0 %v2194
          %v2800 = vpop.f32.mrf.mxu0
          %v2801 = vadd.f32 0.0, %v2800
          %v2802 = vpop.f32.mrf.mxu0
          %2803 = vdwg.mxu0
          %2804 = vmatpush.bf16.msra.mxu0 %v2602
          %2805 = vmatpush.bf16.msra.mxu0 %v2597
          %2806 = vmatpush.bf16.msra.mxu0 %v2592
          %2807 = vmatpush.bf16.msra.mxu0 %v2587
          %2808 = vmatpush.bf16.msra.mxu0 %v2582
          %2809 = vmatpush.bf16.msra.mxu0 %v2577
          %2810 = vmatpush.bf16.msra.mxu0 %v2572
          %2811 = vmatpush.bf16.msra.mxu0 %v2567
          %2812 = vmatmul.bf16.gmra.mxu0 %v2198
          %v2813 = vpop.f32.mrf.mxu0
          %v2814 = vadd.f32 %v2796, %v2813
          %v2815 = vpop.f32.mrf.mxu0
          %v2816 = vadd.f32 %v2798, %v2815
          %2817 = vmatmul.bf16.gmra.mxu0 %v2197
          %v2818 = vpop.f32.mrf.mxu0
          %v2819 = vadd.f32 %v2801, %v2818
          %v2820 = vpop.f32.mrf.mxu0
          %2821 = vdwg.mxu0
          %2822 = vmatpush.bf16.msra.mxu0 0
          %2823 = vmatpush.bf16.msra.mxu0 0
          %2824 = vmatpush.bf16.msra.mxu0 0
          %2825 = vmatpush.bf16.msra.mxu0 0
          %2826 = vmatpush.bf16.msra.mxu0 %v2622
          %2827 = vmatpush.bf16.msra.mxu0 %v2617
          %2828 = vmatpush.bf16.msra.mxu0 %v2612
          %2829 = vmatpush.bf16.msra.mxu0 %v2607
          %2830 = vmatmul.bf16.gmra.mxu0 %v2727
          %v2831 = vpop.f32.mrf.mxu0
          %v2832 = vadd.f32 %v2814, %v2831
          %v2833 = vpop.f32.mrf.mxu0
          %v2834 = vadd.f32 %v2816, %v2833
          %2835 = vmatmul.bf16.gmra.mxu0 %v2730
          %v2836 = vpop.f32.mrf.mxu0
          %v2837 = vadd.f32 %v2819, %v2836
          %v2838 = vpop.f32.mrf.mxu0
          %2839 = vdwg.mxu0
          %2840 = vmatpush.bf16.msra.mxu0 %v2563
          %2841 = vmatpush.bf16.msra.mxu0 %v2558
          %2842 = vmatpush.bf16.msra.mxu0 %v2553
          %2843 = vmatpush.bf16.msra.mxu0 %v2548
          %2844 = vmatpush.bf16.msra.mxu0 %v2543
          %2845 = vmatpush.bf16.msra.mxu0 %v2538
          %2846 = vmatpush.bf16.msra.mxu0 %v2533
          %2847 = vmatpush.bf16.msra.mxu0 %v2528
          %2848 = vmatmul.bf16.gmra.mxu0 %v2195
          %v2849 = vpop.f32.mrf.mxu0
          %v2850 = vadd.f32 0.0, %v2849
          %v2851 = vpop.f32.mrf.mxu0
          %v2852 = vadd.f32 0.0, %v2851
          %2853 = vmatmul.bf16.gmra.mxu0 %v2194
          %v2854 = vpop.f32.mrf.mxu0
          %v2855 = vadd.f32 0.0, %v2854
          %v2856 = vpop.f32.mrf.mxu0
          %2857 = vdwg.mxu0
          %2858 = vmatpush.bf16.msra.mxu0 %v2603
          %2859 = vmatpush.bf16.msra.mxu0 %v2598
          %2860 = vmatpush.bf16.msra.mxu0 %v2593
          %2861 = vmatpush.bf16.msra.mxu0 %v2588
          %2862 = vmatpush.bf16.msra.mxu0 %v2583
          %2863 = vmatpush.bf16.msra.mxu0 %v2578
          %2864 = vmatpush.bf16.msra.mxu0 %v2573
          %2865 = vmatpush.bf16.msra.mxu0 %v2568
          %2866 = vmatmul.bf16.gmra.mxu0 %v2198
          %v2867 = vpop.f32.mrf.mxu0
          %v2868 = vadd.f32 %v2850, %v2867
          %v2869 = vpop.f32.mrf.mxu0
          %v2870 = vadd.f32 %v2852, %v2869
          %2871 = vmatmul.bf16.gmra.mxu0 %v2197
          %v2872 = vpop.f32.mrf.mxu0
          %v2873 = vadd.f32 %v2855, %v2872
          %v2874 = vpop.f32.mrf.mxu0
          %2875 = vdwg.mxu0
          %2876 = vmatpush.bf16.msra.mxu0 0
          %2877 = vmatpush.bf16.msra.mxu0 0
          %2878 = vmatpush.bf16.msra.mxu0 0
          %2879 = vmatpush.bf16.msra.mxu0 0
          %2880 = vmatpush.bf16.msra.mxu0 %v2623
          %2881 = vmatpush.bf16.msra.mxu0 %v2618
          %2882 = vmatpush.bf16.msra.mxu0 %v2613
          %2883 = vmatpush.bf16.msra.mxu0 %v2608
          %2884 = vmatmul.bf16.gmra.mxu0 %v2727
          %v2885 = vpop.f32.mrf.mxu0
          %v2886 = vadd.f32 %v2868, %v2885
          %v2887 = vpop.f32.mrf.mxu0
          %v2888 = vadd.f32 %v2870, %v2887
          %2889 = vmatmul.bf16.gmra.mxu0 %v2730
          %v2890 = vpop.f32.mrf.mxu0
          %v2891 = vadd.f32 %v2873, %v2890
          %v2892 = vpop.f32.mrf.mxu0
          %2893 = vdwg.mxu0
          %2894 = vmatpush.bf16.msra.mxu0 %v2564
          %2895 = vmatpush.bf16.msra.mxu0 %v2559
          %2896 = vmatpush.bf16.msra.mxu0 %v2554
          %2897 = vmatpush.bf16.msra.mxu0 %v2549
          %2898 = vmatpush.bf16.msra.mxu0 %v2544
          %2899 = vmatpush.bf16.msra.mxu0 %v2539
          %2900 = vmatpush.bf16.msra.mxu0 %v2534
          %2901 = vmatpush.bf16.msra.mxu0 %v2529
          %2902 = vmatmul.bf16.gmra.mxu0 %v2195
          %v2903 = vpop.f32.mrf.mxu0
          %v2904 = vadd.f32 0.0, %v2903
          %v2905 = vpop.f32.mrf.mxu0
          %v2906 = vadd.f32 0.0, %v2905
          %2907 = vmatmul.bf16.gmra.mxu0 %v2194
          %v2908 = vpop.f32.mrf.mxu0
          %v2909 = vadd.f32 0.0, %v2908
          %v2910 = vpop.f32.mrf.mxu0
          %2911 = vdwg.mxu0
          %2912 = vmatpush.bf16.msra.mxu0 %v2604
          %2913 = vmatpush.bf16.msra.mxu0 %v2599
          %2914 = vmatpush.bf16.msra.mxu0 %v2594
          %2915 = vmatpush.bf16.msra.mxu0 %v2589
          %2916 = vmatpush.bf16.msra.mxu0 %v2584
          %2917 = vmatpush.bf16.msra.mxu0 %v2579
          %2918 = vmatpush.bf16.msra.mxu0 %v2574
          %2919 = vmatpush.bf16.msra.mxu0 %v2569
          %2920 = vmatmul.bf16.gmra.mxu0 %v2198
          %v2921 = vpop.f32.mrf.mxu0
          %v2922 = vadd.f32 %v2904, %v2921
          %v2923 = vpop.f32.mrf.mxu0
          %v2924 = vadd.f32 %v2906, %v2923
          %2925 = vmatmul.bf16.gmra.mxu0 %v2197
          %v2926 = vpop.f32.mrf.mxu0
          %v2927 = vadd.f32 %v2909, %v2926
          %v2928 = vpop.f32.mrf.mxu0
          %2929 = vdwg.mxu0
          %2930 = vmatpush.bf16.msra.mxu0 0
          %2931 = vmatpush.bf16.msra.mxu0 0
          %2932 = vmatpush.bf16.msra.mxu0 0
          %2933 = vmatpush.bf16.msra.mxu0 0
          %2934 = vmatpush.bf16.msra.mxu0 %v2624
          %2935 = vmatpush.bf16.msra.mxu0 %v2619
          %2936 = vmatpush.bf16.msra.mxu0 %v2614
          %2937 = vmatpush.bf16.msra.mxu0 %v2609
          %2938 = vmatmul.bf16.gmra.mxu0 %v2727
          %v2939 = vpop.f32.mrf.mxu0
          %v2940 = vadd.f32 %v2922, %v2939
          %v2941 = vpop.f32.mrf.mxu0
          %v2942 = vadd.f32 %v2924, %v2941
          %2943 = vmatmul.bf16.gmra.mxu0 %v2730
          %v2944 = vpop.f32.mrf.mxu0
          %v2945 = vadd.f32 %v2927, %v2944
          %v2946 = vpop.f32.mrf.mxu0
          %2947 = vdwg.mxu0
          %2948 = vmatpush.bf16.msra.mxu0 %v2565
          %2949 = vmatpush.bf16.msra.mxu0 %v2560
          %2950 = vmatpush.bf16.msra.mxu0 %v2555
          %2951 = vmatpush.bf16.msra.mxu0 %v2550
          %2952 = vmatpush.bf16.msra.mxu0 %v2545
          %2953 = vmatpush.bf16.msra.mxu0 %v2540
          %2954 = vmatpush.bf16.msra.mxu0 %v2535
          %2955 = vmatpush.bf16.msra.mxu0 %v2530
          %2956 = vmatmul.bf16.gmra.mxu0 %v2195
          %v2957 = vpop.f32.mrf.mxu0
          %v2958 = vadd.f32 0.0, %v2957
          %v2959 = vpop.f32.mrf.mxu0
          %v2960 = vadd.f32 0.0, %v2959
          %2961 = vmatmul.bf16.gmra.mxu0 %v2194
          %v2962 = vpop.f32.mrf.mxu0
          %v2963 = vadd.f32 0.0, %v2962
          %v2964 = vpop.f32.mrf.mxu0
          %2965 = vdwg.mxu0
          %2966 = vmatpush.bf16.msra.mxu0 %v2605
          %2967 = vmatpush.bf16.msra.mxu0 %v2600
          %2968 = vmatpush.bf16.msra.mxu0 %v2595
          %2969 = vmatpush.bf16.msra.mxu0 %v2590
          %2970 = vmatpush.bf16.msra.mxu0 %v2585
          %2971 = vmatpush.bf16.msra.mxu0 %v2580
          %2972 = vmatpush.bf16.msra.mxu0 %v2575
          %2973 = vmatpush.bf16.msra.mxu0 %v2570
          %2974 = vmatmul.bf16.gmra.mxu0 %v2198
          %v2975 = vpop.f32.mrf.mxu0
          %v2976 = vadd.f32 %v2958, %v2975
          %v2977 = vpop.f32.mrf.mxu0
          %v2978 = vadd.f32 %v2960, %v2977
          %2979 = vmatmul.bf16.gmra.mxu0 %v2197
          %v2980 = vpop.f32.mrf.mxu0
          %v2981 = vadd.f32 %v2963, %v2980
          %v2982 = vpop.f32.mrf.mxu0
          %2983 = vdwg.mxu0
          %2984 = vmatpush.bf16.msra.mxu0 0
          %2985 = vmatpush.bf16.msra.mxu0 0
          %2986 = vmatpush.bf16.msra.mxu0 0
          %2987 = vmatpush.bf16.msra.mxu0 0
          %2988 = vmatpush.bf16.msra.mxu0 %v2625
          %2989 = vmatpush.bf16.msra.mxu0 %v2620
          %2990 = vmatpush.bf16.msra.mxu0 %v2615
          %2991 = vmatpush.bf16.msra.mxu0 %v2610
          %2992 = vmatmul.bf16.gmra.mxu0 %v2727
          %v2993 = vpop.f32.mrf.mxu0
          %v2994 = vadd.f32 %v2976, %v2993
          %v2995 = vpop.f32.mrf.mxu0
          %v2996 = vadd.f32 %v2978, %v2995
          %2997 = vmatmul.bf16.gmra.mxu0 %v2730
          %v2998 = vpop.f32.mrf.mxu0
          %v2999 = vadd.f32 %v2981, %v2998
          %v3000 = vpop.f32.mrf.mxu0
          %3001 = vdwg.mxu0
          %v3122 = vunpack.c.l.b16 %v1934
          %v3123 = vunpack.c.h.b16 %v1934
          %v3124 = vunpack.c.l.b16 %v1935
          %v3125 = vunpack.c.h.b16 %v1935
          %v3126 = vunpack.c.l.b16 %v1936
          %v3127 = vunpack.c.l.b16 %v1937
          %v3128 = vunpack.c.h.b16 %v1937
          %v3129 = vunpack.c.l.b16 %v1938
          %v3130 = vunpack.c.h.b16 %v1938
          %v3131 = vunpack.c.l.b16 %v1939
          %v3132 = vunpack.c.l.b16 %v1940
          %v3133 = vunpack.c.h.b16 %v1940
          %v3134 = vunpack.c.l.b16 %v1941
          %v3135 = vunpack.c.h.b16 %v1941
          %v3136 = vunpack.c.l.b16 %v1942
          %v3137 = vunpack.c.l.b16 %v1943
          %v3138 = vunpack.c.h.b16 %v1943
          %v3139 = vunpack.c.l.b16 %v1944
          %v3140 = vunpack.c.h.b16 %v1944
          %v3141 = vunpack.c.l.b16 %v1945
          %v3142 = vunpack.c.l.b16 %v1946
          %v3143 = vunpack.c.h.b16 %v1946
          %v3144 = vunpack.c.l.b16 %v1947
          %v3145 = vunpack.c.h.b16 %v1947
          %v3146 = vunpack.c.l.b16 %v1948
          %v3147 = vunpack.c.l.b16 %v1949
          %v3148 = vunpack.c.h.b16 %v1949
          %v3149 = vunpack.c.l.b16 %v1950
          %v3150 = vunpack.c.h.b16 %v1950
          %v3151 = vunpack.c.l.b16 %v1951
          %v3152 = vunpack.c.l.b16 %v1952
          %v3153 = vunpack.c.h.b16 %v1952
          %v3154 = vunpack.c.l.b16 %v1953
          %v3155 = vunpack.c.h.b16 %v1953
          %v3156 = vunpack.c.l.b16 %v1954
          %v3157 = vunpack.c.l.b16 %v1955
          %v3158 = vunpack.c.h.b16 %v1955
          %v3159 = vunpack.c.l.b16 %v1956
          %v3160 = vunpack.c.h.b16 %v1956
          %v3161 = vunpack.c.l.b16 %v1957
          %v3162 = vunpack.c.l.b16 %v1958
          %v3163 = vunpack.c.h.b16 %v1958
          %v3164 = vunpack.c.l.b16 %v1959
          %v3165 = vunpack.c.h.b16 %v1959
          %v3166 = vunpack.c.l.b16 %v1960
          %v3167 = vunpack.c.l.b16 %v1961
          %v3168 = vunpack.c.h.b16 %v1961
          %v3169 = vunpack.c.l.b16 %v1962
          %v3170 = vunpack.c.h.b16 %v1962
          %v3171 = vunpack.c.l.b16 %v1963
          %v3172 = vunpack.c.l.b16 %v1964
          %v3173 = vunpack.c.h.b16 %v1964
          %v3174 = vunpack.c.l.b16 %v1965
          %v3175 = vunpack.c.h.b16 %v1965
          %v3176 = vunpack.c.l.b16 %v1966
          %v3177 = vunpack.c.l.b16 %v1967
          %v3178 = vunpack.c.h.b16 %v1967
          %v3179 = vunpack.c.l.b16 %v1968
          %v3180 = vunpack.c.h.b16 %v1968
          %v3181 = vunpack.c.l.b16 %v1969
          %v3182 = vunpack.c.l.b16 %v1970
          %v3183 = vunpack.c.h.b16 %v1970
          %v3184 = vunpack.c.l.b16 %v1971
          %v3185 = vunpack.c.h.b16 %v1971
          %v3186 = vunpack.c.l.b16 %v1972
          %v3187 = vunpack.c.l.b16 %v1973
          %v3188 = vunpack.c.h.b16 %v1973
          %v3189 = vunpack.c.l.b16 %v1974
          %v3190 = vunpack.c.h.b16 %v1974
          %v3191 = vunpack.c.l.b16 %v1975
          %v3192 = vunpack.c.l.b16 %v1976
          %v3193 = vunpack.c.h.b16 %v1976
          %v3194 = vunpack.c.l.b16 %v1977
          %v3195 = vunpack.c.h.b16 %v1977
          %v3196 = vunpack.c.l.b16 %v1978
          %v3197 = vunpack.c.l.b16 %v1979
          %v3198 = vunpack.c.h.b16 %v1979
          %v3199 = vunpack.c.l.b16 %v1980
          %v3200 = vunpack.c.h.b16 %v1980
          %v3201 = vunpack.c.l.b16 %v1981
          %v3202 = vunpack.c.l.b16 %v1982
          %v3203 = vunpack.c.h.b16 %v1982
          %v3204 = vunpack.c.l.b16 %v1983
          %v3205 = vunpack.c.h.b16 %v1983
          %v3206 = vunpack.c.l.b16 %v1984
          %v3207 = vunpack.c.l.b16 %v1985
          %v3208 = vunpack.c.h.b16 %v1985
          %v3209 = vunpack.c.l.b16 %v1986
          %v3210 = vunpack.c.h.b16 %v1986
          %v3211 = vunpack.c.l.b16 %v1987
          %v3212 = vunpack.c.l.b16 %v1988
          %v3213 = vunpack.c.h.b16 %v1988
          %v3214 = vunpack.c.l.b16 %v1989
          %v3215 = vunpack.c.h.b16 %v1989
          %v3216 = vunpack.c.l.b16 %v1990
          %v3217 = vunpack.c.l.b16 %v1991
          %v3218 = vunpack.c.h.b16 %v1991
          %v3219 = vunpack.c.l.b16 %v1992
          %v3220 = vunpack.c.h.b16 %v1992
          %v3221 = vunpack.c.l.b16 %v1993
          %v3222 = vunpack.c.l.b16 %v1994
          %v3223 = vunpack.c.h.b16 %v1994
          %v3224 = vunpack.c.l.b16 %v1995
          %v3225 = vunpack.c.h.b16 %v1995
          %v3226 = vunpack.c.l.b16 %v1996
          %v3227 = vunpack.c.l.b16 %v1997
          %v3228 = vunpack.c.h.b16 %v1997
          %v3229 = vunpack.c.l.b16 %v1998
          %v3230 = vunpack.c.h.b16 %v1998
          %v3231 = vunpack.c.l.b16 %v1999
          %v3232 = vunpack.c.l.b16 %v2000
          %v3233 = vunpack.c.h.b16 %v2000
          %v3234 = vunpack.c.l.b16 %v2001
          %v3235 = vunpack.c.h.b16 %v2001
          %v3236 = vunpack.c.l.b16 %v2002
          %v3237 = vunpack.c.l.b16 %v2003
          %v3238 = vunpack.c.h.b16 %v2003
          %v3239 = vunpack.c.l.b16 %v2004
          %v3240 = vunpack.c.h.b16 %v2004
          %v3241 = vunpack.c.l.b16 %v2005
          %v3242 = vunpack.c.l.b16 %v2006
          %v3243 = vunpack.c.h.b16 %v2006
          %v3244 = vunpack.c.l.b16 %v2007
          %v3245 = vunpack.c.h.b16 %v2007
          %v3246 = vunpack.c.l.b16 %v2008
          %v3247 = vunpack.c.l.b16 %v2009
          %v3248 = vunpack.c.h.b16 %v2009
          %v3249 = vunpack.c.l.b16 %v2010
          %v3250 = vunpack.c.h.b16 %v2010
          %v3251 = vunpack.c.l.b16 %v2011
          %v3252 = vunpack.c.l.b16 %v2012
          %v3253 = vunpack.c.h.b16 %v2012
          %v3254 = vunpack.c.l.b16 %v2013
          %v3255 = vunpack.c.h.b16 %v2013
          %v3256 = vunpack.c.l.b16 %v2014
          %v3257 = vunpack.c.l.b16 %v2015
          %v3258 = vunpack.c.h.b16 %v2015
          %v3259 = vunpack.c.l.b16 %v2016
          %v3260 = vunpack.c.h.b16 %v2016
          %v3261 = vunpack.c.l.b16 %v2017
          %v3262 = vunpack.c.l.b16 %v2018
          %v3263 = vunpack.c.h.b16 %v2018
          %v3264 = vunpack.c.l.b16 %v2019
          %v3265 = vunpack.c.h.b16 %v2019
          %v3266 = vunpack.c.l.b16 %v2020
          %v3267 = vunpack.c.l.b16 %v2021
          %v3268 = vunpack.c.h.b16 %v2021
          %v3269 = vunpack.c.l.b16 %v2022
          %v3270 = vunpack.c.h.b16 %v2022
          %v3271 = vunpack.c.l.b16 %v2023
          %v3272 = vunpack.c.l.b16 %v2024
          %v3273 = vunpack.c.h.b16 %v2024
          %v3274 = vunpack.c.l.b16 %v2025
          %v3275 = vunpack.c.h.b16 %v2025
          %v3276 = vunpack.c.l.b16 %v2026
          %v3277 = vunpack.c.l.b16 %v2027
          %v3278 = vunpack.c.h.b16 %v2027
          %v3279 = vunpack.c.l.b16 %v2028
          %v3280 = vunpack.c.h.b16 %v2028
          %v3281 = vunpack.c.l.b16 %v2029
          %v3282 = vunpack.c.l.b16 %v2030
          %v3283 = vunpack.c.h.b16 %v2030
          %v3284 = vunpack.c.l.b16 %v2031
          %v3285 = vunpack.c.h.b16 %v2031
          %v3286 = vunpack.c.l.b16 %v2032
          %v3287 = vunpack.c.l.b16 %v2033
          %v3288 = vunpack.c.h.b16 %v2033
          %v3289 = vunpack.c.l.b16 %v2034
          %v3290 = vunpack.c.h.b16 %v2034
          %v3291 = vunpack.c.l.b16 %v2035
          %v3292 = vunpack.c.l.b16 %v2036
          %v3293 = vunpack.c.h.b16 %v2036
          %v3294 = vunpack.c.l.b16 %v2037
          %v3295 = vunpack.c.h.b16 %v2037
          %v3296 = vunpack.c.l.b16 %v2038
          %v3297 = vunpack.c.l.b16 %v2039
          %v3298 = vunpack.c.h.b16 %v2039
          %v3299 = vunpack.c.l.b16 %v2040
          %v3300 = vunpack.c.h.b16 %v2040
          %v3301 = vunpack.c.l.b16 %v2041
          %v3302 = vunpack.c.l.b16 %v2042
          %v3303 = vunpack.c.h.b16 %v2042
          %v3304 = vunpack.c.l.b16 %v2043
          %v3305 = vunpack.c.h.b16 %v2043
          %v3306 = vunpack.c.l.b16 %v2044
          %v3307 = vunpack.c.l.b16 %v2045
          %v3308 = vunpack.c.h.b16 %v2045
          %v3309 = vunpack.c.l.b16 %v2046
          %v3310 = vunpack.c.h.b16 %v2046
          %v3311 = vunpack.c.l.b16 %v2047
          %v3312 = vunpack.c.l.b16 %v2048
          %v3313 = vunpack.c.h.b16 %v2048
          %v3314 = vunpack.c.l.b16 %v2049
          %v3315 = vunpack.c.h.b16 %v2049
          %v3316 = vunpack.c.l.b16 %v2050
          %v3317 = vunpack.c.l.b16 %v2051
          %v3318 = vunpack.c.h.b16 %v2051
          %v3319 = vunpack.c.l.b16 %v2052
          %v3320 = vunpack.c.h.b16 %v2052
          %v3321 = vunpack.c.l.b16 %v2053
          %v3322 = vpack.c.b16 %v3127, %v3122
          %v3323 = vpack.c.b16 %v3128, %v3123
          %v3324 = vpack.c.b16 %v3129, %v3124
          %v3325 = vpack.c.b16 %v3130, %v3125
          %v3326 = vpack.c.b16 %v3131, %v3126
          %v3327 = vpack.c.b16 %v3137, %v3132
          %v3328 = vpack.c.b16 %v3138, %v3133
          %v3329 = vpack.c.b16 %v3139, %v3134
          %v3330 = vpack.c.b16 %v3140, %v3135
          %v3331 = vpack.c.b16 %v3141, %v3136
          %v3332 = vpack.c.b16 %v3147, %v3142
          %v3333 = vpack.c.b16 %v3148, %v3143
          %v3334 = vpack.c.b16 %v3149, %v3144
          %v3335 = vpack.c.b16 %v3150, %v3145
          %v3336 = vpack.c.b16 %v3151, %v3146
          %v3337 = vpack.c.b16 %v3157, %v3152
          %v3338 = vpack.c.b16 %v3158, %v3153
          %v3339 = vpack.c.b16 %v3159, %v3154
          %v3340 = vpack.c.b16 %v3160, %v3155
          %v3341 = vpack.c.b16 %v3161, %v3156
          %v3342 = vpack.c.b16 %v3167, %v3162
          %v3343 = vpack.c.b16 %v3168, %v3163
          %v3344 = vpack.c.b16 %v3169, %v3164
          %v3345 = vpack.c.b16 %v3170, %v3165
          %v3346 = vpack.c.b16 %v3171, %v3166
          %v3347 = vpack.c.b16 %v3177, %v3172
          %v3348 = vpack.c.b16 %v3178, %v3173
          %v3349 = vpack.c.b16 %v3179, %v3174
          %v3350 = vpack.c.b16 %v3180, %v3175
          %v3351 = vpack.c.b16 %v3181, %v3176
          %v3352 = vpack.c.b16 %v3187, %v3182
          %v3353 = vpack.c.b16 %v3188, %v3183
          %v3354 = vpack.c.b16 %v3189, %v3184
          %v3355 = vpack.c.b16 %v3190, %v3185
          %v3356 = vpack.c.b16 %v3191, %v3186
          %v3357 = vpack.c.b16 %v3197, %v3192
          %v3358 = vpack.c.b16 %v3198, %v3193
          %v3359 = vpack.c.b16 %v3199, %v3194
          %v3360 = vpack.c.b16 %v3200, %v3195
          %v3361 = vpack.c.b16 %v3201, %v3196
          %v3362 = vpack.c.b16 %v3207, %v3202
          %v3363 = vpack.c.b16 %v3208, %v3203
          %v3364 = vpack.c.b16 %v3209, %v3204
          %v3365 = vpack.c.b16 %v3210, %v3205
          %v3366 = vpack.c.b16 %v3211, %v3206
          %v3367 = vpack.c.b16 %v3217, %v3212
          %v3368 = vpack.c.b16 %v3218, %v3213
          %v3369 = vpack.c.b16 %v3219, %v3214
          %v3370 = vpack.c.b16 %v3220, %v3215
          %v3371 = vpack.c.b16 %v3221, %v3216
          %v3372 = vpack.c.b16 %v3227, %v3222
          %v3373 = vpack.c.b16 %v3228, %v3223
          %v3374 = vpack.c.b16 %v3229, %v3224
          %v3375 = vpack.c.b16 %v3230, %v3225
          %v3376 = vpack.c.b16 %v3231, %v3226
          %v3377 = vpack.c.b16 %v3237, %v3232
          %v3378 = vpack.c.b16 %v3238, %v3233
          %v3379 = vpack.c.b16 %v3239, %v3234
          %v3380 = vpack.c.b16 %v3240, %v3235
          %v3381 = vpack.c.b16 %v3241, %v3236
          %v3382 = vpack.c.b16 %v3247, %v3242
          %v3383 = vpack.c.b16 %v3248, %v3243
          %v3384 = vpack.c.b16 %v3249, %v3244
          %v3385 = vpack.c.b16 %v3250, %v3245
          %v3386 = vpack.c.b16 %v3251, %v3246
          %v3387 = vpack.c.b16 %v3257, %v3252
          %v3388 = vpack.c.b16 %v3258, %v3253
          %v3389 = vpack.c.b16 %v3259, %v3254
          %v3390 = vpack.c.b16 %v3260, %v3255
          %v3391 = vpack.c.b16 %v3261, %v3256
          %v3392 = vpack.c.b16 %v3267, %v3262
          %v3393 = vpack.c.b16 %v3268, %v3263
          %v3394 = vpack.c.b16 %v3269, %v3264
          %v3395 = vpack.c.b16 %v3270, %v3265
          %v3396 = vpack.c.b16 %v3271, %v3266
          %v3397 = vpack.c.b16 %v3277, %v3272
          %v3398 = vpack.c.b16 %v3278, %v3273
          %v3399 = vpack.c.b16 %v3279, %v3274
          %v3400 = vpack.c.b16 %v3280, %v3275
          %v3401 = vpack.c.b16 %v3281, %v3276
          %v3402 = vpack.c.b16 %v3287, %v3282
          %v3403 = vpack.c.b16 %v3288, %v3283
          %v3404 = vpack.c.b16 %v3289, %v3284
          %v3405 = vpack.c.b16 %v3290, %v3285
          %v3406 = vpack.c.b16 %v3291, %v3286
          %v3407 = vpack.c.b16 %v3297, %v3292
          %v3408 = vpack.c.b16 %v3298, %v3293
          %v3409 = vpack.c.b16 %v3299, %v3294
          %v3410 = vpack.c.b16 %v3300, %v3295
          %v3411 = vpack.c.b16 %v3301, %v3296
          %v3412 = vpack.c.b16 %v3307, %v3302
          %v3413 = vpack.c.b16 %v3308, %v3303
          %v3414 = vpack.c.b16 %v3309, %v3304
          %v3415 = vpack.c.b16 %v3310, %v3305
          %v3416 = vpack.c.b16 %v3311, %v3306
          %v3417 = vpack.c.b16 %v3317, %v3312
          %v3418 = vpack.c.b16 %v3318, %v3313
          %v3419 = vpack.c.b16 %v3319, %v3314
          %v3420 = vpack.c.b16 %v3320, %v3315
          %v3421 = vpack.c.b16 %v3321, %v3316
          %v3523 = vsel %vm1913, %v1930, 0
          %v3526 = vsel %vm1913, %v1933, 0
          %3528 = vmatpush.bf16.msra.mxu0 %v3357
          %3529 = vmatpush.bf16.msra.mxu0 %v3352
          %3530 = vmatpush.bf16.msra.mxu0 %v3347
          %3531 = vmatpush.bf16.msra.mxu0 %v3342
          %3532 = vmatpush.bf16.msra.mxu0 %v3337
          %3533 = vmatpush.bf16.msra.mxu0 %v3332
          %3534 = vmatpush.bf16.msra.mxu0 %v3327
          %3535 = vmatpush.bf16.msra.mxu0 %v3322
          %3536 = vmatmul.bf16.gmra.mxu0 %v1928
          %v3537 = vpop.f32.mrf.mxu0
          %v3538 = vadd.f32 %v2778, %v3537
          %v3539 = vpop.f32.mrf.mxu0
          %v3540 = vadd.f32 %v2780, %v3539
          %3541 = vmatmul.bf16.gmra.mxu0 %v1931
          %v3542 = vpop.f32.mrf.mxu0
          %v3543 = vadd.f32 %v2783, %v3542
          %v3544 = vpop.f32.mrf.mxu0
          %3545 = vdwg.mxu0
          %3546 = vmatpush.bf16.msra.mxu0 %v3397
          %3547 = vmatpush.bf16.msra.mxu0 %v3392
          %3548 = vmatpush.bf16.msra.mxu0 %v3387
          %3549 = vmatpush.bf16.msra.mxu0 %v3382
          %3550 = vmatpush.bf16.msra.mxu0 %v3377
          %3551 = vmatpush.bf16.msra.mxu0 %v3372
          %3552 = vmatpush.bf16.msra.mxu0 %v3367
          %3553 = vmatpush.bf16.msra.mxu0 %v3362
          %3554 = vmatmul.bf16.gmra.mxu0 %v1929
          %v3555 = vpop.f32.mrf.mxu0
          %v3556 = vadd.f32 %v3538, %v3555
          %v3557 = vpop.f32.mrf.mxu0
          %v3558 = vadd.f32 %v3540, %v3557
          %3559 = vmatmul.bf16.gmra.mxu0 %v1932
          %v3560 = vpop.f32.mrf.mxu0
          %v3561 = vadd.f32 %v3543, %v3560
          %v3562 = vpop.f32.mrf.mxu0
          %3563 = vdwg.mxu0
          %3564 = vmatpush.bf16.msra.mxu0 0
          %3565 = vmatpush.bf16.msra.mxu0 0
          %3566 = vmatpush.bf16.msra.mxu0 0
          %3567 = vmatpush.bf16.msra.mxu0 0
          %3568 = vmatpush.bf16.msra.mxu0 %v3417
          %3569 = vmatpush.bf16.msra.mxu0 %v3412
          %3570 = vmatpush.bf16.msra.mxu0 %v3407
          %3571 = vmatpush.bf16.msra.mxu0 %v3402
          %3572 = vmatmul.bf16.gmra.mxu0 %v3523
          %v3573 = vpop.f32.mrf.mxu0
          %v3574 = vadd.f32 %v3556, %v3573
          %v3575 = vpop.f32.mrf.mxu0
          %v3576 = vadd.f32 %v3558, %v3575
          %3577 = vmatmul.bf16.gmra.mxu0 %v3526
          %v3578 = vpop.f32.mrf.mxu0
          %v3579 = vadd.f32 %v3561, %v3578
          %v3580 = vpop.f32.mrf.mxu0
          %3581 = vdwg.mxu0
          %3582 = vmatpush.bf16.msra.mxu0 %v3358
          %3583 = vmatpush.bf16.msra.mxu0 %v3353
          %3584 = vmatpush.bf16.msra.mxu0 %v3348
          %3585 = vmatpush.bf16.msra.mxu0 %v3343
          %3586 = vmatpush.bf16.msra.mxu0 %v3338
          %3587 = vmatpush.bf16.msra.mxu0 %v3333
          %3588 = vmatpush.bf16.msra.mxu0 %v3328
          %3589 = vmatpush.bf16.msra.mxu0 %v3323
          %3590 = vmatmul.bf16.gmra.mxu0 %v1928
          %v3591 = vpop.f32.mrf.mxu0
          %v3592 = vadd.f32 %v2832, %v3591
          %v3593 = vpop.f32.mrf.mxu0
          %v3594 = vadd.f32 %v2834, %v3593
          %3595 = vmatmul.bf16.gmra.mxu0 %v1931
          %v3596 = vpop.f32.mrf.mxu0
          %v3597 = vadd.f32 %v2837, %v3596
          %v3598 = vpop.f32.mrf.mxu0
          %3599 = vdwg.mxu0
          %3600 = vmatpush.bf16.msra.mxu0 %v3398
          %3601 = vmatpush.bf16.msra.mxu0 %v3393
          %3602 = vmatpush.bf16.msra.mxu0 %v3388
          %3603 = vmatpush.bf16.msra.mxu0 %v3383
          %3604 = vmatpush.bf16.msra.mxu0 %v3378
          %3605 = vmatpush.bf16.msra.mxu0 %v3373
          %3606 = vmatpush.bf16.msra.mxu0 %v3368
          %3607 = vmatpush.bf16.msra.mxu0 %v3363
          %3608 = vmatmul.bf16.gmra.mxu0 %v1929
          %v3609 = vpop.f32.mrf.mxu0
          %v3610 = vadd.f32 %v3592, %v3609
          %v3611 = vpop.f32.mrf.mxu0
          %v3612 = vadd.f32 %v3594, %v3611
          %3613 = vmatmul.bf16.gmra.mxu0 %v1932
          %v3614 = vpop.f32.mrf.mxu0
          %v3615 = vadd.f32 %v3597, %v3614
          %v3616 = vpop.f32.mrf.mxu0
          %3617 = vdwg.mxu0
          %3618 = vmatpush.bf16.msra.mxu0 0
          %3619 = vmatpush.bf16.msra.mxu0 0
          %3620 = vmatpush.bf16.msra.mxu0 0
          %3621 = vmatpush.bf16.msra.mxu0 0
          %3622 = vmatpush.bf16.msra.mxu0 %v3418
          %3623 = vmatpush.bf16.msra.mxu0 %v3413
          %3624 = vmatpush.bf16.msra.mxu0 %v3408
          %3625 = vmatpush.bf16.msra.mxu0 %v3403
          %3626 = vmatmul.bf16.gmra.mxu0 %v3523
          %v3627 = vpop.f32.mrf.mxu0
          %v3628 = vadd.f32 %v3610, %v3627
          %v3629 = vpop.f32.mrf.mxu0
          %v3630 = vadd.f32 %v3612, %v3629
          %3631 = vmatmul.bf16.gmra.mxu0 %v3526
          %v3632 = vpop.f32.mrf.mxu0
          %v3633 = vadd.f32 %v3615, %v3632
          %v3634 = vpop.f32.mrf.mxu0
          %3635 = vdwg.mxu0
          %3636 = vmatpush.bf16.msra.mxu0 %v3359
          %3637 = vmatpush.bf16.msra.mxu0 %v3354
          %3638 = vmatpush.bf16.msra.mxu0 %v3349
          %3639 = vmatpush.bf16.msra.mxu0 %v3344
          %3640 = vmatpush.bf16.msra.mxu0 %v3339
          %3641 = vmatpush.bf16.msra.mxu0 %v3334
          %3642 = vmatpush.bf16.msra.mxu0 %v3329
          %3643 = vmatpush.bf16.msra.mxu0 %v3324
          %3644 = vmatmul.bf16.gmra.mxu0 %v1928
          %v3645 = vpop.f32.mrf.mxu0
          %v3646 = vadd.f32 %v2886, %v3645
          %v3647 = vpop.f32.mrf.mxu0
          %v3648 = vadd.f32 %v2888, %v3647
          %3649 = vmatmul.bf16.gmra.mxu0 %v1931
          %v3650 = vpop.f32.mrf.mxu0
          %v3651 = vadd.f32 %v2891, %v3650
          %v3652 = vpop.f32.mrf.mxu0
          %3653 = vdwg.mxu0
          %3654 = vmatpush.bf16.msra.mxu0 %v3399
          %3655 = vmatpush.bf16.msra.mxu0 %v3394
          %3656 = vmatpush.bf16.msra.mxu0 %v3389
          %3657 = vmatpush.bf16.msra.mxu0 %v3384
          %3658 = vmatpush.bf16.msra.mxu0 %v3379
          %3659 = vmatpush.bf16.msra.mxu0 %v3374
          %3660 = vmatpush.bf16.msra.mxu0 %v3369
          %3661 = vmatpush.bf16.msra.mxu0 %v3364
          %3662 = vmatmul.bf16.gmra.mxu0 %v1929
          %v3663 = vpop.f32.mrf.mxu0
          %v3664 = vadd.f32 %v3646, %v3663
          %v3665 = vpop.f32.mrf.mxu0
          %v3666 = vadd.f32 %v3648, %v3665
          %3667 = vmatmul.bf16.gmra.mxu0 %v1932
          %v3668 = vpop.f32.mrf.mxu0
          %v3669 = vadd.f32 %v3651, %v3668
          %v3670 = vpop.f32.mrf.mxu0
          %3671 = vdwg.mxu0
          %3672 = vmatpush.bf16.msra.mxu0 0
          %3673 = vmatpush.bf16.msra.mxu0 0
          %3674 = vmatpush.bf16.msra.mxu0 0
          %3675 = vmatpush.bf16.msra.mxu0 0
          %3676 = vmatpush.bf16.msra.mxu0 %v3419
          %3677 = vmatpush.bf16.msra.mxu0 %v3414
          %3678 = vmatpush.bf16.msra.mxu0 %v3409
          %3679 = vmatpush.bf16.msra.mxu0 %v3404
          %3680 = vmatmul.bf16.gmra.mxu0 %v3523
          %v3681 = vpop.f32.mrf.mxu0
          %v3682 = vadd.f32 %v3664, %v3681
          %v3683 = vpop.f32.mrf.mxu0
          %v3684 = vadd.f32 %v3666, %v3683
          %3685 = vmatmul.bf16.gmra.mxu0 %v3526
          %v3686 = vpop.f32.mrf.mxu0
          %v3687 = vadd.f32 %v3669, %v3686
          %v3688 = vpop.f32.mrf.mxu0
          %3689 = vdwg.mxu0
          %3690 = vmatpush.bf16.msra.mxu0 %v3360
          %3691 = vmatpush.bf16.msra.mxu0 %v3355
          %3692 = vmatpush.bf16.msra.mxu0 %v3350
          %3693 = vmatpush.bf16.msra.mxu0 %v3345
          %3694 = vmatpush.bf16.msra.mxu0 %v3340
          %3695 = vmatpush.bf16.msra.mxu0 %v3335
          %3696 = vmatpush.bf16.msra.mxu0 %v3330
          %3697 = vmatpush.bf16.msra.mxu0 %v3325
          %3698 = vmatmul.bf16.gmra.mxu0 %v1928
          %v3699 = vpop.f32.mrf.mxu0
          %v3700 = vadd.f32 %v2940, %v3699
          %v3701 = vpop.f32.mrf.mxu0
          %v3702 = vadd.f32 %v2942, %v3701
          %3703 = vmatmul.bf16.gmra.mxu0 %v1931
          %v3704 = vpop.f32.mrf.mxu0
          %v3705 = vadd.f32 %v2945, %v3704
          %v3706 = vpop.f32.mrf.mxu0
          %3707 = vdwg.mxu0
          %3708 = vmatpush.bf16.msra.mxu0 %v3400
          %3709 = vmatpush.bf16.msra.mxu0 %v3395
          %3710 = vmatpush.bf16.msra.mxu0 %v3390
          %3711 = vmatpush.bf16.msra.mxu0 %v3385
          %3712 = vmatpush.bf16.msra.mxu0 %v3380
          %3713 = vmatpush.bf16.msra.mxu0 %v3375
          %3714 = vmatpush.bf16.msra.mxu0 %v3370
          %3715 = vmatpush.bf16.msra.mxu0 %v3365
          %3716 = vmatmul.bf16.gmra.mxu0 %v1929
          %v3717 = vpop.f32.mrf.mxu0
          %v3718 = vadd.f32 %v3700, %v3717
          %v3719 = vpop.f32.mrf.mxu0
          %v3720 = vadd.f32 %v3702, %v3719
          %3721 = vmatmul.bf16.gmra.mxu0 %v1932
          %v3722 = vpop.f32.mrf.mxu0
          %v3723 = vadd.f32 %v3705, %v3722
          %v3724 = vpop.f32.mrf.mxu0
          %3725 = vdwg.mxu0
          %3726 = vmatpush.bf16.msra.mxu0 0
          %3727 = vmatpush.bf16.msra.mxu0 0
          %3728 = vmatpush.bf16.msra.mxu0 0
          %3729 = vmatpush.bf16.msra.mxu0 0
          %3730 = vmatpush.bf16.msra.mxu0 %v3420
          %3731 = vmatpush.bf16.msra.mxu0 %v3415
          %3732 = vmatpush.bf16.msra.mxu0 %v3410
          %3733 = vmatpush.bf16.msra.mxu0 %v3405
          %3734 = vmatmul.bf16.gmra.mxu0 %v3523
          %v3735 = vpop.f32.mrf.mxu0
          %v3736 = vadd.f32 %v3718, %v3735
          %v3737 = vpop.f32.mrf.mxu0
          %v3738 = vadd.f32 %v3720, %v3737
          %3739 = vmatmul.bf16.gmra.mxu0 %v3526
          %v3740 = vpop.f32.mrf.mxu0
          %v3741 = vadd.f32 %v3723, %v3740
          %v3742 = vpop.f32.mrf.mxu0
          %3743 = vdwg.mxu0
          %3744 = vmatpush.bf16.msra.mxu0 %v3361
          %3745 = vmatpush.bf16.msra.mxu0 %v3356
          %3746 = vmatpush.bf16.msra.mxu0 %v3351
          %3747 = vmatpush.bf16.msra.mxu0 %v3346
          %3748 = vmatpush.bf16.msra.mxu0 %v3341
          %3749 = vmatpush.bf16.msra.mxu0 %v3336
          %3750 = vmatpush.bf16.msra.mxu0 %v3331
          %3751 = vmatpush.bf16.msra.mxu0 %v3326
          %3752 = vmatmul.bf16.gmra.mxu0 %v1928
          %v3753 = vpop.f32.mrf.mxu0
          %v3754 = vadd.f32 %v2994, %v3753
          %v3755 = vpop.f32.mrf.mxu0
          %v3756 = vadd.f32 %v2996, %v3755
          %3757 = vmatmul.bf16.gmra.mxu0 %v1931
          %v3758 = vpop.f32.mrf.mxu0
          %v3759 = vadd.f32 %v2999, %v3758
          %v3760 = vpop.f32.mrf.mxu0
          %3761 = vdwg.mxu0
          %3762 = vmatpush.bf16.msra.mxu0 %v3401
          %3763 = vmatpush.bf16.msra.mxu0 %v3396
          %3764 = vmatpush.bf16.msra.mxu0 %v3391
          %3765 = vmatpush.bf16.msra.mxu0 %v3386
          %3766 = vmatpush.bf16.msra.mxu0 %v3381
          %3767 = vmatpush.bf16.msra.mxu0 %v3376
          %3768 = vmatpush.bf16.msra.mxu0 %v3371
          %3769 = vmatpush.bf16.msra.mxu0 %v3366
          %3770 = vmatmul.bf16.gmra.mxu0 %v1929
          %v3771 = vpop.f32.mrf.mxu0
          %v3772 = vadd.f32 %v3754, %v3771
          %v3773 = vpop.f32.mrf.mxu0
          %v3774 = vadd.f32 %v3756, %v3773
          %3775 = vmatmul.bf16.gmra.mxu0 %v1932
          %v3776 = vpop.f32.mrf.mxu0
          %v3777 = vadd.f32 %v3759, %v3776
          %v3778 = vpop.f32.mrf.mxu0
          %3779 = vdwg.mxu0
          %3780 = vmatpush.bf16.msra.mxu0 0
          %3781 = vmatpush.bf16.msra.mxu0 0
          %3782 = vmatpush.bf16.msra.mxu0 0
          %3783 = vmatpush.bf16.msra.mxu0 0
          %3784 = vmatpush.bf16.msra.mxu0 %v3421
          %3785 = vmatpush.bf16.msra.mxu0 %v3416
          %3786 = vmatpush.bf16.msra.mxu0 %v3411
          %3787 = vmatpush.bf16.msra.mxu0 %v3406
          %3788 = vmatmul.bf16.gmra.mxu0 %v3523
          %v3789 = vpop.f32.mrf.mxu0
          %v3790 = vadd.f32 %v3772, %v3789
          %v3791 = vpop.f32.mrf.mxu0
          %v3792 = vadd.f32 %v3774, %v3791
          %3793 = vmatmul.bf16.gmra.mxu0 %v3526
          %v3794 = vpop.f32.mrf.mxu0
          %v3795 = vadd.f32 %v3777, %v3794
          %v3796 = vpop.f32.mrf.mxu0
          %3797 = vdwg.mxu0
          %v3798 = vld [vmem:[#allocation4] sm:$0xf0]
          %v3799 = vld [vmem:[#allocation4 + $0x8] sm:$0xf0]
          %v3800 = vld [vmem:[#allocation4 + $0x10] sm:$0xf0]
          %v3801 = vld [vmem:[#allocation4 + $0x30] sm:$0xff]
          %v3802 = vld [vmem:[#allocation4 + $0x38] sm:$0xff]
          %v3803 = vld [vmem:[#allocation4 + $0x40] sm:$0xff]
          %v3804 = vpack.c.bf16 %v1922, %v3798
          %v3805 = vpack.c.bf16 %v1923, %v3799
          %v3806 = vpack.c.bf16 %v1924, %v3800
          %v3807 = vpack.c.bf16 %v3801, %v3801
          %v3808 = vpack.c.bf16 %v3802, %v3802
          %v3809 = vpack.c.bf16 %v3803, %v3803
          %s3810 = scalar_lea.vmem [#allocation14], 1600
          %v3811 = vld [vmem:[%s3810] sm:$0xff]
          %v3812 = vld [vmem:[%s3810 + $0x8] sm:$0xff]
          %v3813 = vld [vmem:[%s3810 + $0x10] sm:$0xf]
          %v3814 = vld [vmem:[%s3810 + $0x14] sm:$0xff]
          %v3815 = vld [vmem:[%s3810 + $0x1c] sm:$0xff]
          %v3816 = vld [vmem:[%s3810 + $0x24] sm:$0xf]
          %v3817 = vld [vmem:[%s3810 + $0x28] sm:$0xff]
          %v3818 = vld [vmem:[%s3810 + $0x30] sm:$0xff]
          %v3819 = vld [vmem:[%s3810 + $0x38] sm:$0xf]
          %v3820 = vld [vmem:[%s3810 + $0x3c] sm:$0xff]
          %v3821 = vld [vmem:[%s3810 + $0x44] sm:$0xff]
          %v3822 = vld [vmem:[%s3810 + $0x4c] sm:$0xf]
          %v3823 = vld [vmem:[%s3810 + $0x50] sm:$0xff]
          %v3824 = vld [vmem:[%s3810 + $0x58] sm:$0xff]
          %v3825 = vld [vmem:[%s3810 + $0x60] sm:$0xf]
          %v3826 = vld [vmem:[%s3810 + $0x64] sm:$0xff]
          %v3827 = vld [vmem:[%s3810 + $0x6c] sm:$0xff]
          %v3828 = vld [vmem:[%s3810 + $0x74] sm:$0xf]
          %v3829 = vld [vmem:[%s3810 + $0x78] sm:$0xff]
          %v3830 = vld [vmem:[%s3810 + $0x80] sm:$0xff]
          %v3831 = vld [vmem:[%s3810 + $0x88] sm:$0xf]
          %v3832 = vld [vmem:[%s3810 + $0x8c] sm:$0xff]
          %v3833 = vld [vmem:[%s3810 + $0x94] sm:$0xff]
          %v3834 = vld [vmem:[%s3810 + $0x9c] sm:$0xf]
          %v3835 = vld [vmem:[%s3810 + $0xa0] sm:$0xff]
          %v3836 = vld [vmem:[%s3810 + $0xa8] sm:$0xff]
          %v3837 = vld [vmem:[%s3810 + $0xb0] sm:$0xf]
          %v3838 = vld [vmem:[%s3810 + $0xb4] sm:$0xff]
          %v3839 = vld [vmem:[%s3810 + $0xbc] sm:$0xff]
          %v3840 = vld [vmem:[%s3810 + $0xc4] sm:$0xf]
          %v3841 = vld [vmem:[%s3810 + $0xc8] sm:$0xff]
          %v3842 = vld [vmem:[%s3810 + $0xd0] sm:$0xff]
          %v3843 = vld [vmem:[%s3810 + $0xd8] sm:$0xf]
          %v3844 = vld [vmem:[%s3810 + $0xdc] sm:$0xff]
          %v3845 = vld [vmem:[%s3810 + $0xe4] sm:$0xff]
          %v3846 = vld [vmem:[%s3810 + $0xec] sm:$0xf]
          %v3847 = vld [vmem:[%s3810 + $0xf0] sm:$0xff]
          %v3848 = vld [vmem:[%s3810 + $0xf8] sm:$0xff]
          %v3849 = vld [vmem:[%s3810 + $0x100] sm:$0xf]
          %v3850 = vld [vmem:[%s3810 + $0x104] sm:$0xff]
          %v3851 = vld [vmem:[%s3810 + $0x10c] sm:$0xff]
          %v3852 = vld [vmem:[%s3810 + $0x114] sm:$0xf]
          %v3853 = vld [vmem:[%s3810 + $0x118] sm:$0xff]
          %v3854 = vld [vmem:[%s3810 + $0x120] sm:$0xff]
          %v3855 = vld [vmem:[%s3810 + $0x128] sm:$0xf]
          %v3856 = vld [vmem:[%s3810 + $0x12c] sm:$0xff]
          %v3857 = vld [vmem:[%s3810 + $0x134] sm:$0xff]
          %v3858 = vld [vmem:[%s3810 + $0x13c] sm:$0xf]
          %v3859 = vld [vmem:[%s3810 + $0x140] sm:$0xff]
          %v3860 = vld [vmem:[%s3810 + $0x148] sm:$0xff]
          %v3861 = vld [vmem:[%s3810 + $0x150] sm:$0xf]
          %v3862 = vld [vmem:[%s3810 + $0x154] sm:$0xff]
          %v3863 = vld [vmem:[%s3810 + $0x15c] sm:$0xff]
          %v3864 = vld [vmem:[%s3810 + $0x164] sm:$0xf]
          %v3865 = vld [vmem:[%s3810 + $0x168] sm:$0xff]
          %v3866 = vld [vmem:[%s3810 + $0x170] sm:$0xff]
          %v3867 = vld [vmem:[%s3810 + $0x178] sm:$0xf]
          %v3868 = vld [vmem:[%s3810 + $0x17c] sm:$0xff]
          %v3869 = vld [vmem:[%s3810 + $0x184] sm:$0xff]
          %v3870 = vld [vmem:[%s3810 + $0x18c] sm:$0xf]
          %v3871 = vld [vmem:[%s3810 + $0x190] sm:$0xff]
          %v3872 = vld [vmem:[%s3810 + $0x198] sm:$0xff]
          %v3873 = vld [vmem:[%s3810 + $0x1a0] sm:$0xf]
          %v3874 = vld [vmem:[%s3810 + $0x1a4] sm:$0xff]
          %v3875 = vld [vmem:[%s3810 + $0x1ac] sm:$0xff]
          %v3876 = vld [vmem:[%s3810 + $0x1b4] sm:$0xf]
          %v3877 = vld [vmem:[%s3810 + $0x1b8] sm:$0xff]
          %v3878 = vld [vmem:[%s3810 + $0x1c0] sm:$0xff]
          %v3879 = vld [vmem:[%s3810 + $0x1c8] sm:$0xf]
          %v3880 = vld [vmem:[%s3810 + $0x1cc] sm:$0xff]
          %v3881 = vld [vmem:[%s3810 + $0x1d4] sm:$0xff]
          %v3882 = vld [vmem:[%s3810 + $0x1dc] sm:$0xf]
          %v3883 = vld [vmem:[%s3810 + $0x1e0] sm:$0xff]
          %v3884 = vld [vmem:[%s3810 + $0x1e8] sm:$0xff]
          %v3885 = vld [vmem:[%s3810 + $0x1f0] sm:$0xf]
          %v3886 = vld [vmem:[%s3810 + $0x1f4] sm:$0xff]
          %v3887 = vld [vmem:[%s3810 + $0x1fc] sm:$0xff]
          %v3888 = vld [vmem:[%s3810 + $0x204] sm:$0xf]
          %v3889 = vld [vmem:[%s3810 + $0x208] sm:$0xff]
          %v3890 = vld [vmem:[%s3810 + $0x210] sm:$0xff]
          %v3891 = vld [vmem:[%s3810 + $0x218] sm:$0xf]
          %v3892 = vld [vmem:[%s3810 + $0x21c] sm:$0xff]
          %v3893 = vld [vmem:[%s3810 + $0x224] sm:$0xff]
          %v3894 = vld [vmem:[%s3810 + $0x22c] sm:$0xf]
          %v3895 = vld [vmem:[%s3810 + $0x230] sm:$0xff]
          %v3896 = vld [vmem:[%s3810 + $0x238] sm:$0xff]
          %v3897 = vld [vmem:[%s3810 + $0x240] sm:$0xf]
          %v3898 = vld [vmem:[%s3810 + $0x244] sm:$0xff]
          %v3899 = vld [vmem:[%s3810 + $0x24c] sm:$0xff]
          %v3900 = vld [vmem:[%s3810 + $0x254] sm:$0xf]
          %v3901 = vld [vmem:[%s3810 + $0x258] sm:$0xff]
          %v3902 = vld [vmem:[%s3810 + $0x260] sm:$0xff]
          %v3903 = vld [vmem:[%s3810 + $0x268] sm:$0xf]
          %v3904 = vld [vmem:[%s3810 + $0x26c] sm:$0xff]
          %v3905 = vld [vmem:[%s3810 + $0x274] sm:$0xff]
          %v3906 = vld [vmem:[%s3810 + $0x27c] sm:$0xf]
          %v3907 = vld [vmem:[%s3810 + $0x280] sm:$0xff]
          %v3908 = vld [vmem:[%s3810 + $0x288] sm:$0xff]
          %v3909 = vld [vmem:[%s3810 + $0x290] sm:$0xf]
          %v3910 = vld [vmem:[%s3810 + $0x294] sm:$0xff]
          %v3911 = vld [vmem:[%s3810 + $0x29c] sm:$0xff]
          %v3912 = vld [vmem:[%s3810 + $0x2a4] sm:$0xf]
          %v3913 = vld [vmem:[%s3810 + $0x2a8] sm:$0xff]
          %v3914 = vld [vmem:[%s3810 + $0x2b0] sm:$0xff]
          %v3915 = vld [vmem:[%s3810 + $0x2b8] sm:$0xf]
          %v3916 = vld [vmem:[%s3810 + $0x2bc] sm:$0xff]
          %v3917 = vld [vmem:[%s3810 + $0x2c4] sm:$0xff]
          %v3918 = vld [vmem:[%s3810 + $0x2cc] sm:$0xf]
          %v3919 = vld [vmem:[%s3810 + $0x2d0] sm:$0xff]
          %v3920 = vld [vmem:[%s3810 + $0x2d8] sm:$0xff]
          %v3921 = vld [vmem:[%s3810 + $0x2e0] sm:$0xf]
          %v3922 = vld [vmem:[%s3810 + $0x2e4] sm:$0xff]
          %v3923 = vld [vmem:[%s3810 + $0x2ec] sm:$0xff]
          %v3924 = vld [vmem:[%s3810 + $0x2f4] sm:$0xf]
          %v3925 = vld [vmem:[%s3810 + $0x2f8] sm:$0xff]
          %v3926 = vld [vmem:[%s3810 + $0x300] sm:$0xff]
          %v3927 = vld [vmem:[%s3810 + $0x308] sm:$0xf]
          %v3928 = vld [vmem:[%s3810 + $0x30c] sm:$0xff]
          %v3929 = vld [vmem:[%s3810 + $0x314] sm:$0xff]
          %v3930 = vld [vmem:[%s3810 + $0x31c] sm:$0xf]
          %v3937 = vrot.slane %v3804, 2
          %v3938 = vrot.slane %v3807, 2
          %v3939 = vsel %vm1548, %v3937, %v3938
          %v3940 = vrot.slane %v3805, 2
          %v3941 = vrot.slane %v3808, 2
          %v3942 = vsel %vm1548, %v3940, %v3941
          %v3943 = vrot.slane %v3806, 2
          %v3944 = vrot.slane %v3809, 2
          %v3945 = vsel %vm1548, %v3943, %v3944
          %v4070 = vunpack.c.l.b16 %v3811
          %v4071 = vunpack.c.h.b16 %v3811
          %v4072 = vunpack.c.l.b16 %v3812
          %v4073 = vunpack.c.h.b16 %v3812
          %v4074 = vunpack.c.l.b16 %v3813
          %v4075 = vunpack.c.l.b16 %v3814
          %v4076 = vunpack.c.h.b16 %v3814
          %v4077 = vunpack.c.l.b16 %v3815
          %v4078 = vunpack.c.h.b16 %v3815
          %v4079 = vunpack.c.l.b16 %v3816
          %v4080 = vunpack.c.l.b16 %v3817
          %v4081 = vunpack.c.h.b16 %v3817
          %v4082 = vunpack.c.l.b16 %v3818
          %v4083 = vunpack.c.h.b16 %v3818
          %v4084 = vunpack.c.l.b16 %v3819
          %v4085 = vunpack.c.l.b16 %v3820
          %v4086 = vunpack.c.h.b16 %v3820
          %v4087 = vunpack.c.l.b16 %v3821
          %v4088 = vunpack.c.h.b16 %v3821
          %v4089 = vunpack.c.l.b16 %v3822
          %v4090 = vunpack.c.l.b16 %v3823
          %v4091 = vunpack.c.h.b16 %v3823
          %v4092 = vunpack.c.l.b16 %v3824
          %v4093 = vunpack.c.h.b16 %v3824
          %v4094 = vunpack.c.l.b16 %v3825
          %v4095 = vunpack.c.l.b16 %v3826
          %v4096 = vunpack.c.h.b16 %v3826
          %v4097 = vunpack.c.l.b16 %v3827
          %v4098 = vunpack.c.h.b16 %v3827
          %v4099 = vunpack.c.l.b16 %v3828
          %v4100 = vunpack.c.l.b16 %v3829
          %v4101 = vunpack.c.h.b16 %v3829
          %v4102 = vunpack.c.l.b16 %v3830
          %v4103 = vunpack.c.h.b16 %v3830
          %v4104 = vunpack.c.l.b16 %v3831
          %v4105 = vunpack.c.l.b16 %v3832
          %v4106 = vunpack.c.h.b16 %v3832
          %v4107 = vunpack.c.l.b16 %v3833
          %v4108 = vunpack.c.h.b16 %v3833
          %v4109 = vunpack.c.l.b16 %v3834
          %v4110 = vunpack.c.l.b16 %v3835
          %v4111 = vunpack.c.h.b16 %v3835
          %v4112 = vunpack.c.l.b16 %v3836
          %v4113 = vunpack.c.h.b16 %v3836
          %v4114 = vunpack.c.l.b16 %v3837
          %v4115 = vunpack.c.l.b16 %v3838
          %v4116 = vunpack.c.h.b16 %v3838
          %v4117 = vunpack.c.l.b16 %v3839
          %v4118 = vunpack.c.h.b16 %v3839
          %v4119 = vunpack.c.l.b16 %v3840
          %v4120 = vunpack.c.l.b16 %v3841
          %v4121 = vunpack.c.h.b16 %v3841
          %v4122 = vunpack.c.l.b16 %v3842
          %v4123 = vunpack.c.h.b16 %v3842
          %v4124 = vunpack.c.l.b16 %v3843
          %v4125 = vunpack.c.l.b16 %v3844
          %v4126 = vunpack.c.h.b16 %v3844
          %v4127 = vunpack.c.l.b16 %v3845
          %v4128 = vunpack.c.h.b16 %v3845
          %v4129 = vunpack.c.l.b16 %v3846
          %v4130 = vunpack.c.l.b16 %v3847
          %v4131 = vunpack.c.h.b16 %v3847
          %v4132 = vunpack.c.l.b16 %v3848
          %v4133 = vunpack.c.h.b16 %v3848
          %v4134 = vunpack.c.l.b16 %v3849
          %v4135 = vunpack.c.l.b16 %v3850
          %v4136 = vunpack.c.h.b16 %v3850
          %v4137 = vunpack.c.l.b16 %v3851
          %v4138 = vunpack.c.h.b16 %v3851
          %v4139 = vunpack.c.l.b16 %v3852
          %v4140 = vunpack.c.l.b16 %v3853
          %v4141 = vunpack.c.h.b16 %v3853
          %v4142 = vunpack.c.l.b16 %v3854
          %v4143 = vunpack.c.h.b16 %v3854
          %v4144 = vunpack.c.l.b16 %v3855
          %v4145 = vunpack.c.l.b16 %v3856
          %v4146 = vunpack.c.h.b16 %v3856
          %v4147 = vunpack.c.l.b16 %v3857
          %v4148 = vunpack.c.h.b16 %v3857
          %v4149 = vunpack.c.l.b16 %v3858
          %v4150 = vunpack.c.l.b16 %v3859
          %v4151 = vunpack.c.h.b16 %v3859
          %v4152 = vunpack.c.l.b16 %v3860
          %v4153 = vunpack.c.h.b16 %v3860
          %v4154 = vunpack.c.l.b16 %v3861
          %v4155 = vunpack.c.l.b16 %v3862
          %v4156 = vunpack.c.h.b16 %v3862
          %v4157 = vunpack.c.l.b16 %v3863
          %v4158 = vunpack.c.h.b16 %v3863
          %v4159 = vunpack.c.l.b16 %v3864
          %v4160 = vunpack.c.l.b16 %v3865
          %v4161 = vunpack.c.h.b16 %v3865
          %v4162 = vunpack.c.l.b16 %v3866
          %v4163 = vunpack.c.h.b16 %v3866
          %v4164 = vunpack.c.l.b16 %v3867
          %v4165 = vunpack.c.l.b16 %v3868
          %v4166 = vunpack.c.h.b16 %v3868
          %v4167 = vunpack.c.l.b16 %v3869
          %v4168 = vunpack.c.h.b16 %v3869
          %v4169 = vunpack.c.l.b16 %v3870
          %v4170 = vunpack.c.l.b16 %v3871
          %v4171 = vunpack.c.h.b16 %v3871
          %v4172 = vunpack.c.l.b16 %v3872
          %v4173 = vunpack.c.h.b16 %v3872
          %v4174 = vunpack.c.l.b16 %v3873
          %v4175 = vunpack.c.l.b16 %v3874
          %v4176 = vunpack.c.h.b16 %v3874
          %v4177 = vunpack.c.l.b16 %v3875
          %v4178 = vunpack.c.h.b16 %v3875
          %v4179 = vunpack.c.l.b16 %v3876
          %v4180 = vunpack.c.l.b16 %v3877
          %v4181 = vunpack.c.h.b16 %v3877
          %v4182 = vunpack.c.l.b16 %v3878
          %v4183 = vunpack.c.h.b16 %v3878
          %v4184 = vunpack.c.l.b16 %v3879
          %v4185 = vunpack.c.l.b16 %v3880
          %v4186 = vunpack.c.h.b16 %v3880
          %v4187 = vunpack.c.l.b16 %v3881
          %v4188 = vunpack.c.h.b16 %v3881
          %v4189 = vunpack.c.l.b16 %v3882
          %v4190 = vunpack.c.l.b16 %v3883
          %v4191 = vunpack.c.h.b16 %v3883
          %v4192 = vunpack.c.l.b16 %v3884
          %v4193 = vunpack.c.h.b16 %v3884
          %v4194 = vunpack.c.l.b16 %v3885
          %v4195 = vunpack.c.l.b16 %v3886
          %v4196 = vunpack.c.h.b16 %v3886
          %v4197 = vunpack.c.l.b16 %v3887
          %v4198 = vunpack.c.h.b16 %v3887
          %v4199 = vunpack.c.l.b16 %v3888
          %v4200 = vunpack.c.l.b16 %v3889
          %v4201 = vunpack.c.h.b16 %v3889
          %v4202 = vunpack.c.l.b16 %v3890
          %v4203 = vunpack.c.h.b16 %v3890
          %v4204 = vunpack.c.l.b16 %v3891
          %v4205 = vunpack.c.l.b16 %v3892
          %v4206 = vunpack.c.h.b16 %v3892
          %v4207 = vunpack.c.l.b16 %v3893
          %v4208 = vunpack.c.h.b16 %v3893
          %v4209 = vunpack.c.l.b16 %v3894
          %v4210 = vunpack.c.l.b16 %v3895
          %v4211 = vunpack.c.h.b16 %v3895
          %v4212 = vunpack.c.l.b16 %v3896
          %v4213 = vunpack.c.h.b16 %v3896
          %v4214 = vunpack.c.l.b16 %v3897
          %v4215 = vunpack.c.l.b16 %v3898
          %v4216 = vunpack.c.h.b16 %v3898
          %v4217 = vunpack.c.l.b16 %v3899
          %v4218 = vunpack.c.h.b16 %v3899
          %v4219 = vunpack.c.l.b16 %v3900
          %v4220 = vunpack.c.l.b16 %v3901
          %v4221 = vunpack.c.h.b16 %v3901
          %v4222 = vunpack.c.l.b16 %v3902
          %v4223 = vunpack.c.h.b16 %v3902
          %v4224 = vunpack.c.l.b16 %v3903
          %v4225 = vunpack.c.l.b16 %v3904
          %v4226 = vunpack.c.h.b16 %v3904
          %v4227 = vunpack.c.l.b16 %v3905
          %v4228 = vunpack.c.h.b16 %v3905
          %v4229 = vunpack.c.l.b16 %v3906
          %v4230 = vunpack.c.l.b16 %v3907
          %v4231 = vunpack.c.h.b16 %v3907
          %v4232 = vunpack.c.l.b16 %v3908
          %v4233 = vunpack.c.h.b16 %v3908
          %v4234 = vunpack.c.l.b16 %v3909
          %v4235 = vunpack.c.l.b16 %v3910
          %v4236 = vunpack.c.h.b16 %v3910
          %v4237 = vunpack.c.l.b16 %v3911
          %v4238 = vunpack.c.h.b16 %v3911
          %v4239 = vunpack.c.l.b16 %v3912
          %v4240 = vunpack.c.l.b16 %v3913
          %v4241 = vunpack.c.h.b16 %v3913
          %v4242 = vunpack.c.l.b16 %v3914
          %v4243 = vunpack.c.h.b16 %v3914
          %v4244 = vunpack.c.l.b16 %v3915
          %v4245 = vunpack.c.l.b16 %v3916
          %v4246 = vunpack.c.h.b16 %v3916
          %v4247 = vunpack.c.l.b16 %v3917
          %v4248 = vunpack.c.h.b16 %v3917
          %v4249 = vunpack.c.l.b16 %v3918
          %v4250 = vunpack.c.l.b16 %v3919
          %v4251 = vunpack.c.h.b16 %v3919
          %v4252 = vunpack.c.l.b16 %v3920
          %v4253 = vunpack.c.h.b16 %v3920
          %v4254 = vunpack.c.l.b16 %v3921
          %v4255 = vunpack.c.l.b16 %v3922
          %v4256 = vunpack.c.h.b16 %v3922
          %v4257 = vunpack.c.l.b16 %v3923
          %v4258 = vunpack.c.h.b16 %v3923
          %v4259 = vunpack.c.l.b16 %v3924
          %v4260 = vunpack.c.l.b16 %v3925
          %v4261 = vunpack.c.h.b16 %v3925
          %v4262 = vunpack.c.l.b16 %v3926
          %v4263 = vunpack.c.h.b16 %v3926
          %v4264 = vunpack.c.l.b16 %v3927
          %v4265 = vunpack.c.l.b16 %v3928
          %v4266 = vunpack.c.h.b16 %v3928
          %v4267 = vunpack.c.l.b16 %v3929
          %v4268 = vunpack.c.h.b16 %v3929
          %v4269 = vunpack.c.l.b16 %v3930
          %v4270 = vpack.c.b16 %v4075, %v4070
          %v4271 = vpack.c.b16 %v4076, %v4071
          %v4272 = vpack.c.b16 %v4077, %v4072
          %v4273 = vpack.c.b16 %v4078, %v4073
          %v4274 = vpack.c.b16 %v4079, %v4074
          %v4275 = vpack.c.b16 %v4085, %v4080
          %v4276 = vpack.c.b16 %v4086, %v4081
          %v4277 = vpack.c.b16 %v4087, %v4082
          %v4278 = vpack.c.b16 %v4088, %v4083
          %v4279 = vpack.c.b16 %v4089, %v4084
          %v4280 = vpack.c.b16 %v4095, %v4090
          %v4281 = vpack.c.b16 %v4096, %v4091
          %v4282 = vpack.c.b16 %v4097, %v4092
          %v4283 = vpack.c.b16 %v4098, %v4093
          %v4284 = vpack.c.b16 %v4099, %v4094
          %v4285 = vpack.c.b16 %v4105, %v4100
          %v4286 = vpack.c.b16 %v4106, %v4101
          %v4287 = vpack.c.b16 %v4107, %v4102
          %v4288 = vpack.c.b16 %v4108, %v4103
          %v4289 = vpack.c.b16 %v4109, %v4104
          %v4290 = vpack.c.b16 %v4115, %v4110
          %v4291 = vpack.c.b16 %v4116, %v4111
          %v4292 = vpack.c.b16 %v4117, %v4112
          %v4293 = vpack.c.b16 %v4118, %v4113
          %v4294 = vpack.c.b16 %v4119, %v4114
          %v4295 = vpack.c.b16 %v4125, %v4120
          %v4296 = vpack.c.b16 %v4126, %v4121
          %v4297 = vpack.c.b16 %v4127, %v4122
          %v4298 = vpack.c.b16 %v4128, %v4123
          %v4299 = vpack.c.b16 %v4129, %v4124
          %v4300 = vpack.c.b16 %v4135, %v4130
          %v4301 = vpack.c.b16 %v4136, %v4131
          %v4302 = vpack.c.b16 %v4137, %v4132
          %v4303 = vpack.c.b16 %v4138, %v4133
          %v4304 = vpack.c.b16 %v4139, %v4134
          %v4305 = vpack.c.b16 %v4145, %v4140
          %v4306 = vpack.c.b16 %v4146, %v4141
          %v4307 = vpack.c.b16 %v4147, %v4142
          %v4308 = vpack.c.b16 %v4148, %v4143
          %v4309 = vpack.c.b16 %v4149, %v4144
          %v4310 = vpack.c.b16 %v4155, %v4150
          %v4311 = vpack.c.b16 %v4156, %v4151
          %v4312 = vpack.c.b16 %v4157, %v4152
          %v4313 = vpack.c.b16 %v4158, %v4153
          %v4314 = vpack.c.b16 %v4159, %v4154
          %v4315 = vpack.c.b16 %v4165, %v4160
          %v4316 = vpack.c.b16 %v4166, %v4161
          %v4317 = vpack.c.b16 %v4167, %v4162
          %v4318 = vpack.c.b16 %v4168, %v4163
          %v4319 = vpack.c.b16 %v4169, %v4164
          %v4320 = vpack.c.b16 %v4175, %v4170
          %v4321 = vpack.c.b16 %v4176, %v4171
          %v4322 = vpack.c.b16 %v4177, %v4172
          %v4323 = vpack.c.b16 %v4178, %v4173
          %v4324 = vpack.c.b16 %v4179, %v4174
          %v4325 = vpack.c.b16 %v4185, %v4180
          %v4326 = vpack.c.b16 %v4186, %v4181
          %v4327 = vpack.c.b16 %v4187, %v4182
          %v4328 = vpack.c.b16 %v4188, %v4183
          %v4329 = vpack.c.b16 %v4189, %v4184
          %v4330 = vpack.c.b16 %v4195, %v4190
          %v4331 = vpack.c.b16 %v4196, %v4191
          %v4332 = vpack.c.b16 %v4197, %v4192
          %v4333 = vpack.c.b16 %v4198, %v4193
          %v4334 = vpack.c.b16 %v4199, %v4194
          %v4335 = vpack.c.b16 %v4205, %v4200
          %v4336 = vpack.c.b16 %v4206, %v4201
          %v4337 = vpack.c.b16 %v4207, %v4202
          %v4338 = vpack.c.b16 %v4208, %v4203
          %v4339 = vpack.c.b16 %v4209, %v4204
          %v4340 = vpack.c.b16 %v4215, %v4210
          %v4341 = vpack.c.b16 %v4216, %v4211
          %v4342 = vpack.c.b16 %v4217, %v4212
          %v4343 = vpack.c.b16 %v4218, %v4213
          %v4344 = vpack.c.b16 %v4219, %v4214
          %v4345 = vpack.c.b16 %v4225, %v4220
          %v4346 = vpack.c.b16 %v4226, %v4221
          %v4347 = vpack.c.b16 %v4227, %v4222
          %v4348 = vpack.c.b16 %v4228, %v4223
          %v4349 = vpack.c.b16 %v4229, %v4224
          %v4350 = vpack.c.b16 %v4235, %v4230
          %v4351 = vpack.c.b16 %v4236, %v4231
          %v4352 = vpack.c.b16 %v4237, %v4232
          %v4353 = vpack.c.b16 %v4238, %v4233
          %v4354 = vpack.c.b16 %v4239, %v4234
          %v4355 = vpack.c.b16 %v4245, %v4240
          %v4356 = vpack.c.b16 %v4246, %v4241
          %v4357 = vpack.c.b16 %v4247, %v4242
          %v4358 = vpack.c.b16 %v4248, %v4243
          %v4359 = vpack.c.b16 %v4249, %v4244
          %v4360 = vpack.c.b16 %v4255, %v4250
          %v4361 = vpack.c.b16 %v4256, %v4251
          %v4362 = vpack.c.b16 %v4257, %v4252
          %v4363 = vpack.c.b16 %v4258, %v4253
          %v4364 = vpack.c.b16 %v4259, %v4254
          %v4365 = vpack.c.b16 %v4265, %v4260
          %v4366 = vpack.c.b16 %v4266, %v4261
          %v4367 = vpack.c.b16 %v4267, %v4262
          %v4368 = vpack.c.b16 %v4268, %v4263
          %v4369 = vpack.c.b16 %v4269, %v4264
          %v4471 = vsel %vm1913, %v3945, 0
          %v4474 = vsel %vm1913, %v3944, 0
          %4476 = vmatpush.bf16.msra.mxu0 %v4305
          %4477 = vmatpush.bf16.msra.mxu0 %v4300
          %4478 = vmatpush.bf16.msra.mxu0 %v4295
          %4479 = vmatpush.bf16.msra.mxu0 %v4290
          %4480 = vmatpush.bf16.msra.mxu0 %v4285
          %4481 = vmatpush.bf16.msra.mxu0 %v4280
          %4482 = vmatpush.bf16.msra.mxu0 %v4275
          %4483 = vmatpush.bf16.msra.mxu0 %v4270
          %4484 = vmatmul.bf16.gmra.mxu0 %v3939
          %v4485 = vpop.f32.mrf.mxu0
          %v4486 = vadd.f32 0.0, %v4485
          %v4487 = vpop.f32.mrf.mxu0
          %v4488 = vadd.f32 0.0, %v4487
          %4489 = vmatmul.bf16.gmra.mxu0 %v3938
          %v4490 = vpop.f32.mrf.mxu0
          %v4491 = vadd.f32 0.0, %v4490
          %v4492 = vpop.f32.mrf.mxu0
          %4493 = vdwg.mxu0
          %4494 = vmatpush.bf16.msra.mxu0 %v4345
          %4495 = vmatpush.bf16.msra.mxu0 %v4340
          %4496 = vmatpush.bf16.msra.mxu0 %v4335
          %4497 = vmatpush.bf16.msra.mxu0 %v4330
          %4498 = vmatpush.bf16.msra.mxu0 %v4325
          %4499 = vmatpush.bf16.msra.mxu0 %v4320
          %4500 = vmatpush.bf16.msra.mxu0 %v4315
          %4501 = vmatpush.bf16.msra.mxu0 %v4310
          %4502 = vmatmul.bf16.gmra.mxu0 %v3942
          %v4503 = vpop.f32.mrf.mxu0
          %v4504 = vadd.f32 %v4486, %v4503
          %v4505 = vpop.f32.mrf.mxu0
          %v4506 = vadd.f32 %v4488, %v4505
          %4507 = vmatmul.bf16.gmra.mxu0 %v3941
          %v4508 = vpop.f32.mrf.mxu0
          %v4509 = vadd.f32 %v4491, %v4508
          %v4510 = vpop.f32.mrf.mxu0
          %4511 = vdwg.mxu0
          %4512 = vmatpush.bf16.msra.mxu0 0
          %4513 = vmatpush.bf16.msra.mxu0 0
          %4514 = vmatpush.bf16.msra.mxu0 0
          %4515 = vmatpush.bf16.msra.mxu0 0
          %4516 = vmatpush.bf16.msra.mxu0 %v4365
          %4517 = vmatpush.bf16.msra.mxu0 %v4360
          %4518 = vmatpush.bf16.msra.mxu0 %v4355
          %4519 = vmatpush.bf16.msra.mxu0 %v4350
          %4520 = vmatmul.bf16.gmra.mxu0 %v4471
          %v4521 = vpop.f32.mrf.mxu0
          %v4522 = vadd.f32 %v4504, %v4521
          %v4523 = vpop.f32.mrf.mxu0
          %v4524 = vadd.f32 %v4506, %v4523
          %4525 = vmatmul.bf16.gmra.mxu0 %v4474
          %v4526 = vpop.f32.mrf.mxu0
          %v4527 = vadd.f32 %v4509, %v4526
          %v4528 = vpop.f32.mrf.mxu0
          %4529 = vdwg.mxu0
          %4530 = vmatpush.bf16.msra.mxu0 %v4306
          %4531 = vmatpush.bf16.msra.mxu0 %v4301
          %4532 = vmatpush.bf16.msra.mxu0 %v4296
          %4533 = vmatpush.bf16.msra.mxu0 %v4291
          %4534 = vmatpush.bf16.msra.mxu0 %v4286
          %4535 = vmatpush.bf16.msra.mxu0 %v4281
          %4536 = vmatpush.bf16.msra.mxu0 %v4276
          %4537 = vmatpush.bf16.msra.mxu0 %v4271
          %4538 = vmatmul.bf16.gmra.mxu0 %v3939
          %v4539 = vpop.f32.mrf.mxu0
          %v4540 = vadd.f32 0.0, %v4539
          %v4541 = vpop.f32.mrf.mxu0
          %v4542 = vadd.f32 0.0, %v4541
          %4543 = vmatmul.bf16.gmra.mxu0 %v3938
          %v4544 = vpop.f32.mrf.mxu0
          %v4545 = vadd.f32 0.0, %v4544
          %v4546 = vpop.f32.mrf.mxu0
          %4547 = vdwg.mxu0
          %4548 = vmatpush.bf16.msra.mxu0 %v4346
          %4549 = vmatpush.bf16.msra.mxu0 %v4341
          %4550 = vmatpush.bf16.msra.mxu0 %v4336
          %4551 = vmatpush.bf16.msra.mxu0 %v4331
          %4552 = vmatpush.bf16.msra.mxu0 %v4326
          %4553 = vmatpush.bf16.msra.mxu0 %v4321
          %4554 = vmatpush.bf16.msra.mxu0 %v4316
          %4555 = vmatpush.bf16.msra.mxu0 %v4311
          %4556 = vmatmul.bf16.gmra.mxu0 %v3942
          %v4557 = vpop.f32.mrf.mxu0
          %v4558 = vadd.f32 %v4540, %v4557
          %v4559 = vpop.f32.mrf.mxu0
          %v4560 = vadd.f32 %v4542, %v4559
          %4561 = vmatmul.bf16.gmra.mxu0 %v3941
          %v4562 = vpop.f32.mrf.mxu0
          %v4563 = vadd.f32 %v4545, %v4562
          %v4564 = vpop.f32.mrf.mxu0
          %4565 = vdwg.mxu0
          %4566 = vmatpush.bf16.msra.mxu0 0
          %4567 = vmatpush.bf16.msra.mxu0 0
          %4568 = vmatpush.bf16.msra.mxu0 0
          %4569 = vmatpush.bf16.msra.mxu0 0
          %4570 = vmatpush.bf16.msra.mxu0 %v4366
          %4571 = vmatpush.bf16.msra.mxu0 %v4361
          %4572 = vmatpush.bf16.msra.mxu0 %v4356
          %4573 = vmatpush.bf16.msra.mxu0 %v4351
          %4574 = vmatmul.bf16.gmra.mxu0 %v4471
          %v4575 = vpop.f32.mrf.mxu0
          %v4576 = vadd.f32 %v4558, %v4575
          %v4577 = vpop.f32.mrf.mxu0
          %v4578 = vadd.f32 %v4560, %v4577
          %4579 = vmatmul.bf16.gmra.mxu0 %v4474
          %v4580 = vpop.f32.mrf.mxu0
          %v4581 = vadd.f32 %v4563, %v4580
          %v4582 = vpop.f32.mrf.mxu0
          %4583 = vdwg.mxu0
          %4584 = vmatpush.bf16.msra.mxu0 %v4307
          %4585 = vmatpush.bf16.msra.mxu0 %v4302
          %4586 = vmatpush.bf16.msra.mxu0 %v4297
          %4587 = vmatpush.bf16.msra.mxu0 %v4292
          %4588 = vmatpush.bf16.msra.mxu0 %v4287
          %4589 = vmatpush.bf16.msra.mxu0 %v4282
          %4590 = vmatpush.bf16.msra.mxu0 %v4277
          %4591 = vmatpush.bf16.msra.mxu0 %v4272
          %4592 = vmatmul.bf16.gmra.mxu0 %v3939
          %v4593 = vpop.f32.mrf.mxu0
          %v4594 = vadd.f32 0.0, %v4593
          %v4595 = vpop.f32.mrf.mxu0
          %v4596 = vadd.f32 0.0, %v4595
          %4597 = vmatmul.bf16.gmra.mxu0 %v3938
          %v4598 = vpop.f32.mrf.mxu0
          %v4599 = vadd.f32 0.0, %v4598
          %v4600 = vpop.f32.mrf.mxu0
          %4601 = vdwg.mxu0
          %4602 = vmatpush.bf16.msra.mxu0 %v4347
          %4603 = vmatpush.bf16.msra.mxu0 %v4342
          %4604 = vmatpush.bf16.msra.mxu0 %v4337
          %4605 = vmatpush.bf16.msra.mxu0 %v4332
          %4606 = vmatpush.bf16.msra.mxu0 %v4327
          %4607 = vmatpush.bf16.msra.mxu0 %v4322
          %4608 = vmatpush.bf16.msra.mxu0 %v4317
          %4609 = vmatpush.bf16.msra.mxu0 %v4312
          %4610 = vmatmul.bf16.gmra.mxu0 %v3942
          %v4611 = vpop.f32.mrf.mxu0
          %v4612 = vadd.f32 %v4594, %v4611
          %v4613 = vpop.f32.mrf.mxu0
          %v4614 = vadd.f32 %v4596, %v4613
          %4615 = vmatmul.bf16.gmra.mxu0 %v3941
          %v4616 = vpop.f32.mrf.mxu0
          %v4617 = vadd.f32 %v4599, %v4616
          %v4618 = vpop.f32.mrf.mxu0
          %4619 = vdwg.mxu0
          %4620 = vmatpush.bf16.msra.mxu0 0
          %4621 = vmatpush.bf16.msra.mxu0 0
          %4622 = vmatpush.bf16.msra.mxu0 0
          %4623 = vmatpush.bf16.msra.mxu0 0
          %4624 = vmatpush.bf16.msra.mxu0 %v4367
          %4625 = vmatpush.bf16.msra.mxu0 %v4362
          %4626 = vmatpush.bf16.msra.mxu0 %v4357
          %4627 = vmatpush.bf16.msra.mxu0 %v4352
          %4628 = vmatmul.bf16.gmra.mxu0 %v4471
          %v4629 = vpop.f32.mrf.mxu0
          %v4630 = vadd.f32 %v4612, %v4629
          %v4631 = vpop.f32.mrf.mxu0
          %v4632 = vadd.f32 %v4614, %v4631
          %4633 = vmatmul.bf16.gmra.mxu0 %v4474
          %v4634 = vpop.f32.mrf.mxu0
          %v4635 = vadd.f32 %v4617, %v4634
          %v4636 = vpop.f32.mrf.mxu0
          %4637 = vdwg.mxu0
          %4638 = vmatpush.bf16.msra.mxu0 %v4308
          %4639 = vmatpush.bf16.msra.mxu0 %v4303
          %4640 = vmatpush.bf16.msra.mxu0 %v4298
          %4641 = vmatpush.bf16.msra.mxu0 %v4293
          %4642 = vmatpush.bf16.msra.mxu0 %v4288
          %4643 = vmatpush.bf16.msra.mxu0 %v4283
          %4644 = vmatpush.bf16.msra.mxu0 %v4278
          %4645 = vmatpush.bf16.msra.mxu0 %v4273
          %4646 = vmatmul.bf16.gmra.mxu0 %v3939
          %v4647 = vpop.f32.mrf.mxu0
          %v4648 = vadd.f32 0.0, %v4647
          %v4649 = vpop.f32.mrf.mxu0
          %v4650 = vadd.f32 0.0, %v4649
          %4651 = vmatmul.bf16.gmra.mxu0 %v3938
          %v4652 = vpop.f32.mrf.mxu0
          %v4653 = vadd.f32 0.0, %v4652
          %v4654 = vpop.f32.mrf.mxu0
          %4655 = vdwg.mxu0
          %4656 = vmatpush.bf16.msra.mxu0 %v4348
          %4657 = vmatpush.bf16.msra.mxu0 %v4343
          %4658 = vmatpush.bf16.msra.mxu0 %v4338
          %4659 = vmatpush.bf16.msra.mxu0 %v4333
          %4660 = vmatpush.bf16.msra.mxu0 %v4328
          %4661 = vmatpush.bf16.msra.mxu0 %v4323
          %4662 = vmatpush.bf16.msra.mxu0 %v4318
          %4663 = vmatpush.bf16.msra.mxu0 %v4313
          %4664 = vmatmul.bf16.gmra.mxu0 %v3942
          %v4665 = vpop.f32.mrf.mxu0
          %v4666 = vadd.f32 %v4648, %v4665
          %v4667 = vpop.f32.mrf.mxu0
          %v4668 = vadd.f32 %v4650, %v4667
          %4669 = vmatmul.bf16.gmra.mxu0 %v3941
          %v4670 = vpop.f32.mrf.mxu0
          %v4671 = vadd.f32 %v4653, %v4670
          %v4672 = vpop.f32.mrf.mxu0
          %4673 = vdwg.mxu0
          %4674 = vmatpush.bf16.msra.mxu0 0
          %4675 = vmatpush.bf16.msra.mxu0 0
          %4676 = vmatpush.bf16.msra.mxu0 0
          %4677 = vmatpush.bf16.msra.mxu0 0
          %4678 = vmatpush.bf16.msra.mxu0 %v4368
          %4679 = vmatpush.bf16.msra.mxu0 %v4363
          %4680 = vmatpush.bf16.msra.mxu0 %v4358
          %4681 = vmatpush.bf16.msra.mxu0 %v4353
          %4682 = vmatmul.bf16.gmra.mxu0 %v4471
          %v4683 = vpop.f32.mrf.mxu0
          %v4684 = vadd.f32 %v4666, %v4683
          %v4685 = vpop.f32.mrf.mxu0
          %v4686 = vadd.f32 %v4668, %v4685
          %4687 = vmatmul.bf16.gmra.mxu0 %v4474
          %v4688 = vpop.f32.mrf.mxu0
          %v4689 = vadd.f32 %v4671, %v4688
          %v4690 = vpop.f32.mrf.mxu0
          %4691 = vdwg.mxu0
          %4692 = vmatpush.bf16.msra.mxu0 %v4309
          %4693 = vmatpush.bf16.msra.mxu0 %v4304
          %4694 = vmatpush.bf16.msra.mxu0 %v4299
          %4695 = vmatpush.bf16.msra.mxu0 %v4294
          %4696 = vmatpush.bf16.msra.mxu0 %v4289
          %4697 = vmatpush.bf16.msra.mxu0 %v4284
          %4698 = vmatpush.bf16.msra.mxu0 %v4279
          %4699 = vmatpush.bf16.msra.mxu0 %v4274
          %4700 = vmatmul.bf16.gmra.mxu0 %v3939
          %v4701 = vpop.f32.mrf.mxu0
          %v4702 = vadd.f32 0.0, %v4701
          %v4703 = vpop.f32.mrf.mxu0
          %v4704 = vadd.f32 0.0, %v4703
          %4705 = vmatmul.bf16.gmra.mxu0 %v3938
          %v4706 = vpop.f32.mrf.mxu0
          %v4707 = vadd.f32 0.0, %v4706
          %v4708 = vpop.f32.mrf.mxu0
          %4709 = vdwg.mxu0
          %4710 = vmatpush.bf16.msra.mxu0 %v4349
          %4711 = vmatpush.bf16.msra.mxu0 %v4344
          %4712 = vmatpush.bf16.msra.mxu0 %v4339
          %4713 = vmatpush.bf16.msra.mxu0 %v4334
          %4714 = vmatpush.bf16.msra.mxu0 %v4329
          %4715 = vmatpush.bf16.msra.mxu0 %v4324
          %4716 = vmatpush.bf16.msra.mxu0 %v4319
          %4717 = vmatpush.bf16.msra.mxu0 %v4314
          %4718 = vmatmul.bf16.gmra.mxu0 %v3942
          %v4719 = vpop.f32.mrf.mxu0
          %v4720 = vadd.f32 %v4702, %v4719
          %v4721 = vpop.f32.mrf.mxu0
          %v4722 = vadd.f32 %v4704, %v4721
          %4723 = vmatmul.bf16.gmra.mxu0 %v3941
          %v4724 = vpop.f32.mrf.mxu0
          %v4725 = vadd.f32 %v4707, %v4724
          %v4726 = vpop.f32.mrf.mxu0
          %4727 = vdwg.mxu0
          %4728 = vmatpush.bf16.msra.mxu0 0
          %4729 = vmatpush.bf16.msra.mxu0 0
          %4730 = vmatpush.bf16.msra.mxu0 0
          %4731 = vmatpush.bf16.msra.mxu0 0
          %4732 = vmatpush.bf16.msra.mxu0 %v4369
          %4733 = vmatpush.bf16.msra.mxu0 %v4364
          %4734 = vmatpush.bf16.msra.mxu0 %v4359
          %4735 = vmatpush.bf16.msra.mxu0 %v4354
          %4736 = vmatmul.bf16.gmra.mxu0 %v4471
          %v4737 = vpop.f32.mrf.mxu0
          %v4738 = vadd.f32 %v4720, %v4737
          %v4739 = vpop.f32.mrf.mxu0
          %v4740 = vadd.f32 %v4722, %v4739
          %4741 = vmatmul.bf16.gmra.mxu0 %v4474
          %v4742 = vpop.f32.mrf.mxu0
          %v4743 = vadd.f32 %v4725, %v4742
          %v4744 = vpop.f32.mrf.mxu0
          %4745 = vdwg.mxu0
          %v4746 = vadd.f32 %v3574, %v4522
          %v4747 = vadd.f32 %v3628, %v4576
          %v4748 = vadd.f32 %v3682, %v4630
          %v4749 = vadd.f32 %v3736, %v4684
          %v4750 = vadd.f32 %v3790, %v4738
          %v4751 = vadd.f32 %v3576, %v4524
          %v4752 = vadd.f32 %v3630, %v4578
          %v4753 = vadd.f32 %v3684, %v4632
          %v4754 = vadd.f32 %v3738, %v4686
          %v4755 = vadd.f32 %v3792, %v4740
          %v4756 = vadd.f32 %v3579, %v4527
          %v4757 = vadd.f32 %v3633, %v4581
          %v4758 = vadd.f32 %v3687, %v4635
          %v4759 = vadd.f32 %v3741, %v4689
          %v4760 = vadd.f32 %v3795, %v4743
          %v4761 = vld [vmem:[#allocation15] sm:$0x1f]
          %v4763 = vperm.slane %v4761, 0
          %v4764 = vperm.slane %v4761, 1
          %v4765 = vperm.slane %v4761, 2
          %v4766 = vperm.slane %v4761, 3
          %v4767 = vperm.slane %v4761, 4
          %v4773 = vadd.f32 %v4746, %v4763
          %v4774 = vadd.f32 %v4747, %v4764
          %v4775 = vadd.f32 %v4748, %v4765
          %v4776 = vadd.f32 %v4749, %v4766
          %v4777 = vadd.f32 %v4750, %v4767
          %v4778 = vadd.f32 %v4751, %v4763
          %v4779 = vadd.f32 %v4752, %v4764
          %v4780 = vadd.f32 %v4753, %v4765
          %v4781 = vadd.f32 %v4754, %v4766
          %v4782 = vadd.f32 %v4755, %v4767
          %v4783 = vadd.f32 %v4756, %v4763
          %v4784 = vadd.f32 %v4757, %v4764
          %v4785 = vadd.f32 %v4758, %v4765
          %v4786 = vadd.f32 %v4759, %v4766
          %v4787 = vadd.f32 %v4760, %v4767
          %v4788 = vmax.f32 %v4773, 0.0
          %v4789 = vmax.f32 %v4774, 0.0
          %v4790 = vmax.f32 %v4775, 0.0
          %v4791 = vmax.f32 %v4776, 0.0
          %v4792 = vmax.f32 %v4777, 0.0
          %v4793 = vmax.f32 %v4778, 0.0
          %v4794 = vmax.f32 %v4779, 0.0
          %v4795 = vmax.f32 %v4780, 0.0
          %v4796 = vmax.f32 %v4781, 0.0
          %v4797 = vmax.f32 %v4782, 0.0
          %v4798 = vmax.f32 %v4783, 0.0
          %v4799 = vmax.f32 %v4784, 0.0
          %v4800 = vmax.f32 %v4785, 0.0
          %v4801 = vmax.f32 %v4786, 0.0
          %v4802 = vmax.f32 %v4787, 0.0
          %v4807 = vrot.slane %v4789, 6
          %v4808 = vrot.slane %v4790, 4
          %v4809 = vrot.slane %v4791, 2
          %v4810 = vsel %vm809, %v4788, %v4807
          %vm4811 = vcmask 1045508
          %v4812 = vsel %vm4811, %v4808, %v4809
          %vm4813 = vcmask 1043456
          %v4814 = vsel %vm4813, %v4810, %v4812
          %4816 = vst [vmem:[#allocation5] sm:$0xff] %v4814
          %4817 = vst [vmem:[#allocation5 + $0x8] sm:$0x3] %v4792
          %4819 = vst.sshfl [vmem:[#allocation1] sm:$0xff pattern:$0x73625140] %v4788
          %4820 = vst.sshfl [vmem:[#allocation1 + $0x8] sm:$0xff pattern:$0x73625140] %v4789
          %4821 = vst.sshfl [vmem:[#allocation1 + $0x10] sm:$0xff pattern:$0x73625140] %v4790
          %4822 = vst.sshfl [vmem:[#allocation1 + $0x18] sm:$0xff pattern:$0x73625140] %v4791
          %4823 = vst.sshfl [vmem:[#allocation1 + $0x20] sm:$0xff pattern:$0x73625140] %v4792
          %s4824 = scalar_lea.vmem [#allocation1], 1
          %v4825 = vld [vmem:[%s4824] ss:$4 sm:$0xff]
          %s4826 = scalar_lea.vmem [#allocation1], 33
          %v4827 = vld [vmem:[%s4826] ss:$4 sm:$0xff]
          %s4830 = scalar_lea.vmem [#allocation5], 10
          %4831 = vst [vmem:[%s4830] sm:$0xff] %v4825
          %4832 = vst [vmem:[%s4830 + $0x8] sm:$0x3] %v4827
          %4833 = vst.sshfl [vmem:[#allocation1] sm:$0xff pattern:$0x73625140] %v4788
          %4834 = vst.sshfl [vmem:[#allocation1 + $0x8] sm:$0xff pattern:$0x73625140] %v4789
          %4835 = vst.sshfl [vmem:[#allocation1 + $0x10] sm:$0xff pattern:$0x73625140] %v4790
          %4836 = vst.sshfl [vmem:[#allocation1 + $0x18] sm:$0xff pattern:$0x73625140] %v4791
          %4837 = vst.sshfl [vmem:[#allocation1 + $0x20] sm:$0xff pattern:$0x73625140] %v4792
          %s4838 = scalar_lea.vmem [#allocation1], 2
          %v4839 = vld [vmem:[%s4838] ss:$4 sm:$0xff]
          %s4840 = scalar_lea.vmem [#allocation1], 34
          %v4841 = vld [vmem:[%s4840] ss:$4 sm:$0xff]
          %s4844 = scalar_lea.vmem [#allocation5], 20
          %4845 = vst [vmem:[%s4844] sm:$0xff] %v4839
          %4846 = vst [vmem:[%s4844 + $0x8] sm:$0x3] %v4841
          %4847 = vst.sshfl [vmem:[#allocation1] sm:$0xff pattern:$0x73625140] %v4788
          %4848 = vst.sshfl [vmem:[#allocation1 + $0x8] sm:$0xff pattern:$0x73625140] %v4789
          %4849 = vst.sshfl [vmem:[#allocation1 + $0x10] sm:$0xff pattern:$0x73625140] %v4790
          %4850 = vst.sshfl [vmem:[#allocation1 + $0x18] sm:$0xff pattern:$0x73625140] %v4791
          %4851 = vst.sshfl [vmem:[#allocation1 + $0x20] sm:$0xff pattern:$0x73625140] %v4792
          %s4852 = scalar_lea.vmem [#allocation1], 3
          %v4853 = vld [vmem:[%s4852] ss:$4 sm:$0xff]
          %s4854 = scalar_lea.vmem [#allocation1], 35
          %v4855 = vld [vmem:[%s4854] ss:$4 sm:$0xff]
          %s4858 = scalar_lea.vmem [#allocation5], 30
          %4859 = vst [vmem:[%s4858] sm:$0xff] %v4853
          %4860 = vst [vmem:[%s4858 + $0x8] sm:$0x3] %v4855
          %v4865 = vrot.slane %v4794, 6
          %v4866 = vrot.slane %v4795, 4
          %v4867 = vrot.slane %v4796, 2
          %v4868 = vsel %vm809, %v4793, %v4865
          %v4869 = vsel %vm4811, %v4866, %v4867
          %v4870 = vsel %vm4813, %v4868, %v4869
          %s4872 = scalar_lea.vmem [#allocation5], 40
          %4873 = vst [vmem:[%s4872] sm:$0xff] %v4870
          %4874 = vst [vmem:[%s4872 + $0x8] sm:$0x3] %v4797
          %4876 = vst.sshfl [vmem:[#allocation1] sm:$0xff pattern:$0x73625140] %v4793
          %4877 = vst.sshfl [vmem:[#allocation1 + $0x8] sm:$0xff pattern:$0x73625140] %v4794
          %4878 = vst.sshfl [vmem:[#allocation1 + $0x10] sm:$0xff pattern:$0x73625140] %v4795
          %4879 = vst.sshfl [vmem:[#allocation1 + $0x18] sm:$0xff pattern:$0x73625140] %v4796
          %4880 = vst.sshfl [vmem:[#allocation1 + $0x20] sm:$0xff pattern:$0x73625140] %v4797
          %s4881 = scalar_lea.vmem [#allocation1], 1
          %v4882 = vld [vmem:[%s4881] ss:$4 sm:$0xff]
          %s4883 = scalar_lea.vmem [#allocation1], 33
          %v4884 = vld [vmem:[%s4883] ss:$4 sm:$0xff]
          %s4887 = scalar_lea.vmem [#allocation5], 50
          %4888 = vst [vmem:[%s4887] sm:$0xff] %v4882
          %4889 = vst [vmem:[%s4887 + $0x8] sm:$0x3] %v4884
          %4890 = vst.sshfl [vmem:[#allocation1] sm:$0xff pattern:$0x73625140] %v4793
          %4891 = vst.sshfl [vmem:[#allocation1 + $0x8] sm:$0xff pattern:$0x73625140] %v4794
          %4892 = vst.sshfl [vmem:[#allocation1 + $0x10] sm:$0xff pattern:$0x73625140] %v4795
          %4893 = vst.sshfl [vmem:[#allocation1 + $0x18] sm:$0xff pattern:$0x73625140] %v4796
          %4894 = vst.sshfl [vmem:[#allocation1 + $0x20] sm:$0xff pattern:$0x73625140] %v4797
          %s4895 = scalar_lea.vmem [#allocation1], 2
          %v4896 = vld [vmem:[%s4895] ss:$4 sm:$0xff]
          %s4897 = scalar_lea.vmem [#allocation1], 34
          %v4898 = vld [vmem:[%s4897] ss:$4 sm:$0xff]
          %s4901 = scalar_lea.vmem [#allocation5], 60
          %4902 = vst [vmem:[%s4901] sm:$0xff] %v4896
          %4903 = vst [vmem:[%s4901 + $0x8] sm:$0x3] %v4898
          %4904 = vst.sshfl [vmem:[#allocation1] sm:$0xff pattern:$0x73625140] %v4793
          %4905 = vst.sshfl [vmem:[#allocation1 + $0x8] sm:$0xff pattern:$0x73625140] %v4794
          %4906 = vst.sshfl [vmem:[#allocation1 + $0x10] sm:$0xff pattern:$0x73625140] %v4795
          %4907 = vst.sshfl [vmem:[#allocation1 + $0x18] sm:$0xff pattern:$0x73625140] %v4796
          %4908 = vst.sshfl [vmem:[#allocation1 + $0x20] sm:$0xff pattern:$0x73625140] %v4797
          %s4909 = scalar_lea.vmem [#allocation1], 3
          %v4910 = vld [vmem:[%s4909] ss:$4 sm:$0xff]
          %s4911 = scalar_lea.vmem [#allocation1], 35
          %v4912 = vld [vmem:[%s4911] ss:$4 sm:$0xff]
          %s4915 = scalar_lea.vmem [#allocation5], 70
          %4916 = vst [vmem:[%s4915] sm:$0xff] %v4910
          %4917 = vst [vmem:[%s4915 + $0x8] sm:$0x3] %v4912
          %v4922 = vrot.slane %v4799, 6
          %v4923 = vrot.slane %v4800, 4
          %v4924 = vrot.slane %v4801, 2
          %v4925 = vsel %vm809, %v4798, %v4922
          %v4926 = vsel %vm4811, %v4923, %v4924
          %v4927 = vsel %vm4813, %v4925, %v4926
          %s4929 = scalar_lea.vmem [#allocation5], 80
          %4930 = vst [vmem:[%s4929] sm:$0xff] %v4927
          %4931 = vst [vmem:[%s4929 + $0x8] sm:$0x3] %v4802
          %4933 = vst.sshfl [vmem:[#allocation1] sm:$0xff pattern:$0x73625140] %v4798
          %4934 = vst.sshfl [vmem:[#allocation1 + $0x8] sm:$0xff pattern:$0x73625140] %v4799
          %4935 = vst.sshfl [vmem:[#allocation1 + $0x10] sm:$0xff pattern:$0x73625140] %v4800
          %4936 = vst.sshfl [vmem:[#allocation1 + $0x18] sm:$0xff pattern:$0x73625140] %v4801
          %4937 = vst.sshfl [vmem:[#allocation1 + $0x20] sm:$0xff pattern:$0x73625140] %v4802
          %s4938 = scalar_lea.vmem [#allocation1], 1
          %v4939 = vld [vmem:[%s4938] ss:$4 sm:$0xff]
          %s4940 = scalar_lea.vmem [#allocation1], 33
          %v4941 = vld [vmem:[%s4940] ss:$4 sm:$0xff]
          %s4944 = scalar_lea.vmem [#allocation5], 90
          %4945 = vst [vmem:[%s4944] sm:$0xff] %v4939
          %4946 = vst [vmem:[%s4944 + $0x8] sm:$0x3] %v4941
          %4947 = vst [vmem:[#allocation6] sm:$0xff] 0.0
        $region108: #{cnn_forward.1} parent=63 // pred_fallthru
          _
        %s4948 = smul.u32 %s26, 5
        %s4949 = smul.addr %s4948, 2
        %s4950 = scalar_lea.vmem [#allocation5], %s4949
        %v4951 = vld [vmem:[%s4950] sm:$0xff]
        %v4952 = vld [vmem:[%s4950 + $0x8] sm:$0x3]
        %4955 = vst [vmem:[#allocation1] ss:$4 sm:$0xff] %v4951
        %s4956 = scalar_lea.vmem [#allocation1], 32
        %4957 = vst [vmem:[%s4956] ss:$4 sm:$0xff] %v4952
        %v4958 = vld.sshfl [vmem:[#allocation1] sm:$0xff pattern:$0x73625140]
        %v4959 = vld.sshfl [vmem:[#allocation1 + $0x8] sm:$0xff pattern:$0x73625140]
        %v4960 = vld.sshfl [vmem:[#allocation1 + $0x10] sm:$0xff pattern:$0x73625140]
        %v4961 = vld.sshfl [vmem:[#allocation1 + $0x18] sm:$0xff pattern:$0x73625140]
        %v4962 = vld.sshfl [vmem:[#allocation1 + $0x20] sm:$0xff pattern:$0x73625140]
        %v4968 = vpack.c.bf16 %v4958, %v4958
        %v4969 = vpack.c.bf16 %v4959, %v4959
        %v4970 = vpack.c.bf16 %v4960, %v4960
        %v4971 = vpack.c.bf16 %v4961, %v4961
        %v4972 = vpack.c.bf16 %v4962, %v4962
        %v4973 = vld [vmem:[#allocation6] sm:$0xff]
        %v4974 = vld [vmem:[%s479] sm:$0xff]
        %v4975 = vld [vmem:[%s479 + $0x8] sm:$0xff]
        %v4976 = vld [vmem:[%s479 + $0x10] sm:$0xff]
        %v4977 = vld [vmem:[%s479 + $0x18] sm:$0xff]
        %v4978 = vld [vmem:[%s479 + $0x20] sm:$0xff]
        %v4979 = vld [vmem:[%s479 + $0x28] sm:$0xff]
        %v4980 = vld [vmem:[%s479 + $0x30] sm:$0xff]
        %v4981 = vld [vmem:[%s479 + $0x38] sm:$0xff]
        %v4982 = vld [vmem:[%s479 + $0x40] sm:$0xff]
        %v4983 = vld [vmem:[%s479 + $0x48] sm:$0xff]
        %v4984 = vld [vmem:[%s479 + $0x50] sm:$0xff]
        %v4985 = vld [vmem:[%s479 + $0x58] sm:$0xff]
        %v4986 = vld [vmem:[%s479 + $0x60] sm:$0xff]
        %v4987 = vld [vmem:[%s479 + $0x68] sm:$0xff]
        %v4988 = vld [vmem:[%s479 + $0x70] sm:$0xff]
        %v4989 = vld [vmem:[%s479 + $0x78] sm:$0xff]
        %v4990 = vld [vmem:[%s479 + $0x80] sm:$0xff]
        %v4991 = vld [vmem:[%s479 + $0x88] sm:$0xff]
        %v4992 = vld [vmem:[%s479 + $0x90] sm:$0xff]
        %v4993 = vld [vmem:[%s479 + $0x98] sm:$0xff]
        %v4994 = vld [vmem:[%s479 + $0xa0] sm:$0xff]
        %v4995 = vld [vmem:[%s479 + $0xa8] sm:$0xff]
        %v4996 = vld [vmem:[%s479 + $0xb0] sm:$0xff]
        %v4997 = vld [vmem:[%s479 + $0xb8] sm:$0xff]
        %v4998 = vld [vmem:[%s479 + $0xc0] sm:$0xff]
        %v4999 = vld [vmem:[%s479 + $0xc8] sm:$0xff]
        %v5000 = vld [vmem:[%s479 + $0xd0] sm:$0xff]
        %v5001 = vld [vmem:[%s479 + $0xd8] sm:$0xff]
        %v5002 = vld [vmem:[%s479 + $0xe0] sm:$0xff]
        %v5003 = vld [vmem:[%s479 + $0xe8] sm:$0xff]
        %v5004 = vld [vmem:[%s479 + $0xf0] sm:$0xff]
        %v5005 = vld [vmem:[%s479 + $0xf8] sm:$0xff]
        %v5006 = vld [vmem:[%s479 + $0x100] sm:$0xff]
        %v5007 = vld [vmem:[%s479 + $0x108] sm:$0xff]
        %v5008 = vld [vmem:[%s479 + $0x110] sm:$0xff]
        %v5009 = vld [vmem:[%s479 + $0x118] sm:$0xff]
        %v5010 = vld [vmem:[%s479 + $0x120] sm:$0xff]
        %v5011 = vld [vmem:[%s479 + $0x128] sm:$0xff]
        %v5012 = vld [vmem:[%s479 + $0x130] sm:$0xff]
        %v5013 = vld [vmem:[%s479 + $0x138] sm:$0xff]
        %v5014 = vld [vmem:[%s479 + $0x140] sm:$0xff]
        %v5015 = vld [vmem:[%s479 + $0x148] sm:$0xff]
        %v5016 = vld [vmem:[%s479 + $0x150] sm:$0xff]
        %v5017 = vld [vmem:[%s479 + $0x158] sm:$0xff]
        %v5018 = vld [vmem:[%s479 + $0x160] sm:$0xff]
        %v5019 = vld [vmem:[%s479 + $0x168] sm:$0xff]
        %v5020 = vld [vmem:[%s479 + $0x170] sm:$0xff]
        %v5021 = vld [vmem:[%s479 + $0x178] sm:$0xff]
        %v5022 = vld [vmem:[%s479 + $0x180] sm:$0xff]
        %v5023 = vld [vmem:[%s479 + $0x188] sm:$0xff]
        %v5024 = vld [vmem:[%s479 + $0x190] sm:$0xff]
        %v5025 = vld [vmem:[%s479 + $0x198] sm:$0xff]
        %v5026 = vld [vmem:[%s479 + $0x1a0] sm:$0xff]
        %v5027 = vld [vmem:[%s479 + $0x1a8] sm:$0xff]
        %v5028 = vld [vmem:[%s479 + $0x1b0] sm:$0xff]
        %v5029 = vld [vmem:[%s479 + $0x1b8] sm:$0xff]
        %v5030 = vld [vmem:[%s479 + $0x1c0] sm:$0xff]
        %v5031 = vld [vmem:[%s479 + $0x1c8] sm:$0xff]
        %v5032 = vld [vmem:[%s479 + $0x1d0] sm:$0xff]
        %v5033 = vld [vmem:[%s479 + $0x1d8] sm:$0xff]
        %v5034 = vld [vmem:[%s479 + $0x1e0] sm:$0xff]
        %v5035 = vld [vmem:[%s479 + $0x1e8] sm:$0xff]
        %v5036 = vld [vmem:[%s479 + $0x1f0] sm:$0xff]
        %v5037 = vld [vmem:[%s479 + $0x1f8] sm:$0xff]
        %v5038 = vld [vmem:[%s479 + $0x200] sm:$0xff]
        %v5039 = vld [vmem:[%s479 + $0x208] sm:$0xff]
        %v5040 = vld [vmem:[%s479 + $0x210] sm:$0xff]
        %v5041 = vld [vmem:[%s479 + $0x218] sm:$0xff]
        %v5042 = vld [vmem:[%s479 + $0x220] sm:$0xff]
        %v5043 = vld [vmem:[%s479 + $0x228] sm:$0xff]
        %v5044 = vld [vmem:[%s479 + $0x230] sm:$0xff]
        %v5045 = vld [vmem:[%s479 + $0x238] sm:$0xff]
        %v5046 = vld [vmem:[%s479 + $0x240] sm:$0xff]
        %v5047 = vld [vmem:[%s479 + $0x248] sm:$0xff]
        %v5048 = vld [vmem:[%s479 + $0x250] sm:$0xff]
        %v5049 = vld [vmem:[%s479 + $0x258] sm:$0xff]
        %v5050 = vld [vmem:[%s479 + $0x260] sm:$0xff]
        %v5051 = vld [vmem:[%s479 + $0x268] sm:$0xff]
        %v5052 = vld [vmem:[%s479 + $0x270] sm:$0xff]
        %v5053 = vld [vmem:[%s479 + $0x278] sm:$0xff]
        %v5054 = vld [vmem:[%s479 + $0x280] sm:$0xff]
        %v5055 = vld [vmem:[%s479 + $0x288] sm:$0xff]
        %v5056 = vld [vmem:[%s479 + $0x290] sm:$0xff]
        %v5057 = vld [vmem:[%s479 + $0x298] sm:$0xff]
        %v5058 = vld [vmem:[%s479 + $0x2a0] sm:$0xff]
        %v5059 = vld [vmem:[%s479 + $0x2a8] sm:$0xff]
        %v5060 = vld [vmem:[%s479 + $0x2b0] sm:$0xff]
        %v5061 = vld [vmem:[%s479 + $0x2b8] sm:$0xff]
        %v5062 = vld [vmem:[%s479 + $0x2c0] sm:$0xff]
        %v5063 = vld [vmem:[%s479 + $0x2c8] sm:$0xff]
        %v5064 = vld [vmem:[%s479 + $0x2d0] sm:$0xff]
        %v5065 = vld [vmem:[%s479 + $0x2d8] sm:$0xff]
        %v5066 = vld [vmem:[%s479 + $0x2e0] sm:$0xff]
        %v5067 = vld [vmem:[%s479 + $0x2e8] sm:$0xff]
        %v5068 = vld [vmem:[%s479 + $0x2f0] sm:$0xff]
        %v5069 = vld [vmem:[%s479 + $0x2f8] sm:$0xff]
        %v5070 = vld [vmem:[%s479 + $0x300] sm:$0xff]
        %v5071 = vld [vmem:[%s479 + $0x308] sm:$0xff]
        %v5072 = vld [vmem:[%s479 + $0x310] sm:$0xff]
        %v5073 = vld [vmem:[%s479 + $0x318] sm:$0xff]
        %v5074 = vld [vmem:[%s479 + $0x320] sm:$0xff]
        %v5075 = vld [vmem:[%s479 + $0x328] sm:$0xff]
        %v5076 = vld [vmem:[%s479 + $0x330] sm:$0xff]
        %v5077 = vld [vmem:[%s479 + $0x338] sm:$0xff]
        %v5078 = vld [vmem:[%s479 + $0x340] sm:$0xff]
        %v5079 = vld [vmem:[%s479 + $0x348] sm:$0xff]
        %v5080 = vld [vmem:[%s479 + $0x350] sm:$0xff]
        %v5081 = vld [vmem:[%s479 + $0x358] sm:$0xff]
        %v5082 = vld [vmem:[%s479 + $0x360] sm:$0xff]
        %v5083 = vld [vmem:[%s479 + $0x368] sm:$0xff]
        %v5084 = vld [vmem:[%s479 + $0x370] sm:$0xff]
        %v5085 = vld [vmem:[%s479 + $0x378] sm:$0xff]
        %v5086 = vld [vmem:[%s479 + $0x380] sm:$0xff]
        %v5087 = vld [vmem:[%s479 + $0x388] sm:$0xff]
        %v5088 = vld [vmem:[%s479 + $0x390] sm:$0xff]
        %v5089 = vld [vmem:[%s479 + $0x398] sm:$0xff]
        %v5090 = vld [vmem:[%s479 + $0x3a0] sm:$0xff]
        %v5091 = vld [vmem:[%s479 + $0x3a8] sm:$0xff]
        %v5092 = vld [vmem:[%s479 + $0x3b0] sm:$0xff]
        %v5093 = vld [vmem:[%s479 + $0x3b8] sm:$0xff]
        %v5094 = vld [vmem:[%s479 + $0x3c0] sm:$0xff]
        %v5095 = vld [vmem:[%s479 + $0x3c8] sm:$0xff]
        %v5096 = vld [vmem:[%s479 + $0x3d0] sm:$0xff]
        %v5097 = vld [vmem:[%s479 + $0x3d8] sm:$0xff]
        %v5098 = vld [vmem:[%s479 + $0x3e0] sm:$0xff]
        %v5099 = vld [vmem:[%s479 + $0x3e8] sm:$0xff]
        %v5100 = vld [vmem:[%s479 + $0x3f0] sm:$0xff]
        %v5101 = vld [vmem:[%s479 + $0x3f8] sm:$0xff]
        %v5102 = vld [vmem:[%s479 + $0x400] sm:$0xff]
        %v5103 = vld [vmem:[%s479 + $0x408] sm:$0xff]
        %v5104 = vld [vmem:[%s479 + $0x410] sm:$0xff]
        %v5105 = vld [vmem:[%s479 + $0x418] sm:$0xff]
        %v5106 = vld [vmem:[%s479 + $0x420] sm:$0xff]
        %v5107 = vld [vmem:[%s479 + $0x428] sm:$0xff]
        %v5108 = vld [vmem:[%s479 + $0x430] sm:$0xff]
        %v5109 = vld [vmem:[%s479 + $0x438] sm:$0xff]
        %v5110 = vld [vmem:[%s479 + $0x440] sm:$0xff]
        %v5111 = vld [vmem:[%s479 + $0x448] sm:$0xff]
        %v5112 = vld [vmem:[%s479 + $0x450] sm:$0xff]
        %v5113 = vld [vmem:[%s479 + $0x458] sm:$0xff]
        %v5114 = vld [vmem:[%s479 + $0x460] sm:$0xff]
        %v5115 = vld [vmem:[%s479 + $0x468] sm:$0xff]
        %v5116 = vld [vmem:[%s479 + $0x470] sm:$0xff]
        %v5117 = vld [vmem:[%s479 + $0x478] sm:$0xff]
        %v5118 = vld [vmem:[%s479 + $0x480] sm:$0xff]
        %v5119 = vld [vmem:[%s479 + $0x488] sm:$0xff]
        %v5120 = vld [vmem:[%s479 + $0x490] sm:$0xff]
        %v5121 = vld [vmem:[%s479 + $0x498] sm:$0xff]
        %v5122 = vld [vmem:[%s479 + $0x4a0] sm:$0xff]
        %v5123 = vld [vmem:[%s479 + $0x4a8] sm:$0xff]
        %v5124 = vld [vmem:[%s479 + $0x4b0] sm:$0xff]
        %v5125 = vld [vmem:[%s479 + $0x4b8] sm:$0xff]
        %v5126 = vld [vmem:[%s479 + $0x4c0] sm:$0xff]
        %v5127 = vld [vmem:[%s479 + $0x4c8] sm:$0xff]
        %v5128 = vld [vmem:[%s479 + $0x4d0] sm:$0xff]
        %v5129 = vld [vmem:[%s479 + $0x4d8] sm:$0xff]
        %v5130 = vld [vmem:[%s479 + $0x4e0] sm:$0xff]
        %v5131 = vld [vmem:[%s479 + $0x4e8] sm:$0xff]
        %v5132 = vld [vmem:[%s479 + $0x4f0] sm:$0xff]
        %v5133 = vld [vmem:[%s479 + $0x4f8] sm:$0xff]
        %v5294 = vunpack.c.l.b16 %v4974
        %v5295 = vunpack.c.h.b16 %v4974
        %v5296 = vunpack.c.l.b16 %v4975
        %v5297 = vunpack.c.h.b16 %v4975
        %v5298 = vunpack.c.l.b16 %v4976
        %v5299 = vunpack.c.h.b16 %v4976
        %v5300 = vunpack.c.l.b16 %v4977
        %v5301 = vunpack.c.h.b16 %v4977
        %v5302 = vunpack.c.l.b16 %v4978
        %v5303 = vunpack.c.h.b16 %v4978
        %v5304 = vunpack.c.l.b16 %v4979
        %v5305 = vunpack.c.h.b16 %v4979
        %v5306 = vunpack.c.l.b16 %v4980
        %v5307 = vunpack.c.h.b16 %v4980
        %v5308 = vunpack.c.l.b16 %v4981
        %v5309 = vunpack.c.h.b16 %v4981
        %v5310 = vunpack.c.l.b16 %v4982
        %v5311 = vunpack.c.h.b16 %v4982
        %v5312 = vunpack.c.l.b16 %v4983
        %v5313 = vunpack.c.h.b16 %v4983
        %v5314 = vunpack.c.l.b16 %v4984
        %v5315 = vunpack.c.h.b16 %v4984
        %v5316 = vunpack.c.l.b16 %v4985
        %v5317 = vunpack.c.h.b16 %v4985
        %v5318 = vunpack.c.l.b16 %v4986
        %v5319 = vunpack.c.h.b16 %v4986
        %v5320 = vunpack.c.l.b16 %v4987
        %v5321 = vunpack.c.h.b16 %v4987
        %v5322 = vunpack.c.l.b16 %v4988
        %v5323 = vunpack.c.h.b16 %v4988
        %v5324 = vunpack.c.l.b16 %v4989
        %v5325 = vunpack.c.h.b16 %v4989
        %v5326 = vunpack.c.l.b16 %v4990
        %v5327 = vunpack.c.h.b16 %v4990
        %v5328 = vunpack.c.l.b16 %v4991
        %v5329 = vunpack.c.h.b16 %v4991
        %v5330 = vunpack.c.l.b16 %v4992
        %v5331 = vunpack.c.h.b16 %v4992
        %v5332 = vunpack.c.l.b16 %v4993
        %v5333 = vunpack.c.h.b16 %v4993
        %v5334 = vunpack.c.l.b16 %v4994
        %v5335 = vunpack.c.h.b16 %v4994
        %v5336 = vunpack.c.l.b16 %v4995
        %v5337 = vunpack.c.h.b16 %v4995
        %v5338 = vunpack.c.l.b16 %v4996
        %v5339 = vunpack.c.h.b16 %v4996
        %v5340 = vunpack.c.l.b16 %v4997
        %v5341 = vunpack.c.h.b16 %v4997
        %v5342 = vunpack.c.l.b16 %v4998
        %v5343 = vunpack.c.h.b16 %v4998
        %v5344 = vunpack.c.l.b16 %v4999
        %v5345 = vunpack.c.h.b16 %v4999
        %v5346 = vunpack.c.l.b16 %v5000
        %v5347 = vunpack.c.h.b16 %v5000
        %v5348 = vunpack.c.l.b16 %v5001
        %v5349 = vunpack.c.h.b16 %v5001
        %v5350 = vunpack.c.l.b16 %v5002
        %v5351 = vunpack.c.h.b16 %v5002
        %v5352 = vunpack.c.l.b16 %v5003
        %v5353 = vunpack.c.h.b16 %v5003
        %v5354 = vunpack.c.l.b16 %v5004
        %v5355 = vunpack.c.h.b16 %v5004
        %v5356 = vunpack.c.l.b16 %v5005
        %v5357 = vunpack.c.h.b16 %v5005
        %v5358 = vunpack.c.l.b16 %v5006
        %v5359 = vunpack.c.h.b16 %v5006
        %v5360 = vunpack.c.l.b16 %v5007
        %v5361 = vunpack.c.h.b16 %v5007
        %v5362 = vunpack.c.l.b16 %v5008
        %v5363 = vunpack.c.h.b16 %v5008
        %v5364 = vunpack.c.l.b16 %v5009
        %v5365 = vunpack.c.h.b16 %v5009
        %v5366 = vunpack.c.l.b16 %v5010
        %v5367 = vunpack.c.h.b16 %v5010
        %v5368 = vunpack.c.l.b16 %v5011
        %v5369 = vunpack.c.h.b16 %v5011
        %v5370 = vunpack.c.l.b16 %v5012
        %v5371 = vunpack.c.h.b16 %v5012
        %v5372 = vunpack.c.l.b16 %v5013
        %v5373 = vunpack.c.h.b16 %v5013
        %v5374 = vunpack.c.l.b16 %v5014
        %v5375 = vunpack.c.h.b16 %v5014
        %v5376 = vunpack.c.l.b16 %v5015
        %v5377 = vunpack.c.h.b16 %v5015
        %v5378 = vunpack.c.l.b16 %v5016
        %v5379 = vunpack.c.h.b16 %v5016
        %v5380 = vunpack.c.l.b16 %v5017
        %v5381 = vunpack.c.h.b16 %v5017
        %v5382 = vunpack.c.l.b16 %v5018
        %v5383 = vunpack.c.h.b16 %v5018
        %v5384 = vunpack.c.l.b16 %v5019
        %v5385 = vunpack.c.h.b16 %v5019
        %v5386 = vunpack.c.l.b16 %v5020
        %v5387 = vunpack.c.h.b16 %v5020
        %v5388 = vunpack.c.l.b16 %v5021
        %v5389 = vunpack.c.h.b16 %v5021
        %v5390 = vunpack.c.l.b16 %v5022
        %v5391 = vunpack.c.h.b16 %v5022
        %v5392 = vunpack.c.l.b16 %v5023
        %v5393 = vunpack.c.h.b16 %v5023
        %v5394 = vunpack.c.l.b16 %v5024
        %v5395 = vunpack.c.h.b16 %v5024
        %v5396 = vunpack.c.l.b16 %v5025
        %v5397 = vunpack.c.h.b16 %v5025
        %v5398 = vunpack.c.l.b16 %v5026
        %v5399 = vunpack.c.h.b16 %v5026
        %v5400 = vunpack.c.l.b16 %v5027
        %v5401 = vunpack.c.h.b16 %v5027
        %v5402 = vunpack.c.l.b16 %v5028
        %v5403 = vunpack.c.h.b16 %v5028
        %v5404 = vunpack.c.l.b16 %v5029
        %v5405 = vunpack.c.h.b16 %v5029
        %v5406 = vunpack.c.l.b16 %v5030
        %v5407 = vunpack.c.h.b16 %v5030
        %v5408 = vunpack.c.l.b16 %v5031
        %v5409 = vunpack.c.h.b16 %v5031
        %v5410 = vunpack.c.l.b16 %v5032
        %v5411 = vunpack.c.h.b16 %v5032
        %v5412 = vunpack.c.l.b16 %v5033
        %v5413 = vunpack.c.h.b16 %v5033
        %v5414 = vunpack.c.l.b16 %v5034
        %v5415 = vunpack.c.h.b16 %v5034
        %v5416 = vunpack.c.l.b16 %v5035
        %v5417 = vunpack.c.h.b16 %v5035
        %v5418 = vunpack.c.l.b16 %v5036
        %v5419 = vunpack.c.h.b16 %v5036
        %v5420 = vunpack.c.l.b16 %v5037
        %v5421 = vunpack.c.h.b16 %v5037
        %v5422 = vunpack.c.l.b16 %v5038
        %v5423 = vunpack.c.h.b16 %v5038
        %v5424 = vunpack.c.l.b16 %v5039
        %v5425 = vunpack.c.h.b16 %v5039
        %v5426 = vunpack.c.l.b16 %v5040
        %v5427 = vunpack.c.h.b16 %v5040
        %v5428 = vunpack.c.l.b16 %v5041
        %v5429 = vunpack.c.h.b16 %v5041
        %v5430 = vunpack.c.l.b16 %v5042
        %v5431 = vunpack.c.h.b16 %v5042
        %v5432 = vunpack.c.l.b16 %v5043
        %v5433 = vunpack.c.h.b16 %v5043
        %v5434 = vunpack.c.l.b16 %v5044
        %v5435 = vunpack.c.h.b16 %v5044
        %v5436 = vunpack.c.l.b16 %v5045
        %v5437 = vunpack.c.h.b16 %v5045
        %v5438 = vunpack.c.l.b16 %v5046
        %v5439 = vunpack.c.h.b16 %v5046
        %v5440 = vunpack.c.l.b16 %v5047
        %v5441 = vunpack.c.h.b16 %v5047
        %v5442 = vunpack.c.l.b16 %v5048
        %v5443 = vunpack.c.h.b16 %v5048
        %v5444 = vunpack.c.l.b16 %v5049
        %v5445 = vunpack.c.h.b16 %v5049
        %v5446 = vunpack.c.l.b16 %v5050
        %v5447 = vunpack.c.h.b16 %v5050
        %v5448 = vunpack.c.l.b16 %v5051
        %v5449 = vunpack.c.h.b16 %v5051
        %v5450 = vunpack.c.l.b16 %v5052
        %v5451 = vunpack.c.h.b16 %v5052
        %v5452 = vunpack.c.l.b16 %v5053
        %v5453 = vunpack.c.h.b16 %v5053
        %v5454 = vunpack.c.l.b16 %v5054
        %v5455 = vunpack.c.h.b16 %v5054
        %v5456 = vunpack.c.l.b16 %v5055
        %v5457 = vunpack.c.h.b16 %v5055
        %v5458 = vunpack.c.l.b16 %v5056
        %v5459 = vunpack.c.h.b16 %v5056
        %v5460 = vunpack.c.l.b16 %v5057
        %v5461 = vunpack.c.h.b16 %v5057
        %v5462 = vunpack.c.l.b16 %v5058
        %v5463 = vunpack.c.h.b16 %v5058
        %v5464 = vunpack.c.l.b16 %v5059
        %v5465 = vunpack.c.h.b16 %v5059
        %v5466 = vunpack.c.l.b16 %v5060
        %v5467 = vunpack.c.h.b16 %v5060
        %v5468 = vunpack.c.l.b16 %v5061
        %v5469 = vunpack.c.h.b16 %v5061
        %v5470 = vunpack.c.l.b16 %v5062
        %v5471 = vunpack.c.h.b16 %v5062
        %v5472 = vunpack.c.l.b16 %v5063
        %v5473 = vunpack.c.h.b16 %v5063
        %v5474 = vunpack.c.l.b16 %v5064
        %v5475 = vunpack.c.h.b16 %v5064
        %v5476 = vunpack.c.l.b16 %v5065
        %v5477 = vunpack.c.h.b16 %v5065
        %v5478 = vunpack.c.l.b16 %v5066
        %v5479 = vunpack.c.h.b16 %v5066
        %v5480 = vunpack.c.l.b16 %v5067
        %v5481 = vunpack.c.h.b16 %v5067
        %v5482 = vunpack.c.l.b16 %v5068
        %v5483 = vunpack.c.h.b16 %v5068
        %v5484 = vunpack.c.l.b16 %v5069
        %v5485 = vunpack.c.h.b16 %v5069
        %v5486 = vunpack.c.l.b16 %v5070
        %v5487 = vunpack.c.h.b16 %v5070
        %v5488 = vunpack.c.l.b16 %v5071
        %v5489 = vunpack.c.h.b16 %v5071
        %v5490 = vunpack.c.l.b16 %v5072
        %v5491 = vunpack.c.h.b16 %v5072
        %v5492 = vunpack.c.l.b16 %v5073
        %v5493 = vunpack.c.h.b16 %v5073
        %v5494 = vunpack.c.l.b16 %v5074
        %v5495 = vunpack.c.h.b16 %v5074
        %v5496 = vunpack.c.l.b16 %v5075
        %v5497 = vunpack.c.h.b16 %v5075
        %v5498 = vunpack.c.l.b16 %v5076
        %v5499 = vunpack.c.h.b16 %v5076
        %v5500 = vunpack.c.l.b16 %v5077
        %v5501 = vunpack.c.h.b16 %v5077
        %v5502 = vunpack.c.l.b16 %v5078
        %v5503 = vunpack.c.h.b16 %v5078
        %v5504 = vunpack.c.l.b16 %v5079
        %v5505 = vunpack.c.h.b16 %v5079
        %v5506 = vunpack.c.l.b16 %v5080
        %v5507 = vunpack.c.h.b16 %v5080
        %v5508 = vunpack.c.l.b16 %v5081
        %v5509 = vunpack.c.h.b16 %v5081
        %v5510 = vunpack.c.l.b16 %v5082
        %v5511 = vunpack.c.h.b16 %v5082
        %v5512 = vunpack.c.l.b16 %v5083
        %v5513 = vunpack.c.h.b16 %v5083
        %v5514 = vunpack.c.l.b16 %v5084
        %v5515 = vunpack.c.h.b16 %v5084
        %v5516 = vunpack.c.l.b16 %v5085
        %v5517 = vunpack.c.h.b16 %v5085
        %v5518 = vunpack.c.l.b16 %v5086
        %v5519 = vunpack.c.h.b16 %v5086
        %v5520 = vunpack.c.l.b16 %v5087
        %v5521 = vunpack.c.h.b16 %v5087
        %v5522 = vunpack.c.l.b16 %v5088
        %v5523 = vunpack.c.h.b16 %v5088
        %v5524 = vunpack.c.l.b16 %v5089
        %v5525 = vunpack.c.h.b16 %v5089
        %v5526 = vunpack.c.l.b16 %v5090
        %v5527 = vunpack.c.h.b16 %v5090
        %v5528 = vunpack.c.l.b16 %v5091
        %v5529 = vunpack.c.h.b16 %v5091
        %v5530 = vunpack.c.l.b16 %v5092
        %v5531 = vunpack.c.h.b16 %v5092
        %v5532 = vunpack.c.l.b16 %v5093
        %v5533 = vunpack.c.h.b16 %v5093
        %v5534 = vunpack.c.l.b16 %v5094
        %v5535 = vunpack.c.h.b16 %v5094
        %v5536 = vunpack.c.l.b16 %v5095
        %v5537 = vunpack.c.h.b16 %v5095
        %v5538 = vunpack.c.l.b16 %v5096
        %v5539 = vunpack.c.h.b16 %v5096
        %v5540 = vunpack.c.l.b16 %v5097
        %v5541 = vunpack.c.h.b16 %v5097
        %v5542 = vunpack.c.l.b16 %v5098
        %v5543 = vunpack.c.h.b16 %v5098
        %v5544 = vunpack.c.l.b16 %v5099
        %v5545 = vunpack.c.h.b16 %v5099
        %v5546 = vunpack.c.l.b16 %v5100
        %v5547 = vunpack.c.h.b16 %v5100
        %v5548 = vunpack.c.l.b16 %v5101
        %v5549 = vunpack.c.h.b16 %v5101
        %v5550 = vunpack.c.l.b16 %v5102
        %v5551 = vunpack.c.h.b16 %v5102
        %v5552 = vunpack.c.l.b16 %v5103
        %v5553 = vunpack.c.h.b16 %v5103
        %v5554 = vunpack.c.l.b16 %v5104
        %v5555 = vunpack.c.h.b16 %v5104
        %v5556 = vunpack.c.l.b16 %v5105
        %v5557 = vunpack.c.h.b16 %v5105
        %v5558 = vunpack.c.l.b16 %v5106
        %v5559 = vunpack.c.h.b16 %v5106
        %v5560 = vunpack.c.l.b16 %v5107
        %v5561 = vunpack.c.h.b16 %v5107
        %v5562 = vunpack.c.l.b16 %v5108
        %v5563 = vunpack.c.h.b16 %v5108
        %v5564 = vunpack.c.l.b16 %v5109
        %v5565 = vunpack.c.h.b16 %v5109
        %v5566 = vunpack.c.l.b16 %v5110
        %v5567 = vunpack.c.h.b16 %v5110
        %v5568 = vunpack.c.l.b16 %v5111
        %v5569 = vunpack.c.h.b16 %v5111
        %v5570 = vunpack.c.l.b16 %v5112
        %v5571 = vunpack.c.h.b16 %v5112
        %v5572 = vunpack.c.l.b16 %v5113
        %v5573 = vunpack.c.h.b16 %v5113
        %v5574 = vunpack.c.l.b16 %v5114
        %v5575 = vunpack.c.h.b16 %v5114
        %v5576 = vunpack.c.l.b16 %v5115
        %v5577 = vunpack.c.h.b16 %v5115
        %v5578 = vunpack.c.l.b16 %v5116
        %v5579 = vunpack.c.h.b16 %v5116
        %v5580 = vunpack.c.l.b16 %v5117
        %v5581 = vunpack.c.h.b16 %v5117
        %v5582 = vunpack.c.l.b16 %v5118
        %v5583 = vunpack.c.h.b16 %v5118
        %v5584 = vunpack.c.l.b16 %v5119
        %v5585 = vunpack.c.h.b16 %v5119
        %v5586 = vunpack.c.l.b16 %v5120
        %v5587 = vunpack.c.h.b16 %v5120
        %v5588 = vunpack.c.l.b16 %v5121
        %v5589 = vunpack.c.h.b16 %v5121
        %v5590 = vunpack.c.l.b16 %v5122
        %v5591 = vunpack.c.h.b16 %v5122
        %v5592 = vunpack.c.l.b16 %v5123
        %v5593 = vunpack.c.h.b16 %v5123
        %v5594 = vunpack.c.l.b16 %v5124
        %v5595 = vunpack.c.h.b16 %v5124
        %v5596 = vunpack.c.l.b16 %v5125
        %v5597 = vunpack.c.h.b16 %v5125
        %v5598 = vunpack.c.l.b16 %v5126
        %v5599 = vunpack.c.h.b16 %v5126
        %v5600 = vunpack.c.l.b16 %v5127
        %v5601 = vunpack.c.h.b16 %v5127
        %v5602 = vunpack.c.l.b16 %v5128
        %v5603 = vunpack.c.h.b16 %v5128
        %v5604 = vunpack.c.l.b16 %v5129
        %v5605 = vunpack.c.h.b16 %v5129
        %v5606 = vunpack.c.l.b16 %v5130
        %v5607 = vunpack.c.h.b16 %v5130
        %v5608 = vunpack.c.l.b16 %v5131
        %v5609 = vunpack.c.h.b16 %v5131
        %v5610 = vunpack.c.l.b16 %v5132
        %v5611 = vunpack.c.h.b16 %v5132
        %v5612 = vunpack.c.l.b16 %v5133
        %v5613 = vunpack.c.h.b16 %v5133
        %v5614 = vpack.c.b16 %v5298, %v5294
        %v5615 = vpack.c.b16 %v5299, %v5295
        %v5616 = vpack.c.b16 %v5300, %v5296
        %v5617 = vpack.c.b16 %v5301, %v5297
        %v5618 = vpack.c.b16 %v5306, %v5302
        %v5619 = vpack.c.b16 %v5307, %v5303
        %v5620 = vpack.c.b16 %v5308, %v5304
        %v5621 = vpack.c.b16 %v5309, %v5305
        %v5622 = vpack.c.b16 %v5314, %v5310
        %v5623 = vpack.c.b16 %v5315, %v5311
        %v5624 = vpack.c.b16 %v5316, %v5312
        %v5625 = vpack.c.b16 %v5317, %v5313
        %v5626 = vpack.c.b16 %v5322, %v5318
        %v5627 = vpack.c.b16 %v5323, %v5319
        %v5628 = vpack.c.b16 %v5324, %v5320
        %v5629 = vpack.c.b16 %v5325, %v5321
        %v5630 = vpack.c.b16 %v5330, %v5326
        %v5631 = vpack.c.b16 %v5331, %v5327
        %v5632 = vpack.c.b16 %v5332, %v5328
        %v5633 = vpack.c.b16 %v5333, %v5329
        %v5634 = vpack.c.b16 %v5338, %v5334
        %v5635 = vpack.c.b16 %v5339, %v5335
        %v5636 = vpack.c.b16 %v5340, %v5336
        %v5637 = vpack.c.b16 %v5341, %v5337
        %v5638 = vpack.c.b16 %v5346, %v5342
        %v5639 = vpack.c.b16 %v5347, %v5343
        %v5640 = vpack.c.b16 %v5348, %v5344
        %v5641 = vpack.c.b16 %v5349, %v5345
        %v5642 = vpack.c.b16 %v5354, %v5350
        %v5643 = vpack.c.b16 %v5355, %v5351
        %v5644 = vpack.c.b16 %v5356, %v5352
        %v5645 = vpack.c.b16 %v5357, %v5353
        %v5646 = vpack.c.b16 %v5362, %v5358
        %v5647 = vpack.c.b16 %v5363, %v5359
        %v5648 = vpack.c.b16 %v5364, %v5360
        %v5649 = vpack.c.b16 %v5365, %v5361
        %v5650 = vpack.c.b16 %v5370, %v5366
        %v5651 = vpack.c.b16 %v5371, %v5367
        %v5652 = vpack.c.b16 %v5372, %v5368
        %v5653 = vpack.c.b16 %v5373, %v5369
        %v5654 = vpack.c.b16 %v5378, %v5374
        %v5655 = vpack.c.b16 %v5379, %v5375
        %v5656 = vpack.c.b16 %v5380, %v5376
        %v5657 = vpack.c.b16 %v5381, %v5377
        %v5658 = vpack.c.b16 %v5386, %v5382
        %v5659 = vpack.c.b16 %v5387, %v5383
        %v5660 = vpack.c.b16 %v5388, %v5384
        %v5661 = vpack.c.b16 %v5389, %v5385
        %v5662 = vpack.c.b16 %v5394, %v5390
        %v5663 = vpack.c.b16 %v5395, %v5391
        %v5664 = vpack.c.b16 %v5396, %v5392
        %v5665 = vpack.c.b16 %v5397, %v5393
        %v5666 = vpack.c.b16 %v5402, %v5398
        %v5667 = vpack.c.b16 %v5403, %v5399
        %v5668 = vpack.c.b16 %v5404, %v5400
        %v5669 = vpack.c.b16 %v5405, %v5401
        %v5670 = vpack.c.b16 %v5410, %v5406
        %v5671 = vpack.c.b16 %v5411, %v5407
        %v5672 = vpack.c.b16 %v5412, %v5408
        %v5673 = vpack.c.b16 %v5413, %v5409
        %v5674 = vpack.c.b16 %v5418, %v5414
        %v5675 = vpack.c.b16 %v5419, %v5415
        %v5676 = vpack.c.b16 %v5420, %v5416
        %v5677 = vpack.c.b16 %v5421, %v5417
        %v5678 = vpack.c.b16 %v5426, %v5422
        %v5679 = vpack.c.b16 %v5427, %v5423
        %v5680 = vpack.c.b16 %v5428, %v5424
        %v5681 = vpack.c.b16 %v5429, %v5425
        %v5682 = vpack.c.b16 %v5434, %v5430
        %v5683 = vpack.c.b16 %v5435, %v5431
        %v5684 = vpack.c.b16 %v5436, %v5432
        %v5685 = vpack.c.b16 %v5437, %v5433
        %v5686 = vpack.c.b16 %v5442, %v5438
        %v5687 = vpack.c.b16 %v5443, %v5439
        %v5688 = vpack.c.b16 %v5444, %v5440
        %v5689 = vpack.c.b16 %v5445, %v5441
        %v5690 = vpack.c.b16 %v5450, %v5446
        %v5691 = vpack.c.b16 %v5451, %v5447
        %v5692 = vpack.c.b16 %v5452, %v5448
        %v5693 = vpack.c.b16 %v5453, %v5449
        %v5694 = vpack.c.b16 %v5458, %v5454
        %v5695 = vpack.c.b16 %v5459, %v5455
        %v5696 = vpack.c.b16 %v5460, %v5456
        %v5697 = vpack.c.b16 %v5461, %v5457
        %v5698 = vpack.c.b16 %v5466, %v5462
        %v5699 = vpack.c.b16 %v5467, %v5463
        %v5700 = vpack.c.b16 %v5468, %v5464
        %v5701 = vpack.c.b16 %v5469, %v5465
        %v5702 = vpack.c.b16 %v5474, %v5470
        %v5703 = vpack.c.b16 %v5475, %v5471
        %v5704 = vpack.c.b16 %v5476, %v5472
        %v5705 = vpack.c.b16 %v5477, %v5473
        %v5706 = vpack.c.b16 %v5482, %v5478
        %v5707 = vpack.c.b16 %v5483, %v5479
        %v5708 = vpack.c.b16 %v5484, %v5480
        %v5709 = vpack.c.b16 %v5485, %v5481
        %v5710 = vpack.c.b16 %v5490, %v5486
        %v5711 = vpack.c.b16 %v5491, %v5487
        %v5712 = vpack.c.b16 %v5492, %v5488
        %v5713 = vpack.c.b16 %v5493, %v5489
        %v5714 = vpack.c.b16 %v5498, %v5494
        %v5715 = vpack.c.b16 %v5499, %v5495
        %v5716 = vpack.c.b16 %v5500, %v5496
        %v5717 = vpack.c.b16 %v5501, %v5497
        %v5718 = vpack.c.b16 %v5506, %v5502
        %v5719 = vpack.c.b16 %v5507, %v5503
        %v5720 = vpack.c.b16 %v5508, %v5504
        %v5721 = vpack.c.b16 %v5509, %v5505
        %v5722 = vpack.c.b16 %v5514, %v5510
        %v5723 = vpack.c.b16 %v5515, %v5511
        %v5724 = vpack.c.b16 %v5516, %v5512
        %v5725 = vpack.c.b16 %v5517, %v5513
        %v5726 = vpack.c.b16 %v5522, %v5518
        %v5727 = vpack.c.b16 %v5523, %v5519
        %v5728 = vpack.c.b16 %v5524, %v5520
        %v5729 = vpack.c.b16 %v5525, %v5521
        %v5730 = vpack.c.b16 %v5530, %v5526
        %v5731 = vpack.c.b16 %v5531, %v5527
        %v5732 = vpack.c.b16 %v5532, %v5528
        %v5733 = vpack.c.b16 %v5533, %v5529
        %v5734 = vpack.c.b16 %v5538, %v5534
        %v5735 = vpack.c.b16 %v5539, %v5535
        %v5736 = vpack.c.b16 %v5540, %v5536
        %v5737 = vpack.c.b16 %v5541, %v5537
        %v5738 = vpack.c.b16 %v5546, %v5542
        %v5739 = vpack.c.b16 %v5547, %v5543
        %v5740 = vpack.c.b16 %v5548, %v5544
        %v5741 = vpack.c.b16 %v5549, %v5545
        %v5742 = vpack.c.b16 %v5554, %v5550
        %v5743 = vpack.c.b16 %v5555, %v5551
        %v5744 = vpack.c.b16 %v5556, %v5552
        %v5745 = vpack.c.b16 %v5557, %v5553
        %v5746 = vpack.c.b16 %v5562, %v5558
        %v5747 = vpack.c.b16 %v5563, %v5559
        %v5748 = vpack.c.b16 %v5564, %v5560
        %v5749 = vpack.c.b16 %v5565, %v5561
        %v5750 = vpack.c.b16 %v5570, %v5566
        %v5751 = vpack.c.b16 %v5571, %v5567
        %v5752 = vpack.c.b16 %v5572, %v5568
        %v5753 = vpack.c.b16 %v5573, %v5569
        %v5754 = vpack.c.b16 %v5578, %v5574
        %v5755 = vpack.c.b16 %v5579, %v5575
        %v5756 = vpack.c.b16 %v5580, %v5576
        %v5757 = vpack.c.b16 %v5581, %v5577
        %v5758 = vpack.c.b16 %v5586, %v5582
        %v5759 = vpack.c.b16 %v5587, %v5583
        %v5760 = vpack.c.b16 %v5588, %v5584
        %v5761 = vpack.c.b16 %v5589, %v5585
        %v5762 = vpack.c.b16 %v5594, %v5590
        %v5763 = vpack.c.b16 %v5595, %v5591
        %v5764 = vpack.c.b16 %v5596, %v5592
        %v5765 = vpack.c.b16 %v5597, %v5593
        %v5766 = vpack.c.b16 %v5602, %v5598
        %v5767 = vpack.c.b16 %v5603, %v5599
        %v5768 = vpack.c.b16 %v5604, %v5600
        %v5769 = vpack.c.b16 %v5605, %v5601
        %v5770 = vpack.c.b16 %v5610, %v5606
        %v5771 = vpack.c.b16 %v5611, %v5607
        %v5772 = vpack.c.b16 %v5612, %v5608
        %v5773 = vpack.c.b16 %v5613, %v5609
        %5934 = vmatpush.bf16.msra.mxu0 %v5642
        %5935 = vmatpush.bf16.msra.mxu0 %v5638
        %5936 = vmatpush.bf16.msra.mxu0 %v5634
        %5937 = vmatpush.bf16.msra.mxu0 %v5630
        %5938 = vmatpush.bf16.msra.mxu0 %v5626
        %5939 = vmatpush.bf16.msra.mxu0 %v5622
        %5940 = vmatpush.bf16.msra.mxu0 %v5618
        %5941 = vmatpush.bf16.msra.mxu0 %v5614
        %5942 = vmatmul.bf16.gmra.mxu0 %v4968
        %v5943 = vpop.f32.mrf.mxu0
        %v5944 = vadd.f32 0.0, %v5943
        %v5945 = vpop.f32.mrf.mxu0
        %5946 = vdwg.mxu0
        %5947 = vmatpush.bf16.msra.mxu0 %v5674
        %5948 = vmatpush.bf16.msra.mxu0 %v5670
        %5949 = vmatpush.bf16.msra.mxu0 %v5666
        %5950 = vmatpush.bf16.msra.mxu0 %v5662
        %5951 = vmatpush.bf16.msra.mxu0 %v5658
        %5952 = vmatpush.bf16.msra.mxu0 %v5654
        %5953 = vmatpush.bf16.msra.mxu0 %v5650
        %5954 = vmatpush.bf16.msra.mxu0 %v5646
        %5955 = vmatmul.bf16.gmra.mxu0 %v4969
        %v5956 = vpop.f32.mrf.mxu0
        %v5957 = vadd.f32 %v5944, %v5956
        %v5958 = vpop.f32.mrf.mxu0
        %5959 = vdwg.mxu0
        %5960 = vmatpush.bf16.msra.mxu0 %v5706
        %5961 = vmatpush.bf16.msra.mxu0 %v5702
        %5962 = vmatpush.bf16.msra.mxu0 %v5698
        %5963 = vmatpush.bf16.msra.mxu0 %v5694
        %5964 = vmatpush.bf16.msra.mxu0 %v5690
        %5965 = vmatpush.bf16.msra.mxu0 %v5686
        %5966 = vmatpush.bf16.msra.mxu0 %v5682
        %5967 = vmatpush.bf16.msra.mxu0 %v5678
        %5968 = vmatmul.bf16.gmra.mxu0 %v4970
        %v5969 = vpop.f32.mrf.mxu0
        %v5970 = vadd.f32 %v5957, %v5969
        %v5971 = vpop.f32.mrf.mxu0
        %5972 = vdwg.mxu0
        %5973 = vmatpush.bf16.msra.mxu0 %v5738
        %5974 = vmatpush.bf16.msra.mxu0 %v5734
        %5975 = vmatpush.bf16.msra.mxu0 %v5730
        %5976 = vmatpush.bf16.msra.mxu0 %v5726
        %5977 = vmatpush.bf16.msra.mxu0 %v5722
        %5978 = vmatpush.bf16.msra.mxu0 %v5718
        %5979 = vmatpush.bf16.msra.mxu0 %v5714
        %5980 = vmatpush.bf16.msra.mxu0 %v5710
        %5981 = vmatmul.bf16.gmra.mxu0 %v4971
        %v5982 = vpop.f32.mrf.mxu0
        %v5983 = vadd.f32 %v5970, %v5982
        %v5984 = vpop.f32.mrf.mxu0
        %5985 = vdwg.mxu0
        %5986 = vmatpush.bf16.msra.mxu0 %v5770
        %5987 = vmatpush.bf16.msra.mxu0 %v5766
        %5988 = vmatpush.bf16.msra.mxu0 %v5762
        %5989 = vmatpush.bf16.msra.mxu0 %v5758
        %5990 = vmatpush.bf16.msra.mxu0 %v5754
        %5991 = vmatpush.bf16.msra.mxu0 %v5750
        %5992 = vmatpush.bf16.msra.mxu0 %v5746
        %5993 = vmatpush.bf16.msra.mxu0 %v5742
        %5994 = vmatmul.bf16.gmra.mxu0 %v4972
        %v5995 = vpop.f32.mrf.mxu0
        %v5996 = vadd.f32 %v5983, %v5995
        %v5997 = vpop.f32.mrf.mxu0
        %5998 = vdwg.mxu0
        %5999 = vmatpush.bf16.msra.mxu0 %v5643
        %6000 = vmatpush.bf16.msra.mxu0 %v5639
        %6001 = vmatpush.bf16.msra.mxu0 %v5635
        %6002 = vmatpush.bf16.msra.mxu0 %v5631
        %6003 = vmatpush.bf16.msra.mxu0 %v5627
        %6004 = vmatpush.bf16.msra.mxu0 %v5623
        %6005 = vmatpush.bf16.msra.mxu0 %v5619
        %6006 = vmatpush.bf16.msra.mxu0 %v5615
        %6007 = vmatmul.bf16.gmra.mxu0 %v4968
        %v6008 = vpop.f32.mrf.mxu0
        %v6009 = vadd.f32 0.0, %v6008
        %v6010 = vpop.f32.mrf.mxu0
        %6011 = vdwg.mxu0
        %6012 = vmatpush.bf16.msra.mxu0 %v5675
        %6013 = vmatpush.bf16.msra.mxu0 %v5671
        %6014 = vmatpush.bf16.msra.mxu0 %v5667
        %6015 = vmatpush.bf16.msra.mxu0 %v5663
        %6016 = vmatpush.bf16.msra.mxu0 %v5659
        %6017 = vmatpush.bf16.msra.mxu0 %v5655
        %6018 = vmatpush.bf16.msra.mxu0 %v5651
        %6019 = vmatpush.bf16.msra.mxu0 %v5647
        %6020 = vmatmul.bf16.gmra.mxu0 %v4969
        %v6021 = vpop.f32.mrf.mxu0
        %v6022 = vadd.f32 %v6009, %v6021
        %v6023 = vpop.f32.mrf.mxu0
        %6024 = vdwg.mxu0
        %6025 = vmatpush.bf16.msra.mxu0 %v5707
        %6026 = vmatpush.bf16.msra.mxu0 %v5703
        %6027 = vmatpush.bf16.msra.mxu0 %v5699
        %6028 = vmatpush.bf16.msra.mxu0 %v5695
        %6029 = vmatpush.bf16.msra.mxu0 %v5691
        %6030 = vmatpush.bf16.msra.mxu0 %v5687
        %6031 = vmatpush.bf16.msra.mxu0 %v5683
        %6032 = vmatpush.bf16.msra.mxu0 %v5679
        %6033 = vmatmul.bf16.gmra.mxu0 %v4970
        %v6034 = vpop.f32.mrf.mxu0
        %v6035 = vadd.f32 %v6022, %v6034
        %v6036 = vpop.f32.mrf.mxu0
        %6037 = vdwg.mxu0
        %6038 = vmatpush.bf16.msra.mxu0 %v5739
        %6039 = vmatpush.bf16.msra.mxu0 %v5735
        %6040 = vmatpush.bf16.msra.mxu0 %v5731
        %6041 = vmatpush.bf16.msra.mxu0 %v5727
        %6042 = vmatpush.bf16.msra.mxu0 %v5723
        %6043 = vmatpush.bf16.msra.mxu0 %v5719
        %6044 = vmatpush.bf16.msra.mxu0 %v5715
        %6045 = vmatpush.bf16.msra.mxu0 %v5711
        %6046 = vmatmul.bf16.gmra.mxu0 %v4971
        %v6047 = vpop.f32.mrf.mxu0
        %v6048 = vadd.f32 %v6035, %v6047
        %v6049 = vpop.f32.mrf.mxu0
        %6050 = vdwg.mxu0
        %6051 = vmatpush.bf16.msra.mxu0 %v5771
        %6052 = vmatpush.bf16.msra.mxu0 %v5767
        %6053 = vmatpush.bf16.msra.mxu0 %v5763
        %6054 = vmatpush.bf16.msra.mxu0 %v5759
        %6055 = vmatpush.bf16.msra.mxu0 %v5755
        %6056 = vmatpush.bf16.msra.mxu0 %v5751
        %6057 = vmatpush.bf16.msra.mxu0 %v5747
        %6058 = vmatpush.bf16.msra.mxu0 %v5743
        %6059 = vmatmul.bf16.gmra.mxu0 %v4972
        %v6060 = vpop.f32.mrf.mxu0
        %v6061 = vadd.f32 %v6048, %v6060
        %v6062 = vpop.f32.mrf.mxu0
        %6063 = vdwg.mxu0
        %6064 = vmatpush.bf16.msra.mxu0 %v5644
        %6065 = vmatpush.bf16.msra.mxu0 %v5640
        %6066 = vmatpush.bf16.msra.mxu0 %v5636
        %6067 = vmatpush.bf16.msra.mxu0 %v5632
        %6068 = vmatpush.bf16.msra.mxu0 %v5628
        %6069 = vmatpush.bf16.msra.mxu0 %v5624
        %6070 = vmatpush.bf16.msra.mxu0 %v5620
        %6071 = vmatpush.bf16.msra.mxu0 %v5616
        %6072 = vmatmul.bf16.gmra.mxu0 %v4968
        %v6073 = vpop.f32.mrf.mxu0
        %v6074 = vadd.f32 0.0, %v6073
        %v6075 = vpop.f32.mrf.mxu0
        %6076 = vdwg.mxu0
        %6077 = vmatpush.bf16.msra.mxu0 %v5676
        %6078 = vmatpush.bf16.msra.mxu0 %v5672
        %6079 = vmatpush.bf16.msra.mxu0 %v5668
        %6080 = vmatpush.bf16.msra.mxu0 %v5664
        %6081 = vmatpush.bf16.msra.mxu0 %v5660
        %6082 = vmatpush.bf16.msra.mxu0 %v5656
        %6083 = vmatpush.bf16.msra.mxu0 %v5652
        %6084 = vmatpush.bf16.msra.mxu0 %v5648
        %6085 = vmatmul.bf16.gmra.mxu0 %v4969
        %v6086 = vpop.f32.mrf.mxu0
        %v6087 = vadd.f32 %v6074, %v6086
        %v6088 = vpop.f32.mrf.mxu0
        %6089 = vdwg.mxu0
        %6090 = vmatpush.bf16.msra.mxu0 %v5708
        %6091 = vmatpush.bf16.msra.mxu0 %v5704
        %6092 = vmatpush.bf16.msra.mxu0 %v5700
        %6093 = vmatpush.bf16.msra.mxu0 %v5696
        %6094 = vmatpush.bf16.msra.mxu0 %v5692
        %6095 = vmatpush.bf16.msra.mxu0 %v5688
        %6096 = vmatpush.bf16.msra.mxu0 %v5684
        %6097 = vmatpush.bf16.msra.mxu0 %v5680
        %6098 = vmatmul.bf16.gmra.mxu0 %v4970
        %v6099 = vpop.f32.mrf.mxu0
        %v6100 = vadd.f32 %v6087, %v6099
        %v6101 = vpop.f32.mrf.mxu0
        %6102 = vdwg.mxu0
        %6103 = vmatpush.bf16.msra.mxu0 %v5740
        %6104 = vmatpush.bf16.msra.mxu0 %v5736
        %6105 = vmatpush.bf16.msra.mxu0 %v5732
        %6106 = vmatpush.bf16.msra.mxu0 %v5728
        %6107 = vmatpush.bf16.msra.mxu0 %v5724
        %6108 = vmatpush.bf16.msra.mxu0 %v5720
        %6109 = vmatpush.bf16.msra.mxu0 %v5716
        %6110 = vmatpush.bf16.msra.mxu0 %v5712
        %6111 = vmatmul.bf16.gmra.mxu0 %v4971
        %v6112 = vpop.f32.mrf.mxu0
        %v6113 = vadd.f32 %v6100, %v6112
        %v6114 = vpop.f32.mrf.mxu0
        %6115 = vdwg.mxu0
        %6116 = vmatpush.bf16.msra.mxu0 %v5772
        %6117 = vmatpush.bf16.msra.mxu0 %v5768
        %6118 = vmatpush.bf16.msra.mxu0 %v5764
        %6119 = vmatpush.bf16.msra.mxu0 %v5760
        %6120 = vmatpush.bf16.msra.mxu0 %v5756
        %6121 = vmatpush.bf16.msra.mxu0 %v5752
        %6122 = vmatpush.bf16.msra.mxu0 %v5748
        %6123 = vmatpush.bf16.msra.mxu0 %v5744
        %6124 = vmatmul.bf16.gmra.mxu0 %v4972
        %v6125 = vpop.f32.mrf.mxu0
        %v6126 = vadd.f32 %v6113, %v6125
        %v6127 = vpop.f32.mrf.mxu0
        %6128 = vdwg.mxu0
        %6129 = vmatpush.bf16.msra.mxu0 %v5645
        %6130 = vmatpush.bf16.msra.mxu0 %v5641
        %6131 = vmatpush.bf16.msra.mxu0 %v5637
        %6132 = vmatpush.bf16.msra.mxu0 %v5633
        %6133 = vmatpush.bf16.msra.mxu0 %v5629
        %6134 = vmatpush.bf16.msra.mxu0 %v5625
        %6135 = vmatpush.bf16.msra.mxu0 %v5621
        %6136 = vmatpush.bf16.msra.mxu0 %v5617
        %6137 = vmatmul.bf16.gmra.mxu0 %v4968
        %v6138 = vpop.f32.mrf.mxu0
        %v6139 = vadd.f32 0.0, %v6138
        %v6140 = vpop.f32.mrf.mxu0
        %6141 = vdwg.mxu0
        %6142 = vmatpush.bf16.msra.mxu0 %v5677
        %6143 = vmatpush.bf16.msra.mxu0 %v5673
        %6144 = vmatpush.bf16.msra.mxu0 %v5669
        %6145 = vmatpush.bf16.msra.mxu0 %v5665
        %6146 = vmatpush.bf16.msra.mxu0 %v5661
        %6147 = vmatpush.bf16.msra.mxu0 %v5657
        %6148 = vmatpush.bf16.msra.mxu0 %v5653
        %6149 = vmatpush.bf16.msra.mxu0 %v5649
        %6150 = vmatmul.bf16.gmra.mxu0 %v4969
        %v6151 = vpop.f32.mrf.mxu0
        %v6152 = vadd.f32 %v6139, %v6151
        %v6153 = vpop.f32.mrf.mxu0
        %6154 = vdwg.mxu0
        %6155 = vmatpush.bf16.msra.mxu0 %v5709
        %6156 = vmatpush.bf16.msra.mxu0 %v5705
        %6157 = vmatpush.bf16.msra.mxu0 %v5701
        %6158 = vmatpush.bf16.msra.mxu0 %v5697
        %6159 = vmatpush.bf16.msra.mxu0 %v5693
        %6160 = vmatpush.bf16.msra.mxu0 %v5689
        %6161 = vmatpush.bf16.msra.mxu0 %v5685
        %6162 = vmatpush.bf16.msra.mxu0 %v5681
        %6163 = vmatmul.bf16.gmra.mxu0 %v4970
        %v6164 = vpop.f32.mrf.mxu0
        %v6165 = vadd.f32 %v6152, %v6164
        %v6166 = vpop.f32.mrf.mxu0
        %6167 = vdwg.mxu0
        %6168 = vmatpush.bf16.msra.mxu0 %v5741
        %6169 = vmatpush.bf16.msra.mxu0 %v5737
        %6170 = vmatpush.bf16.msra.mxu0 %v5733
        %6171 = vmatpush.bf16.msra.mxu0 %v5729
        %6172 = vmatpush.bf16.msra.mxu0 %v5725
        %6173 = vmatpush.bf16.msra.mxu0 %v5721
        %6174 = vmatpush.bf16.msra.mxu0 %v5717
        %6175 = vmatpush.bf16.msra.mxu0 %v5713
        %6176 = vmatmul.bf16.gmra.mxu0 %v4971
        %v6177 = vpop.f32.mrf.mxu0
        %v6178 = vadd.f32 %v6165, %v6177
        %v6179 = vpop.f32.mrf.mxu0
        %6180 = vdwg.mxu0
        %6181 = vmatpush.bf16.msra.mxu0 %v5773
        %6182 = vmatpush.bf16.msra.mxu0 %v5769
        %6183 = vmatpush.bf16.msra.mxu0 %v5765
        %6184 = vmatpush.bf16.msra.mxu0 %v5761
        %6185 = vmatpush.bf16.msra.mxu0 %v5757
        %6186 = vmatpush.bf16.msra.mxu0 %v5753
        %6187 = vmatpush.bf16.msra.mxu0 %v5749
        %6188 = vmatpush.bf16.msra.mxu0 %v5745
        %6189 = vmatmul.bf16.gmra.mxu0 %v4972
        %v6190 = vpop.f32.mrf.mxu0
        %v6191 = vadd.f32 %v6178, %v6190
        %v6192 = vpop.f32.mrf.mxu0
        %6193 = vdwg.mxu0
        %v6198 = vrot.slane %v6061, 6
        %v6199 = vrot.slane %v6126, 4
        %v6200 = vrot.slane %v6191, 2
        %vm6201 = vcmask 1041408
        %v6202 = vsel %vm6201, %v5996, %v6198
        %vm6203 = vcmask 1045508
        %v6204 = vsel %vm6203, %v6199, %v6200
        %vm6205 = vcmask 1043456
        %v6206 = vsel %vm6205, %v6202, %v6204
        %v6208 = vadd.f32 %v4973, %v6206
        %6209 = vst [vmem:[#allocation6] sm:$0xff] %v6208
        %p6210 = scmp.eq.s32.totalorder %s26, 9
        // Predicated region
        $region109: #{cnn_forward.1} parent=63 // pred_check
          %p6211 = pneg %p6210
        $region110: #{cnn_forward.1} parent=63 // pred_check_branch
          %6213 = sbr.rel (%p6211) target = $region112
        $region111: #{cnn_forward.1} parent=63 // pred_region
          %v6214 = vld [vmem:[#allocation6] sm:$0xff]
          %v6215 = vld [vmem:[#allocation18] sm:$0xf]
          %v6217 = vperm.slane %v6215, 0
          %v6218 = vperm.slane %v6215, 1
          %v6219 = vperm.slane %v6215, 2
          %v6220 = vperm.slane %v6215, 3
          %v6221 = vrot.slane %v6218, 6
          %v6222 = vrot.slane %v6219, 4
          %v6223 = vrot.slane %v6220, 2
          %v6224 = vsel %vm6201, %v6217, %v6221
          %v6225 = vsel %vm6203, %v6222, %v6223
          %v6226 = vsel %vm6205, %v6224, %v6225
          %v6228 = vadd.f32 %v6214, %v6226
          %v6229 = vmax.f32 %v6228, 0.0
          %6231 = vst [vmem:[#allocation1] ss:$4 sm:$0xff] %v6229
          %v6232 = vld.sshfl [vmem:[#allocation1] sm:$0xff pattern:$0x73625140]
          %v6233 = vld.sshfl [vmem:[#allocation1 + $0x8] sm:$0xff pattern:$0x73625140]
          %v6234 = vld.sshfl [vmem:[#allocation1 + $0x10] sm:$0xff pattern:$0x73625140]
          %v6235 = vld.sshfl [vmem:[#allocation1 + $0x18] sm:$0xff pattern:$0x73625140]
          %v6240 = vpack.c.bf16 %v6232, %v6232
          %v6241 = vpack.c.bf16 %v6233, %v6233
          %v6242 = vpack.c.bf16 %v6234, %v6234
          %v6243 = vpack.c.bf16 %v6235, %v6235
          %v6244 = vld [vmem:[#allocation19] sm:$0xf]
          %v6245 = vld [vmem:[#allocation19 + $0x4] sm:$0xf]
          %v6246 = vld [vmem:[#allocation19 + $0x8] sm:$0xf]
          %v6247 = vld [vmem:[#allocation19 + $0xc] sm:$0xf]
          %v6248 = vld [vmem:[#allocation19 + $0x10] sm:$0xf]
          %v6249 = vld [vmem:[#allocation19 + $0x14] sm:$0xf]
          %v6250 = vld [vmem:[#allocation19 + $0x18] sm:$0xf]
          %v6251 = vld [vmem:[#allocation19 + $0x1c] sm:$0xf]
          %v6252 = vld [vmem:[#allocation19 + $0x20] sm:$0xf]
          %v6253 = vld [vmem:[#allocation19 + $0x24] sm:$0xf]
          %v6254 = vld [vmem:[#allocation19 + $0x28] sm:$0xf]
          %v6255 = vld [vmem:[#allocation19 + $0x2c] sm:$0xf]
          %v6256 = vld [vmem:[#allocation19 + $0x30] sm:$0xf]
          %v6257 = vld [vmem:[#allocation19 + $0x34] sm:$0xf]
          %v6258 = vld [vmem:[#allocation19 + $0x38] sm:$0xf]
          %v6259 = vld [vmem:[#allocation19 + $0x3c] sm:$0xf]
          %v6260 = vld [vmem:[#allocation19 + $0x40] sm:$0xf]
          %v6261 = vld [vmem:[#allocation19 + $0x44] sm:$0xf]
          %v6262 = vld [vmem:[#allocation19 + $0x48] sm:$0xf]
          %v6263 = vld [vmem:[#allocation19 + $0x4c] sm:$0xf]
          %v6264 = vld [vmem:[#allocation19 + $0x50] sm:$0xf]
          %v6265 = vld [vmem:[#allocation19 + $0x54] sm:$0xf]
          %v6266 = vld [vmem:[#allocation19 + $0x58] sm:$0xf]
          %v6267 = vld [vmem:[#allocation19 + $0x5c] sm:$0xf]
          %v6268 = vld [vmem:[#allocation19 + $0x60] sm:$0xf]
          %v6269 = vld [vmem:[#allocation19 + $0x64] sm:$0xf]
          %v6270 = vld [vmem:[#allocation19 + $0x68] sm:$0xf]
          %v6271 = vld [vmem:[#allocation19 + $0x6c] sm:$0xf]
          %v6272 = vld [vmem:[#allocation19 + $0x70] sm:$0xf]
          %v6273 = vld [vmem:[#allocation19 + $0x74] sm:$0xf]
          %v6274 = vld [vmem:[#allocation19 + $0x78] sm:$0xf]
          %v6275 = vld [vmem:[#allocation19 + $0x7c] sm:$0xf]
          %v6276 = vld [vmem:[#allocation19 + $0x80] sm:$0xf]
          %v6277 = vld [vmem:[#allocation19 + $0x84] sm:$0xf]
          %v6278 = vld [vmem:[#allocation19 + $0x88] sm:$0xf]
          %v6279 = vld [vmem:[#allocation19 + $0x8c] sm:$0xf]
          %v6280 = vld [vmem:[#allocation19 + $0x90] sm:$0xf]
          %v6281 = vld [vmem:[#allocation19 + $0x94] sm:$0xf]
          %v6282 = vld [vmem:[#allocation19 + $0x98] sm:$0xf]
          %v6283 = vld [vmem:[#allocation19 + $0x9c] sm:$0xf]
          %v6284 = vld [vmem:[#allocation19 + $0xa0] sm:$0xf]
          %v6285 = vld [vmem:[#allocation19 + $0xa4] sm:$0xf]
          %v6286 = vld [vmem:[#allocation19 + $0xa8] sm:$0xf]
          %v6287 = vld [vmem:[#allocation19 + $0xac] sm:$0xf]
          %v6288 = vld [vmem:[#allocation19 + $0xb0] sm:$0xf]
          %v6289 = vld [vmem:[#allocation19 + $0xb4] sm:$0xf]
          %v6290 = vld [vmem:[#allocation19 + $0xb8] sm:$0xf]
          %v6291 = vld [vmem:[#allocation19 + $0xbc] sm:$0xf]
          %v6292 = vld [vmem:[#allocation19 + $0xc0] sm:$0xf]
          %v6293 = vld [vmem:[#allocation19 + $0xc4] sm:$0xf]
          %v6294 = vld [vmem:[#allocation19 + $0xc8] sm:$0xf]
          %v6295 = vld [vmem:[#allocation19 + $0xcc] sm:$0xf]
          %v6296 = vld [vmem:[#allocation19 + $0xd0] sm:$0xf]
          %v6297 = vld [vmem:[#allocation19 + $0xd4] sm:$0xf]
          %v6298 = vld [vmem:[#allocation19 + $0xd8] sm:$0xf]
          %v6299 = vld [vmem:[#allocation19 + $0xdc] sm:$0xf]
          %v6300 = vld [vmem:[#allocation19 + $0xe0] sm:$0xf]
          %v6301 = vld [vmem:[#allocation19 + $0xe4] sm:$0xf]
          %v6302 = vld [vmem:[#allocation19 + $0xe8] sm:$0xf]
          %v6303 = vld [vmem:[#allocation19 + $0xec] sm:$0xf]
          %v6304 = vld [vmem:[#allocation19 + $0xf0] sm:$0xf]
          %v6305 = vld [vmem:[#allocation19 + $0xf4] sm:$0xf]
          %v6306 = vld [vmem:[#allocation19 + $0xf8] sm:$0xf]
          %v6307 = vld [vmem:[#allocation19 + $0xfc] sm:$0xf]
          %v6308 = vld [vmem:[#allocation20] sm:$0x1]
          %v6310 = vperm.slane %v6308, 0
          %v6376 = vunpack.c.l.b16 %v6244
          %v6377 = vunpack.c.l.b16 %v6245
          %v6378 = vunpack.c.l.b16 %v6246
          %v6379 = vunpack.c.l.b16 %v6247
          %v6380 = vunpack.c.l.b16 %v6248
          %v6381 = vunpack.c.l.b16 %v6249
          %v6382 = vunpack.c.l.b16 %v6250
          %v6383 = vunpack.c.l.b16 %v6251
          %v6384 = vunpack.c.l.b16 %v6252
          %v6385 = vunpack.c.l.b16 %v6253
          %v6386 = vunpack.c.l.b16 %v6254
          %v6387 = vunpack.c.l.b16 %v6255
          %v6388 = vunpack.c.l.b16 %v6256
          %v6389 = vunpack.c.l.b16 %v6257
          %v6390 = vunpack.c.l.b16 %v6258
          %v6391 = vunpack.c.l.b16 %v6259
          %v6392 = vunpack.c.l.b16 %v6260
          %v6393 = vunpack.c.l.b16 %v6261
          %v6394 = vunpack.c.l.b16 %v6262
          %v6395 = vunpack.c.l.b16 %v6263
          %v6396 = vunpack.c.l.b16 %v6264
          %v6397 = vunpack.c.l.b16 %v6265
          %v6398 = vunpack.c.l.b16 %v6266
          %v6399 = vunpack.c.l.b16 %v6267
          %v6400 = vunpack.c.l.b16 %v6268
          %v6401 = vunpack.c.l.b16 %v6269
          %v6402 = vunpack.c.l.b16 %v6270
          %v6403 = vunpack.c.l.b16 %v6271
          %v6404 = vunpack.c.l.b16 %v6272
          %v6405 = vunpack.c.l.b16 %v6273
          %v6406 = vunpack.c.l.b16 %v6274
          %v6407 = vunpack.c.l.b16 %v6275
          %v6408 = vunpack.c.l.b16 %v6276
          %v6409 = vunpack.c.l.b16 %v6277
          %v6410 = vunpack.c.l.b16 %v6278
          %v6411 = vunpack.c.l.b16 %v6279
          %v6412 = vunpack.c.l.b16 %v6280
          %v6413 = vunpack.c.l.b16 %v6281
          %v6414 = vunpack.c.l.b16 %v6282
          %v6415 = vunpack.c.l.b16 %v6283
          %v6416 = vunpack.c.l.b16 %v6284
          %v6417 = vunpack.c.l.b16 %v6285
          %v6418 = vunpack.c.l.b16 %v6286
          %v6419 = vunpack.c.l.b16 %v6287
          %v6420 = vunpack.c.l.b16 %v6288
          %v6421 = vunpack.c.l.b16 %v6289
          %v6422 = vunpack.c.l.b16 %v6290
          %v6423 = vunpack.c.l.b16 %v6291
          %v6424 = vunpack.c.l.b16 %v6292
          %v6425 = vunpack.c.l.b16 %v6293
          %v6426 = vunpack.c.l.b16 %v6294
          %v6427 = vunpack.c.l.b16 %v6295
          %v6428 = vunpack.c.l.b16 %v6296
          %v6429 = vunpack.c.l.b16 %v6297
          %v6430 = vunpack.c.l.b16 %v6298
          %v6431 = vunpack.c.l.b16 %v6299
          %v6432 = vunpack.c.l.b16 %v6300
          %v6433 = vunpack.c.l.b16 %v6301
          %v6434 = vunpack.c.l.b16 %v6302
          %v6435 = vunpack.c.l.b16 %v6303
          %v6436 = vunpack.c.l.b16 %v6304
          %v6437 = vunpack.c.l.b16 %v6305
          %v6438 = vunpack.c.l.b16 %v6306
          %v6439 = vunpack.c.l.b16 %v6307
          %v6440 = vpack.c.b16 %v6377, %v6376
          %v6441 = vpack.c.b16 %v6379, %v6378
          %v6442 = vpack.c.b16 %v6381, %v6380
          %v6443 = vpack.c.b16 %v6383, %v6382
          %v6444 = vpack.c.b16 %v6385, %v6384
          %v6445 = vpack.c.b16 %v6387, %v6386
          %v6446 = vpack.c.b16 %v6389, %v6388
          %v6447 = vpack.c.b16 %v6391, %v6390
          %v6448 = vpack.c.b16 %v6393, %v6392
          %v6449 = vpack.c.b16 %v6395, %v6394
          %v6450 = vpack.c.b16 %v6397, %v6396
          %v6451 = vpack.c.b16 %v6399, %v6398
          %v6452 = vpack.c.b16 %v6401, %v6400
          %v6453 = vpack.c.b16 %v6403, %v6402
          %v6454 = vpack.c.b16 %v6405, %v6404
          %v6455 = vpack.c.b16 %v6407, %v6406
          %v6456 = vpack.c.b16 %v6409, %v6408
          %v6457 = vpack.c.b16 %v6411, %v6410
          %v6458 = vpack.c.b16 %v6413, %v6412
          %v6459 = vpack.c.b16 %v6415, %v6414
          %v6460 = vpack.c.b16 %v6417, %v6416
          %v6461 = vpack.c.b16 %v6419, %v6418
          %v6462 = vpack.c.b16 %v6421, %v6420
          %v6463 = vpack.c.b16 %v6423, %v6422
          %v6464 = vpack.c.b16 %v6425, %v6424
          %v6465 = vpack.c.b16 %v6427, %v6426
          %v6466 = vpack.c.b16 %v6429, %v6428
          %v6467 = vpack.c.b16 %v6431, %v6430
          %v6468 = vpack.c.b16 %v6433, %v6432
          %v6469 = vpack.c.b16 %v6435, %v6434
          %v6470 = vpack.c.b16 %v6437, %v6436
          %v6471 = vpack.c.b16 %v6439, %v6438
          %6504 = vmatpush.bf16.msra.mxu0 %v6447
          %6505 = vmatpush.bf16.msra.mxu0 %v6446
          %6506 = vmatpush.bf16.msra.mxu0 %v6445
          %6507 = vmatpush.bf16.msra.mxu0 %v6444
          %6508 = vmatpush.bf16.msra.mxu0 %v6443
          %6509 = vmatpush.bf16.msra.mxu0 %v6442
          %6510 = vmatpush.bf16.msra.mxu0 %v6441
          %6511 = vmatpush.bf16.msra.mxu0 %v6440
          %6512 = vmatmul.bf16.gmra.mxu0 %v6240
          %v6513 = vpop.f32.mrf.mxu0
          %v6514 = vadd.f32 %v6310, %v6513
          %v6515 = vpop.f32.mrf.mxu0
          %6516 = vdwg.mxu0
          %6517 = vmatpush.bf16.msra.mxu0 %v6455
          %6518 = vmatpush.bf16.msra.mxu0 %v6454
          %6519 = vmatpush.bf16.msra.mxu0 %v6453
          %6520 = vmatpush.bf16.msra.mxu0 %v6452
          %6521 = vmatpush.bf16.msra.mxu0 %v6451
          %6522 = vmatpush.bf16.msra.mxu0 %v6450
          %6523 = vmatpush.bf16.msra.mxu0 %v6449
          %6524 = vmatpush.bf16.msra.mxu0 %v6448
          %6525 = vmatmul.bf16.gmra.mxu0 %v6241
          %v6526 = vpop.f32.mrf.mxu0
          %v6527 = vadd.f32 %v6514, %v6526
          %v6528 = vpop.f32.mrf.mxu0
          %6529 = vdwg.mxu0
          %6530 = vmatpush.bf16.msra.mxu0 %v6463
          %6531 = vmatpush.bf16.msra.mxu0 %v6462
          %6532 = vmatpush.bf16.msra.mxu0 %v6461
          %6533 = vmatpush.bf16.msra.mxu0 %v6460
          %6534 = vmatpush.bf16.msra.mxu0 %v6459
          %6535 = vmatpush.bf16.msra.mxu0 %v6458
          %6536 = vmatpush.bf16.msra.mxu0 %v6457
          %6537 = vmatpush.bf16.msra.mxu0 %v6456
          %6538 = vmatmul.bf16.gmra.mxu0 %v6242
          %v6539 = vpop.f32.mrf.mxu0
          %v6540 = vadd.f32 %v6527, %v6539
          %v6541 = vpop.f32.mrf.mxu0
          %6542 = vdwg.mxu0
          %6543 = vmatpush.bf16.msra.mxu0 %v6471
          %6544 = vmatpush.bf16.msra.mxu0 %v6470
          %6545 = vmatpush.bf16.msra.mxu0 %v6469
          %6546 = vmatpush.bf16.msra.mxu0 %v6468
          %6547 = vmatpush.bf16.msra.mxu0 %v6467
          %6548 = vmatpush.bf16.msra.mxu0 %v6466
          %6549 = vmatpush.bf16.msra.mxu0 %v6465
          %6550 = vmatpush.bf16.msra.mxu0 %v6464
          %6551 = vmatmul.bf16.gmra.mxu0 %v6243
          %v6552 = vpop.f32.mrf.mxu0
          %v6553 = vadd.f32 %v6540, %v6552
          %v6554 = vpop.f32.mrf.mxu0
          %6555 = vdwg.mxu0
          %6556 = vst [vmem:[%s11] sm:$0x3] %v6553
        $region112: #{cnn_forward.1} parent=63 // pred_fallthru
          _
        // Predicated region
        $region113: #{cnn_forward.1} parent=63 // pred_check
          %p6557 = pneg %p275
        $region114: #{cnn_forward.1} parent=63 // pred_check_branch
          %6559 = sbr.rel (%p6557) target = $region116
        $region115: #{cnn_forward.1} parent=63 // pred_region
          _
        $region116: #{cnn_forward.1} parent=63 // pred_fallthru
          _
        // Predicated region
        $region117: #{cnn_forward.1} parent=63 // pred_check
          %p6560 = pneg %p275
        $region118: #{cnn_forward.1} parent=63 // pred_check_branch
          %6562 = sbr.rel (%p6560) target = $region120
        $region119: #{cnn_forward.1} parent=63 // pred_region
          _
        $region120: #{cnn_forward.1} parent=63 // pred_fallthru
          _
      $region64: #{cnn_forward.1} parent=5 // pred_fallthru
        _
      %p6563 = scmp.le.s32.totalorder 2, %s21
      // Predicated region
      $region121: #{cnn_forward.1} parent=5 // pred_check
        %p6564 = pneg %p6563
      $region122: #{cnn_forward.1} parent=5 // pred_check_branch
        %6566 = sbr.rel (%p6564) target = $region124
      $region123: #{cnn_forward.1} parent=5 // pred_region
        %s6567 = ssub.s32 %s21, 2
      $region124: #{cnn_forward.1} parent=5 // pred_fallthru
        _
    $region6: #{cnn_forward.1} parent=1 // loop_footer
      %s25 = sadd.s32 1, %s21
    $region7: #{cnn_forward.1} parent=1 // loop_footer_branch
      %20 = sbr.rel target = $region3
    $region8: #{cnn_forward.1} parent=1 // loop_exit
      _
    %6568 = vsyncpa [#allocation8], 1
    %s6569 = scalar_lea.sflag [#allocation8], 1
    %6570 = vsyncpa %s6569, 1
    %6571 = vsyncpa [#allocation10], 1
    %6572 = vsyncpa [#allocation13], 1
    %6573 = vsyncpa [#allocation16], 1

</llo_original>
